<compile_context>
chip_gen: v6e
topology: v6e:2x2x1
jax: 0.10.0
libtpu: 0.0.40
codegen_flags: <defaults>
</compile_context>

<pallas_src>
import jax
import jax.numpy as jnp
from jax.experimental import pallas as pl
from jax.experimental.pallas import tpu as pltpu

LANE = 128
# Set to jnp.bfloat16 on v6e / v7x for ~2x DMA + MXU throughput (accumulation
# stays f32).  Kept f32 by default to match PyTorch f32 semantics exactly.
MATMUL_DTYPE = jnp.float32

# Architecture constants (fixed by the nn.Module spec).
K = 5
CONV1_OC, CONV2_OC = 32, 64
FC1_OUT, NUM_CLASSES = 128, 10


def _round_up(x, m):
    return (x + m - 1) // m * m


def _pad_last(a, mult):
    n = a.shape[-1]
    pad = _round_up(n, mult) - n
    if pad:
        a = jnp.pad(a, [(0, 0)] * (a.ndim - 1) + [(0, pad)])
    return a


# ----------------------------------------------------------------------------
# Pallas kernels
# ----------------------------------------------------------------------------
def _conv_relu_pool_kernel(p_ref, w_ref, b_ref, o_ref):
    """Fused conv-as-matmul + bias + ReLU + 2x2 maxpool.

    p_ref : (4, TM, KKC)  im2col patches, leading axis = pool-window corner
    w_ref : (KKC, OCp)    conv weights as a matmul matrix (lane-padded OC)
    b_ref : (1, OCp)      bias row
    o_ref : (TM, OCp)     pooled + activated output (OC on lanes)
    """
    w = w_ref[...]
    acc = jnp.dot(p_ref[0], w, preferred_element_type=jnp.float32)
    for s in range(1, 4):  # maxpool folded into the accumulation
        acc = jnp.maximum(acc, jnp.dot(p_ref[s], w, preferred_element_type=jnp.float32))
    # max_s(relu(conv_s + b)) == relu(max_s(conv_s) + b)  (bias per-channel, relu monotone)
    o_ref[...] = jnp.maximum(acc + b_ref[...], 0.0).astype(o_ref.dtype)


def _mlp_kernel(x_ref, w1_ref, b1_ref, w2_ref, b2_ref, o_ref):
    """Fused fc1 + ReLU + fc2 (intermediate kept in VMEM)."""
    h = jnp.dot(x_ref[...], w1_ref[...], preferred_element_type=jnp.float32) + b1_ref[...]
    h = jnp.maximum(h, 0.0).astype(w2_ref.dtype)
    o = jnp.dot(h, w2_ref[...], preferred_element_type=jnp.float32) + b2_ref[...]
    o_ref[...] = o.astype(o_ref.dtype)


_COMPILER_PARAMS = pltpu.CompilerParams(
    dimension_semantics=("parallel",),          # shard M-tiles across cores
    vmem_limit_bytes=32 * 1024 * 1024,          # per-tile footprint <~8 MiB; safe on v7x
)


# ----------------------------------------------------------------------------
# Wrappers
# ----------------------------------------------------------------------------
def conv5x5_relu_pool(x_nhwc, w_mat, b_row, oc, *, k=K, tile_m=256):
    """Conv2d(k, stride 1, valid) + bias + ReLU + MaxPool2d(2), NHWC in/out."""
    N, H, W, C = x_nhwc.shape
    Ho, Wo = H - k + 1, W - k + 1
    assert Ho % 2 == 0 and Wo % 2 == 0, "fused 2x2 pool needs even conv output"
    Hp, Wp = Ho // 2, Wo // 2
    KKC = k * k * C
    OCp = w_mat.shape[1]

    # im2col in (di, dj, c) row order, with the 2x2 pool corner pulled out as a
    # leading axis of size 4 so the kernel can reduce it with max.
    slabs = [x_nhwc[:, di:di + Ho, dj:dj + Wo, :] for di in range(k) for dj in range(k)]
    p = jnp.stack(slabs, axis=3).reshape(N, Ho, Wo, KKC)
    p = p.reshape(N, Hp, 2, Wp, 2, KKC).transpose(2, 4, 0, 1, 3, 5)
    p = p.reshape(4, N * Hp * Wp, KKC)

    M = N * Hp * Wp
    tm = min(tile_m, _round_up(M, 8))
    m_pad = _round_up(M, tm)
    if m_pad != M:
        p = jnp.pad(p, ((0, 0), (0, m_pad - M), (0, 0)))
    p = p.astype(MATMUL_DTYPE)

    flops = 2 * 4 * m_pad * KKC * OCp
    bytes_accessed = (4 * m_pad * KKC + KKC * OCp + m_pad * OCp) * 4
    out = pl.pallas_call(
        _conv_relu_pool_kernel,
        out_shape=jax.ShapeDtypeStruct((m_pad, OCp), jnp.float32),
        grid=(m_pad // tm,),
        in_specs=[
            pl.BlockSpec((4, tm, KKC), lambda i: (0, i, 0)),
            pl.BlockSpec((KKC, OCp), lambda i: (0, 0)),
            pl.BlockSpec((1, OCp), lambda i: (0, 0)),
        ],
        out_specs=pl.BlockSpec((tm, OCp), lambda i: (i, 0)),
        compiler_params=_COMPILER_PARAMS,
        cost_estimate=pl.CostEstimate(flops=flops, transcendentals=0,
                                      bytes_accessed=bytes_accessed),
    )(p, w_mat, b_row)
    return out[:M, :oc].reshape(N, Hp, Wp, oc)


def mlp_head(x, w1, b1, w2, b2, *, n_out, tile_m=256):
    """Fused Linear(D->H)+ReLU+Linear(H->n_out); weights pre-transposed & padded."""
    N, D = x.shape
    Hd = w1.shape[1]
    OCp = w2.shape[1]
    tm = min(tile_m, _round_up(N, 8))
    m_pad = _round_up(N, tm)
    if m_pad != N:
        x = jnp.pad(x, ((0, m_pad - N), (0, 0)))
    x = x.astype(MATMUL_DTYPE)

    out = pl.pallas_call(
        _mlp_kernel,
        out_shape=jax.ShapeDtypeStruct((m_pad, OCp), jnp.float32),
        grid=(m_pad // tm,),
        in_specs=[
            pl.BlockSpec((tm, D), lambda i: (i, 0)),
            pl.BlockSpec((D, Hd), lambda i: (0, 0)),
            pl.BlockSpec((1, Hd), lambda i: (0, 0)),
            pl.BlockSpec((Hd, OCp), lambda i: (0, 0)),
            pl.BlockSpec((1, OCp), lambda i: (0, 0)),
        ],
        out_specs=pl.BlockSpec((tm, OCp), lambda i: (i, 0)),
        compiler_params=_COMPILER_PARAMS,
        cost_estimate=pl.CostEstimate(
            flops=2 * m_pad * (D * Hd + Hd * OCp), transcendentals=0,
            bytes_accessed=(m_pad * D + D * Hd + Hd * OCp + m_pad * OCp) * 4),
    )(x, w1, b1, w2, b2)
    return out[:N, :n_out]


# ----------------------------------------------------------------------------
# Parameters
# ----------------------------------------------------------------------------
def init_params(key):
    """Deterministic synthetic parameters with the PyTorch module's shapes."""
    ks = jax.random.split(key, 8)

    def uni(k, shape, fan_in):
        bound = 1.0 / jnp.sqrt(fan_in)
        return jax.random.uniform(k, shape, jnp.float32, -bound, bound)

    return {
        "w1": uni(ks[0], (32, 1, 5, 5), 25), "b1": uni(ks[1], (32,), 25),
        "w2": uni(ks[2], (64, 32, 5, 5), 800), "b2": uni(ks[3], (64,), 800),
        "wfc1": uni(ks[4], (128, 1024), 1024), "bfc1": uni(ks[5], (128,), 1024),
        "wfc2": uni(ks[6], (10, 128), 128), "bfc2": uni(ks[7], (10,), 128),
    }


def prepare_params(params):
    """One-time weight re-layout (run OUTSIDE the jitted forward):
    conv weights -> (K*K*C, OCp) matmul matrices in (di, dj, c) row order,
    FC weights transposed to (in, out), all output dims lane-padded to 128,
    biases as (1, OCp) rows."""
    def conv_w(w):
        oc, c, k, _ = w.shape
        m = w.transpose(2, 3, 1, 0).reshape(k * k * c, oc)   # rows: (di, dj, c)
        return _pad_last(m, LANE).astype(MATMUL_DTYPE)

    def bias_row(b):
        return _pad_last(b.reshape(1, -1), LANE).astype(jnp.float32)

    return {
        "cw1": conv_w(params["w1"]), "cb1": bias_row(params["b1"]),
        "cw2": conv_w(params["w2"]), "cb2": bias_row(params["b2"]),
        "fw1": _pad_last(params["wfc1"].T, LANE).astype(MATMUL_DTYPE),
        "fb1": bias_row(params["bfc1"]),
        "fw2": _pad_last(params["wfc2"].T, LANE).astype(MATMUL_DTYPE),
        "fb2": bias_row(params["bfc2"]),
    }


# ----------------------------------------------------------------------------
# Forward
# ----------------------------------------------------------------------------
def convnet_mnist_forward(prep, x):
    """x: (N, 1, 28, 28) NCHW float32 (PyTorch layout). Dropout(p=0) == identity."""
    x = x.transpose(0, 2, 3, 1)                                    # NHWC, C on lanes
    x = conv5x5_relu_pool(x, prep["cw1"], prep["cb1"], CONV1_OC)   # (N, 12, 12, 32)
    x = conv5x5_relu_pool(x, prep["cw2"], prep["cb2"], CONV2_OC)   # (N, 4, 4, 64)
    # PyTorch's x.view(-1, 1024) flattens NCHW -> (N, C*H*W)
    x = x.transpose(0, 3, 1, 2).reshape(x.shape[0], -1)            # (N, 1024)
    return mlp_head(x, prep["fw1"], prep["fb1"], prep["fw2"], prep["fb2"],
                    n_out=NUM_CLASSES)                             # (N, 10)


def _reference_forward(params, x):
    """Pure-JAX reference (high precision) for a correctness check."""
    hp = jax.lax.Precision.HIGHEST

    def conv(x, w, b):
        y = jax.lax.conv_general_dilated(
            x, w, (1, 1), "VALID",
            dimension_numbers=("NCHW", "OIHW", "NCHW"), precision=hp)
        return y + b.reshape(1, -1, 1, 1)

    def pool(x):
        return jax.lax.reduce_window(x, -jnp.inf, jax.lax.max,
                                     (1, 1, 2, 2), (1, 1, 2, 2), "VALID")

    x = pool(jnp.maximum(conv(x, params["w1"], params["b1"]), 0.0))
    x = pool(jnp.maximum(conv(x, params["w2"], params["b2"]), 0.0))
    x = x.reshape(x.shape[0], -1)
    x = jnp.maximum(jnp.dot(x, params["wfc1"].T, precision=hp) + params["bfc1"], 0.0)
    return jnp.dot(x, params["wfc2"].T, precision=hp) + params["bfc2"]


if __name__ == "__main__":
    key = jax.random.PRNGKey(0)
    k_param, k_x = jax.random.split(key)
    params = init_params(k_param)
    prep = prepare_params(params)   # one-time weight re-layout, outside jit
    # MNIST-shaped input is required by fc1 (64*4*4 == 1024).
    x = jax.random.normal(k_x, (2, 1, 28, 28), dtype=jnp.float32)

    logits = jax.jit(convnet_mnist_forward)(prep, x)
    jax.block_until_ready(logits)
    assert logits.shape == (2, 10)

    ref = _reference_forward(params, x)
    assert jnp.allclose(logits, ref, atol=1e-2, rtol=1e-2), \
        f"max abs err {jnp.max(jnp.abs(logits - ref))}"

    print("KERNEL_OK")
</pallas_src>

<mosaic_0001>
module attributes {stable_mosaic.version = 11 : i64} {
  func.func @_conv_relu_pool_kernel(%arg0: i32, %arg1: memref<4x256x25xf32, #tpu.memory_space<vmem>>, %arg2: memref<25x128xf32, #tpu.memory_space<vmem>>, %arg3: memref<1x128xf32, #tpu.memory_space<vmem>>, %arg4: memref<256x128xf32, #tpu.memory_space<vmem>>) attributes {dimension_semantics = [#tpu.dimension_semantics<parallel>], iteration_bounds = array<i64: 2>, scalar_prefetch = 0 : i64, scratch_operands = 0 : i64, tpu.core_type = #tpu.core_type<tc>, window_params = [{transform_indices = @transform_0, window_bounds = array<i64: 4, 256, 25>}, {pipeline_mode = #tpu.pipeline_mode<synchronous>, transform_indices = @transform_1, window_bounds = array<i64: 25, 128>}, {pipeline_mode = #tpu.pipeline_mode<synchronous>, transform_indices = @transform_2, window_bounds = array<i64: 1, 128>}, {transform_indices = @transform_3, window_bounds = array<i64: 256, 128>}]} {
    %c0 = arith.constant 0 : index
    %c0_0 = arith.constant 0 : index
    %0 = vector.load %arg2[%c0, %c0_0] : memref<25x128xf32, #tpu.memory_space<vmem>>, vector<25x128xf32>
    %c0_1 = arith.constant 0 : index
    %c0_2 = arith.constant 0 : index
    %c0_3 = arith.constant 0 : index
    %1 = vector.load %arg1[%c0_1, %c0_2, %c0_3] : memref<4x256x25xf32, #tpu.memory_space<vmem>>, vector<1x256x25xf32>
    %2 = vector.shape_cast %1 : vector<1x256x25xf32> to vector<256x25xf32>
    %cst = arith.constant dense<0.000000e+00> : vector<256x128xf32>
    %3 = tpu.matmul %2, %0, %cst {dimension_numbers = #tpu.dot_dimension_numbers<[1], [0], [0], [1], [0, 0, 1, 1], [], []>} : vector<256x25xf32>, vector<25x128xf32>, vector<256x128xf32> -> vector<256x128xf32>
    %c1 = arith.constant 1 : index
    %c0_4 = arith.constant 0 : index
    %c0_5 = arith.constant 0 : index
    %4 = vector.load %arg1[%c1, %c0_4, %c0_5] : memref<4x256x25xf32, #tpu.memory_space<vmem>>, vector<1x256x25xf32>
    %5 = vector.shape_cast %4 : vector<1x256x25xf32> to vector<256x25xf32>
    %cst_6 = arith.constant dense<0.000000e+00> : vector<256x128xf32>
    %6 = tpu.matmul %5, %0, %cst_6 {dimension_numbers = #tpu.dot_dimension_numbers<[1], [0], [0], [1], [0, 0, 1, 1], [], []>} : vector<256x25xf32>, vector<25x128xf32>, vector<256x128xf32> -> vector<256x128xf32>
    %7 = arith.maximumf %3, %6 : vector<256x128xf32>
    %c2 = arith.constant 2 : index
    %c0_7 = arith.constant 0 : index
    %c0_8 = arith.constant 0 : index
    %8 = vector.load %arg1[%c2, %c0_7, %c0_8] : memref<4x256x25xf32, #tpu.memory_space<vmem>>, vector<1x256x25xf32>
    %9 = vector.shape_cast %8 : vector<1x256x25xf32> to vector<256x25xf32>
    %cst_9 = arith.constant dense<0.000000e+00> : vector<256x128xf32>
    %10 = tpu.matmul %9, %0, %cst_9 {dimension_numbers = #tpu.dot_dimension_numbers<[1], [0], [0], [1], [0, 0, 1, 1], [], []>} : vector<256x25xf32>, vector<25x128xf32>, vector<256x128xf32> -> vector<256x128xf32>
    %11 = arith.maximumf %7, %10 : vector<256x128xf32>
    %c3 = arith.constant 3 : index
    %c0_10 = arith.constant 0 : index
    %c0_11 = arith.constant 0 : index
    %12 = vector.load %arg1[%c3, %c0_10, %c0_11] : memref<4x256x25xf32, #tpu.memory_space<vmem>>, vector<1x256x25xf32>
    %13 = vector.shape_cast %12 : vector<1x256x25xf32> to vector<256x25xf32>
    %cst_12 = arith.constant dense<0.000000e+00> : vector<256x128xf32>
    %14 = tpu.matmul %13, %0, %cst_12 {dimension_numbers = #tpu.dot_dimension_numbers<[1], [0], [0], [1], [0, 0, 1, 1], [], []>} : vector<256x25xf32>, vector<25x128xf32>, vector<256x128xf32> -> vector<256x128xf32>
    %15 = arith.maximumf %11, %14 : vector<256x128xf32>
    %c0_13 = arith.constant 0 : index
    %c0_14 = arith.constant 0 : index
    %16 = vector.load %arg3[%c0_13, %c0_14] : memref<1x128xf32, #tpu.memory_space<vmem>>, vector<1x128xf32>
    %17 = vector.broadcast %16 : vector<1x128xf32> to vector<256x128xf32>
    %18 = arith.addf %15, %17 : vector<256x128xf32>
    %cst_15 = arith.constant 0.000000e+00 : f32
    %19 = vector.broadcast %cst_15 : f32 to vector<256x128xf32>
    %20 = arith.maximumf %18, %19 : vector<256x128xf32>
    %c0_16 = arith.constant 0 : index
    %c0_17 = arith.constant 0 : index
    %21 = vector.load %arg4[%c0_16, %c0_17] : memref<256x128xf32, #tpu.memory_space<vmem>>, vector<256x128xf32>
    tpu.vector_store %arg4[%c0_16, %c0_17], %20 {strides = array<i32>} : memref<256x128xf32, #tpu.memory_space<vmem>>, vector<256x128xf32>,
    return
  }
  func.func @transform_0(%arg0: i32) -> (i32, i32, i32) {
    %c0_i32 = arith.constant 0 : i32
    %c0_i32_0 = arith.constant 0 : i32
    %c0_i32_1 = arith.constant 0 : i32
    return %c0_i32, %arg0, %c0_i32_0 : i32, i32, i32
  }
  func.func @transform_1(%arg0: i32) -> (i32, i32) {
    %c0_i32 = arith.constant 0 : i32
    %c0_i32_0 = arith.constant 0 : i32
    %c0_i32_1 = arith.constant 0 : i32
    return %c0_i32, %c0_i32_0 : i32, i32
  }
  func.func @transform_2(%arg0: i32) -> (i32, i32) {
    %c0_i32 = arith.constant 0 : i32
    %c0_i32_0 = arith.constant 0 : i32
    %c0_i32_1 = arith.constant 0 : i32
    return %c0_i32, %c0_i32_0 : i32, i32
  }
  func.func @transform_3(%arg0: i32) -> (i32, i32) {
    %c0_i32 = arith.constant 0 : i32
    %c0_i32_0 = arith.constant 0 : i32
    return %arg0, %c0_i32 : i32, i32
  }
}

module attributes {stable_mosaic.version = 11 : i64} {
  func.func @_conv_relu_pool_kernel(%arg0: i32, %arg1: memref<4x32x800xf32, #tpu.memory_space<vmem>>, %arg2: memref<800x128xf32, #tpu.memory_space<vmem>>, %arg3: memref<1x128xf32, #tpu.memory_space<vmem>>, %arg4: memref<32x128xf32, #tpu.memory_space<vmem>>) attributes {dimension_semantics = [#tpu.dimension_semantics<parallel>], iteration_bounds = array<i64: 1>, scalar_prefetch = 0 : i64, scratch_operands = 0 : i64, tpu.core_type = #tpu.core_type<tc>, window_params = [{transform_indices = @transform_0, window_bounds = array<i64: 4, 32, 800>}, {pipeline_mode = #tpu.pipeline_mode<synchronous>, transform_indices = @transform_1, window_bounds = array<i64: 800, 128>}, {pipeline_mode = #tpu.pipeline_mode<synchronous>, transform_indices = @transform_2, window_bounds = array<i64: 1, 128>}, {transform_indices = @transform_3, window_bounds = array<i64: 32, 128>}]} {
    %c0 = arith.constant 0 : index
    %c0_0 = arith.constant 0 : index
    %0 = vector.load %arg2[%c0, %c0_0] : memref<800x128xf32, #tpu.memory_space<vmem>>, vector<800x128xf32>
    %c0_1 = arith.constant 0 : index
    %c0_2 = arith.constant 0 : index
    %c0_3 = arith.constant 0 : index
    %1 = vector.load %arg1[%c0_1, %c0_2, %c0_3] : memref<4x32x800xf32, #tpu.memory_space<vmem>>, vector<1x32x800xf32>
    %2 = vector.shape_cast %1 : vector<1x32x800xf32> to vector<32x800xf32>
    %cst = arith.constant dense<0.000000e+00> : vector<32x128xf32>
    %3 = tpu.matmul %2, %0, %cst {dimension_numbers = #tpu.dot_dimension_numbers<[1], [0], [0], [1], [0, 0, 1, 1], [], []>} : vector<32x800xf32>, vector<800x128xf32>, vector<32x128xf32> -> vector<32x128xf32>
    %c1 = arith.constant 1 : index
    %c0_4 = arith.constant 0 : index
    %c0_5 = arith.constant 0 : index
    %4 = vector.load %arg1[%c1, %c0_4, %c0_5] : memref<4x32x800xf32, #tpu.memory_space<vmem>>, vector<1x32x800xf32>
    %5 = vector.shape_cast %4 : vector<1x32x800xf32> to vector<32x800xf32>
    %cst_6 = arith.constant dense<0.000000e+00> : vector<32x128xf32>
    %6 = tpu.matmul %5, %0, %cst_6 {dimension_numbers = #tpu.dot_dimension_numbers<[1], [0], [0], [1], [0, 0, 1, 1], [], []>} : vector<32x800xf32>, vector<800x128xf32>, vector<32x128xf32> -> vector<32x128xf32>
    %7 = arith.maximumf %3, %6 : vector<32x128xf32>
    %c2 = arith.constant 2 : index
    %c0_7 = arith.constant 0 : index
    %c0_8 = arith.constant 0 : index
    %8 = vector.load %arg1[%c2, %c0_7, %c0_8] : memref<4x32x800xf32, #tpu.memory_space<vmem>>, vector<1x32x800xf32>
    %9 = vector.shape_cast %8 : vector<1x32x800xf32> to vector<32x800xf32>
    %cst_9 = arith.constant dense<0.000000e+00> : vector<32x128xf32>
    %10 = tpu.matmul %9, %0, %cst_9 {dimension_numbers = #tpu.dot_dimension_numbers<[1], [0], [0], [1], [0, 0, 1, 1], [], []>} : vector<32x800xf32>, vector<800x128xf32>, vector<32x128xf32> -> vector<32x128xf32>
    %11 = arith.maximumf %7, %10 : vector<32x128xf32>
    %c3 = arith.constant 3 : index
    %c0_10 = arith.constant 0 : index
    %c0_11 = arith.constant 0 : index
    %12 = vector.load %arg1[%c3, %c0_10, %c0_11] : memref<4x32x800xf32, #tpu.memory_space<vmem>>, vector<1x32x800xf32>
    %13 = vector.shape_cast %12 : vector<1x32x800xf32> to vector<32x800xf32>
    %cst_12 = arith.constant dense<0.000000e+00> : vector<32x128xf32>
    %14 = tpu.matmul %13, %0, %cst_12 {dimension_numbers = #tpu.dot_dimension_numbers<[1], [0], [0], [1], [0, 0, 1, 1], [], []>} : vector<32x800xf32>, vector<800x128xf32>, vector<32x128xf32> -> vector<32x128xf32>
    %15 = arith.maximumf %11, %14 : vector<32x128xf32>
    %c0_13 = arith.constant 0 : index
    %c0_14 = arith.constant 0 : index
    %16 = vector.load %arg3[%c0_13, %c0_14] : memref<1x128xf32, #tpu.memory_space<vmem>>, vector<1x128xf32>
    %17 = vector.broadcast %16 : vector<1x128xf32> to vector<32x128xf32>
    %18 = arith.addf %15, %17 : vector<32x128xf32>
    %cst_15 = arith.constant 0.000000e+00 : f32
    %19 = vector.broadcast %cst_15 : f32 to vector<32x128xf32>
    %20 = arith.maximumf %18, %19 : vector<32x128xf32>
    %c0_16 = arith.constant 0 : index
    %c0_17 = arith.constant 0 : index
    %21 = vector.load %arg4[%c0_16, %c0_17] : memref<32x128xf32, #tpu.memory_space<vmem>>, vector<32x128xf32>
    tpu.vector_store %arg4[%c0_16, %c0_17], %20 {strides = array<i32>} : memref<32x128xf32, #tpu.memory_space<vmem>>, vector<32x128xf32>,
    return
  }
  func.func @transform_0(%arg0: i32) -> (i32, i32, i32) {
    %c0_i32 = arith.constant 0 : i32
    %c0_i32_0 = arith.constant 0 : i32
    %c0_i32_1 = arith.constant 0 : i32
    return %c0_i32, %arg0, %c0_i32_0 : i32, i32, i32
  }
  func.func @transform_1(%arg0: i32) -> (i32, i32) {
    %c0_i32 = arith.constant 0 : i32
    %c0_i32_0 = arith.constant 0 : i32
    %c0_i32_1 = arith.constant 0 : i32
    return %c0_i32, %c0_i32_0 : i32, i32
  }
  func.func @transform_2(%arg0: i32) -> (i32, i32) {
    %c0_i32 = arith.constant 0 : i32
    %c0_i32_0 = arith.constant 0 : i32
    %c0_i32_1 = arith.constant 0 : i32
    return %c0_i32, %c0_i32_0 : i32, i32
  }
  func.func @transform_3(%arg0: i32) -> (i32, i32) {
    %c0_i32 = arith.constant 0 : i32
    %c0_i32_0 = arith.constant 0 : i32
    return %arg0, %c0_i32 : i32, i32
  }
}

module attributes {stable_mosaic.version = 11 : i64} {
  func.func @_mlp_kernel(%arg0: i32, %arg1: memref<8x1024xf32, #tpu.memory_space<vmem>>, %arg2: memref<1024x128xf32, #tpu.memory_space<vmem>>, %arg3: memref<1x128xf32, #tpu.memory_space<vmem>>, %arg4: memref<128x128xf32, #tpu.memory_space<vmem>>, %arg5: memref<1x128xf32, #tpu.memory_space<vmem>>, %arg6: memref<8x128xf32, #tpu.memory_space<vmem>>) attributes {dimension_semantics = [#tpu.dimension_semantics<parallel>], iteration_bounds = array<i64: 1>, scalar_prefetch = 0 : i64, scratch_operands = 0 : i64, tpu.core_type = #tpu.core_type<tc>, window_params = [{transform_indices = @transform_0, window_bounds = array<i64: 8, 1024>}, {pipeline_mode = #tpu.pipeline_mode<synchronous>, transform_indices = @transform_1, window_bounds = array<i64: 1024, 128>}, {pipeline_mode = #tpu.pipeline_mode<synchronous>, transform_indices = @transform_2, window_bounds = array<i64: 1, 128>}, {pipeline_mode = #tpu.pipeline_mode<synchronous>, transform_indices = @transform_3, window_bounds = array<i64: 128, 128>}, {pipeline_mode = #tpu.pipeline_mode<synchronous>, transform_indices = @transform_4, window_bounds = array<i64: 1, 128>}, {transform_indices = @transform_5, window_bounds = array<i64: 8, 128>}]} {
    %c0 = arith.constant 0 : index
    %c0_0 = arith.constant 0 : index
    %0 = vector.load %arg1[%c0, %c0_0] : memref<8x1024xf32, #tpu.memory_space<vmem>>, vector<8x1024xf32>
    %c0_1 = arith.constant 0 : index
    %c0_2 = arith.constant 0 : index
    %1 = vector.load %arg2[%c0_1, %c0_2] : memref<1024x128xf32, #tpu.memory_space<vmem>>, vector<1024x128xf32>
    %cst = arith.constant dense<0.000000e+00> : vector<8x128xf32>
    %2 = tpu.matmul %0, %1, %cst {dimension_numbers = #tpu.dot_dimension_numbers<[1], [0], [0], [1], [0, 0, 1, 1], [], []>} : vector<8x1024xf32>, vector<1024x128xf32>, vector<8x128xf32> -> vector<8x128xf32>
    %c0_3 = arith.constant 0 : index
    %c0_4 = arith.constant 0 : index
    %3 = vector.load %arg3[%c0_3, %c0_4] : memref<1x128xf32, #tpu.memory_space<vmem>>, vector<1x128xf32>
    %4 = vector.broadcast %3 : vector<1x128xf32> to vector<8x128xf32>
    %5 = arith.addf %2, %4 : vector<8x128xf32>
    %cst_5 = arith.constant 0.000000e+00 : f32
    %6 = vector.broadcast %cst_5 : f32 to vector<8x128xf32>
    %7 = arith.maximumf %5, %6 : vector<8x128xf32>
    %c0_6 = arith.constant 0 : index
    %c0_7 = arith.constant 0 : index
    %8 = vector.load %arg4[%c0_6, %c0_7] : memref<128x128xf32, #tpu.memory_space<vmem>>, vector<128x128xf32>
    %cst_8 = arith.constant dense<0.000000e+00> : vector<8x128xf32>
    %9 = tpu.matmul %7, %8, %cst_8 {dimension_numbers = #tpu.dot_dimension_numbers<[1], [0], [0], [1], [0, 0, 1, 1], [], []>} : vector<8x128xf32>, vector<128x128xf32>, vector<8x128xf32> -> vector<8x128xf32>
    %c0_9 = arith.constant 0 : index
    %c0_10 = arith.constant 0 : index
    %10 = vector.load %arg5[%c0_9, %c0_10] : memref<1x128xf32, #tpu.memory_space<vmem>>, vector<1x128xf32>
    %11 = vector.broadcast %10 : vector<1x128xf32> to vector<8x128xf32>
    %12 = arith.addf %9, %11 : vector<8x128xf32>
    %c0_11 = arith.constant 0 : index
    %c0_12 = arith.constant 0 : index
    %13 = vector.load %arg6[%c0_11, %c0_12] : memref<8x128xf32, #tpu.memory_space<vmem>>, vector<8x128xf32>
    tpu.vector_store %arg6[%c0_11, %c0_12], %12 {strides = array<i32>} : memref<8x128xf32, #tpu.memory_space<vmem>>, vector<8x128xf32>,
    return
  }
  func.func @transform_0(%arg0: i32) -> (i32, i32) {
    %c0_i32 = arith.constant 0 : i32
    %c0_i32_0 = arith.constant 0 : i32
    return %arg0, %c0_i32 : i32, i32
  }
  func.func @transform_1(%arg0: i32) -> (i32, i32) {
    %c0_i32 = arith.constant 0 : i32
    %c0_i32_0 = arith.constant 0 : i32
    %c0_i32_1 = arith.constant 0 : i32
    return %c0_i32, %c0_i32_0 : i32, i32
  }
  func.func @transform_2(%arg0: i32) -> (i32, i32) {
    %c0_i32 = arith.constant 0 : i32
    %c0_i32_0 = arith.constant 0 : i32
    %c0_i32_1 = arith.constant 0 : i32
    return %c0_i32, %c0_i32_0 : i32, i32
  }
  func.func @transform_3(%arg0: i32) -> (i32, i32) {
    %c0_i32 = arith.constant 0 : i32
    %c0_i32_0 = arith.constant 0 : i32
    %c0_i32_1 = arith.constant 0 : i32
    return %c0_i32, %c0_i32_0 : i32, i32
  }
  func.func @transform_4(%arg0: i32) -> (i32, i32) {
    %c0_i32 = arith.constant 0 : i32
    %c0_i32_0 = arith.constant 0 : i32
    %c0_i32_1 = arith.constant 0 : i32
    return %c0_i32, %c0_i32_0 : i32, i32
  }
  func.func @transform_5(%arg0: i32) -> (i32, i32) {
    %c0_i32 = arith.constant 0 : i32
    %c0_i32_0 = arith.constant 0 : i32
    return %arg0, %c0_i32 : i32, i32
  }
}

</mosaic_0001>

<llo_original>
// kernel: convnet_mnist_forward.3
$region0: #{convnet_mnist_forward.3}
  #allocation0 [shape = 'u32[]', space=smem, size = 0x4, offset = 0x4, fixed_abs, tag = 'smem constant byte address 0x4 - core index']
  #allocation1 [shape = 'u32[144,128]{1,0:T(1,128)}', space=vmem, size = 0x12000, scoped, tag = 'internal scratch']
  %s0 = inlined_call_operand.vmem [shape: f32[4,512,25], index: 0, kind: input, shape index: {}]
  %s1 = inlined_call_operand.vmem [shape: f32[25,128], index: 1, kind: input, shape index: {}]
  %s2 = inlined_call_operand.vmem [shape: f32[1,128], index: 2, kind: input, shape index: {}]
  %s3 = inlined_call_operand.vmem [shape: f32[512,128], index: 3, kind: output, shape index: {}]
  %s4 = sld [smem:[#allocation0]]
  $region83: #{convnet_mnist_forward.3} parent=0
    _
  %s6 = ssub.s32 1, %s4
  %s7 = scalar_select 0, %s6, %s4
  $region1: #{convnet_mnist_forward.3} parent=0
    #allocation2 [shape = 'u8[1048576]{0}', space=vmem, size = 0x100000, scoped, tag = 'input window, operand 0']
    loop: start=0, step=1, limit=4
    $region2: #{convnet_mnist_forward.3} parent=1 // loop_pre_header
      _
    $region3: #{convnet_mnist_forward.3} parent=1 // loop_header
      %s9 = sphi 0, %s13
      %p10 = scmp.ge.s32.totalorder %s9, 4
      %s19 = sphi 0, %s21
      %s22 = sphi 0, %s19
      %s23 = sphi 0, %s22
      %s39 = sphi 0, %s23
      %s43 = sphi 0, %s43
      %s45 = sphi 0, %s43
      %s46 = sphi 0, %s45
      %s60 = sphi 0, %s46
      %s64 = sphi 0, %s64
      %s66 = sphi 0, %s64
      %s67 = sphi 0, %s66
      %s81 = sphi 0, %s67
      %s87 = sphi 0, %s89
      %s90 = sphi 0, %s87
      %s91 = sphi 0, %s90
      %s107 = sphi 0, %s91
    $region4: #{convnet_mnist_forward.3} parent=1 // loop_header_branch
      %12 = sbr.rel (%p10) target = $region8
    $region5: #{convnet_mnist_forward.3} parent=1 // loop_body
      %s14 = ssub.s32 %s9, 1
      %s15 = ssub.s32 %s9, 2
      %s16 = sadd.s32 %s9, 1
      %s17 = ssub.s32 %s9, %s16
      %p18 = scmp.eq.s32.totalorder %s17, 0
      %s20 = sadd.s32 %s19, 1
      %s21 = scalar_select %p18, %s19, %s20
      %p24 = pneg %p18
      %p25 = scmp.eq.s32.totalorder %s9, 1
      %p26 = por %p24, %p25
      %p27 = scmp.ne.s32.totalorder %s19, %s22
      %p28 = scmp.eq.s32.totalorder %s9, 0
      %p29 = por %p27, %p28
      %p30 = scmp.ne.s32.totalorder %s19, %s22
      %p31 = scmp.eq.s32.totalorder %s14, 1
      %p32 = por %p30, %p31
      %p33 = scmp.ne.s32.totalorder %s22, %s23
      %p34 = scmp.eq.s32.totalorder %s14, 0
      %p35 = por %p33, %p34
      %p36 = scmp.ne.s32.totalorder %s22, %s23
      %p37 = scmp.eq.s32.totalorder %s15, 1
      %p38 = por %p36, %p37
      %p40 = scmp.ne.s32.totalorder %s23, %s39
      %p41 = scmp.eq.s32.totalorder %s15, 0
      %p42 = por %p40, %p41
      %s44 = sadd.s32 %s43, 1
      %p47 = scmp.eq.s32.totalorder %s9, 1
      %p48 = scmp.ne.s32.totalorder %s43, %s45
      %p49 = scmp.eq.s32.totalorder %s9, 0
      %p50 = por %p48, %p49
      %p51 = scmp.ne.s32.totalorder %s43, %s45
      %p52 = scmp.eq.s32.totalorder %s14, 1
      %p53 = por %p51, %p52
      %p54 = scmp.ne.s32.totalorder %s45, %s46
      %p55 = scmp.eq.s32.totalorder %s14, 0
      %p56 = por %p54, %p55
      %p57 = scmp.ne.s32.totalorder %s45, %s46
      %p58 = scmp.eq.s32.totalorder %s15, 1
      %p59 = por %p57, %p58
      %p61 = scmp.ne.s32.totalorder %s46, %s60
      %p62 = scmp.eq.s32.totalorder %s15, 0
      %p63 = por %p61, %p62
      %s65 = sadd.s32 %s64, 1
      %p68 = scmp.eq.s32.totalorder %s9, 1
      %p69 = scmp.ne.s32.totalorder %s64, %s66
      %p70 = scmp.eq.s32.totalorder %s9, 0
      %p71 = por %p69, %p70
      %p72 = scmp.ne.s32.totalorder %s64, %s66
      %p73 = scmp.eq.s32.totalorder %s14, 1
      %p74 = por %p72, %p73
      %p75 = scmp.ne.s32.totalorder %s66, %s67
      %p76 = scmp.eq.s32.totalorder %s14, 0
      %p77 = por %p75, %p76
      %p78 = scmp.ne.s32.totalorder %s66, %s67
      %p79 = scmp.eq.s32.totalorder %s15, 1
      %p80 = por %p78, %p79
      %p82 = scmp.ne.s32.totalorder %s67, %s81
      %p83 = scmp.eq.s32.totalorder %s15, 0
      %p84 = por %p82, %p83
      %s85 = ssub.s32 %s9, %s16
      %p86 = scmp.eq.s32.totalorder %s85, 0
      %s88 = sadd.s32 %s87, 1
      %s89 = scalar_select %p86, %s87, %s88
      %p92 = pneg %p86
      %p93 = scmp.eq.s32.totalorder %s9, 1
      %p94 = por %p92, %p93
      %p95 = scmp.ne.s32.totalorder %s87, %s90
      %p96 = scmp.eq.s32.totalorder %s9, 0
      %p97 = por %p95, %p96
      %p98 = scmp.ne.s32.totalorder %s87, %s90
      %p99 = scmp.eq.s32.totalorder %s14, 1
      %p100 = por %p98, %p99
      %p101 = scmp.ne.s32.totalorder %s90, %s91
      %p102 = scmp.eq.s32.totalorder %s14, 0
      %p103 = por %p101, %p102
      %p104 = scmp.ne.s32.totalorder %s90, %s91
      %p105 = scmp.eq.s32.totalorder %s15, 1
      %p106 = por %p104, %p105
      %p108 = scmp.ne.s32.totalorder %s91, %s107
      %p109 = scmp.eq.s32.totalorder %s15, 0
      %p110 = por %p108, %p109
      %p111 = scmp.le.s32.totalorder 1, %s9
      %p112 = scmp.lt.s32.totalorder %s9, 3
      %p113 = pnand %p111, %p112
      %p114 = pneg %p113
      // Predicated region
      $region9: #{convnet_mnist_forward.3} parent=5 // pred_check
        _
      $region10: #{convnet_mnist_forward.3} parent=5 // pred_check_branch
        %116 = sbr.rel (%p113) target = $region12
      $region11: #{convnet_mnist_forward.3} parent=5 // pred_region
        %s117 = ssub.s32 %s9, 1
        // Predicated region
        $region13: #{convnet_mnist_forward.3} parent=11 // pred_check
          %p118 = pneg %p56
        $region14: #{convnet_mnist_forward.3} parent=11 // pred_check_branch
          %120 = sbr.rel (%p118) target = $region16
        $region15: #{convnet_mnist_forward.3} parent=11 // pred_region
          _
        $region16: #{convnet_mnist_forward.3} parent=11 // pred_fallthru
          _
        // Predicated region
        $region17: #{convnet_mnist_forward.3} parent=11 // pred_check
          %p121 = pneg %p77
        $region18: #{convnet_mnist_forward.3} parent=11 // pred_check_branch
          %123 = sbr.rel (%p121) target = $region20
        $region19: #{convnet_mnist_forward.3} parent=11 // pred_region
          _
        $region20: #{convnet_mnist_forward.3} parent=11 // pred_fallthru
          _
      $region12: #{convnet_mnist_forward.3} parent=5 // pred_fallthru
        _
      %p124 = scmp.lt.s32.totalorder %s9, 2
      // Predicated region
      $region21: #{convnet_mnist_forward.3} parent=5 // pred_check
        %p125 = pneg %p124
      $region22: #{convnet_mnist_forward.3} parent=5 // pred_check_branch
        %127 = sbr.rel (%p125) target = $region24
      $region23: #{convnet_mnist_forward.3} parent=5 // pred_region
        // Predicated region
        $region25: #{convnet_mnist_forward.3} parent=23 // pred_check
          %p128 = pneg %p29
        $region26: #{convnet_mnist_forward.3} parent=23 // pred_check_branch
          %130 = sbr.rel (%p128) target = $region28
        $region27: #{convnet_mnist_forward.3} parent=23 // pred_region
          %s131 = sand.u32 %s19, 1
          %s132 = sand.u32 %s19, 1
          %s133 = smul.addr %s132, 1024
          %s134 = scalar_lea.vmem [#allocation2], %s133
          %s135 = smul.u32 32, %s9
          %s136 = smul.addr %s135, 8
          %s137 = scalar_lea.vmem %s0, %s136
          // Predicated region
          $region29: #{convnet_mnist_forward.3} parent=27 // pred_check
            _
          $region30: #{convnet_mnist_forward.3} parent=27 // pred_check_branch
            %139 = sbr.rel (0) target = $region32
          $region31: #{convnet_mnist_forward.3} parent=27 // pred_region
            // Predicated region
            $region33: #{convnet_mnist_forward.3} parent=31 // pred_check
              _
            $region34: #{convnet_mnist_forward.3} parent=31 // pred_check_branch
              %141 = sbr.rel (0) target = $region36
            $region35: #{convnet_mnist_forward.3} parent=31 // pred_region
              // Predicated region
              $region48: #{convnet_mnist_forward.3} parent=35 // pred_check
                _
              $region49: #{convnet_mnist_forward.3} parent=35 // pred_check_branch
                %411 = sbr.rel (0) target = $region51
              $region50: #{convnet_mnist_forward.3} parent=35 // pred_region
                loop: start=0, step=1, limit=1
                $region52: #{convnet_mnist_forward.3} parent=50 // loop_pre_header
                  _
                $region53: #{convnet_mnist_forward.3} parent=50 // loop_header
                  %s413 = sphi 0, %s417
                  %p414 = scmp.ge.s32.totalorder %s413, 1
                  %s418 = sphi %s137, %s137
                  %s419 = sphi %s134, %s134
                $region54: #{convnet_mnist_forward.3} parent=50 // loop_header_branch
                  %416 = sbr.rel (%p414) target = $region58
                $region55: #{convnet_mnist_forward.3} parent=50 // loop_body
                  %v420 = vld [vmem:[%s418] sm:$0xff]
                  %421 = vst [vmem:[%s419] sm:$0xff] %v420
                  %v422 = vld [vmem:[%s418 + $0x8] sm:$0xff]
                  %423 = vst [vmem:[%s419 + $0x8] sm:$0xff] %v422
                  %v424 = vld [vmem:[%s418 + $0x10] sm:$0xff]
                  %425 = vst [vmem:[%s419 + $0x10] sm:$0xff] %v424
                  %v426 = vld [vmem:[%s418 + $0x18] sm:$0xff]
                  %427 = vst [vmem:[%s419 + $0x18] sm:$0xff] %v426
                  %v428 = vld [vmem:[%s418 + $0x20] sm:$0xff]
                  %429 = vst [vmem:[%s419 + $0x20] sm:$0xff] %v428
                  %v430 = vld [vmem:[%s418 + $0x28] sm:$0xff]
                  %431 = vst [vmem:[%s419 + $0x28] sm:$0xff] %v430
                  %v432 = vld [vmem:[%s418 + $0x30] sm:$0xff]
                  %433 = vst [vmem:[%s419 + $0x30] sm:$0xff] %v432
                  %v434 = vld [vmem:[%s418 + $0x38] sm:$0xff]
                  %435 = vst [vmem:[%s419 + $0x38] sm:$0xff] %v434
                  %v436 = vld [vmem:[%s418 + $0x40] sm:$0xff]
                  %437 = vst [vmem:[%s419 + $0x40] sm:$0xff] %v436
                  %v438 = vld [vmem:[%s418 + $0x48] sm:$0xff]
                  %439 = vst [vmem:[%s419 + $0x48] sm:$0xff] %v438
                  %v440 = vld [vmem:[%s418 + $0x50] sm:$0xff]
                  %441 = vst [vmem:[%s419 + $0x50] sm:$0xff] %v440
                  %v442 = vld [vmem:[%s418 + $0x58] sm:$0xff]
                  %443 = vst [vmem:[%s419 + $0x58] sm:$0xff] %v442
                  %v444 = vld [vmem:[%s418 + $0x60] sm:$0xff]
                  %445 = vst [vmem:[%s419 + $0x60] sm:$0xff] %v444
                  %v446 = vld [vmem:[%s418 + $0x68] sm:$0xff]
                  %447 = vst [vmem:[%s419 + $0x68] sm:$0xff] %v446
                  %v448 = vld [vmem:[%s418 + $0x70] sm:$0xff]
                  %449 = vst [vmem:[%s419 + $0x70] sm:$0xff] %v448
                  %v450 = vld [vmem:[%s418 + $0x78] sm:$0xff]
                  %451 = vst [vmem:[%s419 + $0x78] sm:$0xff] %v450
                  %v452 = vld [vmem:[%s418 + $0x80] sm:$0xff]
                  %453 = vst [vmem:[%s419 + $0x80] sm:$0xff] %v452
                  %v454 = vld [vmem:[%s418 + $0x88] sm:$0xff]
                  %455 = vst [vmem:[%s419 + $0x88] sm:$0xff] %v454
                  %v456 = vld [vmem:[%s418 + $0x90] sm:$0xff]
                  %457 = vst [vmem:[%s419 + $0x90] sm:$0xff] %v456
                  %v458 = vld [vmem:[%s418 + $0x98] sm:$0xff]
                  %459 = vst [vmem:[%s419 + $0x98] sm:$0xff] %v458
                  %v460 = vld [vmem:[%s418 + $0xa0] sm:$0xff]
                  %461 = vst [vmem:[%s419 + $0xa0] sm:$0xff] %v460
                  %v462 = vld [vmem:[%s418 + $0xa8] sm:$0xff]
                  %463 = vst [vmem:[%s419 + $0xa8] sm:$0xff] %v462
                  %v464 = vld [vmem:[%s418 + $0xb0] sm:$0xff]
                  %465 = vst [vmem:[%s419 + $0xb0] sm:$0xff] %v464
                  %v466 = vld [vmem:[%s418 + $0xb8] sm:$0xff]
                  %467 = vst [vmem:[%s419 + $0xb8] sm:$0xff] %v466
                  %v468 = vld [vmem:[%s418 + $0xc0] sm:$0xff]
                  %469 = vst [vmem:[%s419 + $0xc0] sm:$0xff] %v468
                  %v470 = vld [vmem:[%s418 + $0xc8] sm:$0xff]
                  %471 = vst [vmem:[%s419 + $0xc8] sm:$0xff] %v470
                  %v472 = vld [vmem:[%s418 + $0xd0] sm:$0xff]
                  %473 = vst [vmem:[%s419 + $0xd0] sm:$0xff] %v472
                  %v474 = vld [vmem:[%s418 + $0xd8] sm:$0xff]
                  %475 = vst [vmem:[%s419 + $0xd8] sm:$0xff] %v474
                  %v476 = vld [vmem:[%s418 + $0xe0] sm:$0xff]
                  %477 = vst [vmem:[%s419 + $0xe0] sm:$0xff] %v476
                  %v478 = vld [vmem:[%s418 + $0xe8] sm:$0xff]
                  %479 = vst [vmem:[%s419 + $0xe8] sm:$0xff] %v478
                  %v480 = vld [vmem:[%s418 + $0xf0] sm:$0xff]
                  %481 = vst [vmem:[%s419 + $0xf0] sm:$0xff] %v480
                  %v482 = vld [vmem:[%s418 + $0xf8] sm:$0xff]
                  %483 = vst [vmem:[%s419 + $0xf8] sm:$0xff] %v482
                  %v484 = vld [vmem:[%s418 + $0x200] sm:$0xff]
                  %485 = vst [vmem:[%s419 + $0x100] sm:$0xff] %v484
                  %v486 = vld [vmem:[%s418 + $0x208] sm:$0xff]
                  %487 = vst [vmem:[%s419 + $0x108] sm:$0xff] %v486
                  %v488 = vld [vmem:[%s418 + $0x210] sm:$0xff]
                  %489 = vst [vmem:[%s419 + $0x110] sm:$0xff] %v488
                  %v490 = vld [vmem:[%s418 + $0x218] sm:$0xff]
                  %491 = vst [vmem:[%s419 + $0x118] sm:$0xff] %v490
                  %v492 = vld [vmem:[%s418 + $0x220] sm:$0xff]
                  %493 = vst [vmem:[%s419 + $0x120] sm:$0xff] %v492
                  %v494 = vld [vmem:[%s418 + $0x228] sm:$0xff]
                  %495 = vst [vmem:[%s419 + $0x128] sm:$0xff] %v494
                  %v496 = vld [vmem:[%s418 + $0x230] sm:$0xff]
                  %497 = vst [vmem:[%s419 + $0x130] sm:$0xff] %v496
                  %v498 = vld [vmem:[%s418 + $0x238] sm:$0xff]
                  %499 = vst [vmem:[%s419 + $0x138] sm:$0xff] %v498
                  %v500 = vld [vmem:[%s418 + $0x240] sm:$0xff]
                  %501 = vst [vmem:[%s419 + $0x140] sm:$0xff] %v500
                  %v502 = vld [vmem:[%s418 + $0x248] sm:$0xff]
                  %503 = vst [vmem:[%s419 + $0x148] sm:$0xff] %v502
                  %v504 = vld [vmem:[%s418 + $0x250] sm:$0xff]
                  %505 = vst [vmem:[%s419 + $0x150] sm:$0xff] %v504
                  %v506 = vld [vmem:[%s418 + $0x258] sm:$0xff]
                  %507 = vst [vmem:[%s419 + $0x158] sm:$0xff] %v506
                  %v508 = vld [vmem:[%s418 + $0x260] sm:$0xff]
                  %509 = vst [vmem:[%s419 + $0x160] sm:$0xff] %v508
                  %v510 = vld [vmem:[%s418 + $0x268] sm:$0xff]
                  %511 = vst [vmem:[%s419 + $0x168] sm:$0xff] %v510
                  %v512 = vld [vmem:[%s418 + $0x270] sm:$0xff]
                  %513 = vst [vmem:[%s419 + $0x170] sm:$0xff] %v512
                  %v514 = vld [vmem:[%s418 + $0x278] sm:$0xff]
                  %515 = vst [vmem:[%s419 + $0x178] sm:$0xff] %v514
                  %v516 = vld [vmem:[%s418 + $0x280] sm:$0xff]
                  %517 = vst [vmem:[%s419 + $0x180] sm:$0xff] %v516
                  %v518 = vld [vmem:[%s418 + $0x288] sm:$0xff]
                  %519 = vst [vmem:[%s419 + $0x188] sm:$0xff] %v518
                  %v520 = vld [vmem:[%s418 + $0x290] sm:$0xff]
                  %521 = vst [vmem:[%s419 + $0x190] sm:$0xff] %v520
                  %v522 = vld [vmem:[%s418 + $0x298] sm:$0xff]
                  %523 = vst [vmem:[%s419 + $0x198] sm:$0xff] %v522
                  %v524 = vld [vmem:[%s418 + $0x2a0] sm:$0xff]
                  %525 = vst [vmem:[%s419 + $0x1a0] sm:$0xff] %v524
                  %v526 = vld [vmem:[%s418 + $0x2a8] sm:$0xff]
                  %527 = vst [vmem:[%s419 + $0x1a8] sm:$0xff] %v526
                  %v528 = vld [vmem:[%s418 + $0x2b0] sm:$0xff]
                  %529 = vst [vmem:[%s419 + $0x1b0] sm:$0xff] %v528
                  %v530 = vld [vmem:[%s418 + $0x2b8] sm:$0xff]
                  %531 = vst [vmem:[%s419 + $0x1b8] sm:$0xff] %v530
                  %v532 = vld [vmem:[%s418 + $0x2c0] sm:$0xff]
                  %533 = vst [vmem:[%s419 + $0x1c0] sm:$0xff] %v532
                  %v534 = vld [vmem:[%s418 + $0x2c8] sm:$0xff]
                  %535 = vst [vmem:[%s419 + $0x1c8] sm:$0xff] %v534
                  %v536 = vld [vmem:[%s418 + $0x2d0] sm:$0xff]
                  %537 = vst [vmem:[%s419 + $0x1d0] sm:$0xff] %v536
                  %v538 = vld [vmem:[%s418 + $0x2d8] sm:$0xff]
                  %539 = vst [vmem:[%s419 + $0x1d8] sm:$0xff] %v538
                  %v540 = vld [vmem:[%s418 + $0x2e0] sm:$0xff]
                  %541 = vst [vmem:[%s419 + $0x1e0] sm:$0xff] %v540
                  %v542 = vld [vmem:[%s418 + $0x2e8] sm:$0xff]
                  %543 = vst [vmem:[%s419 + $0x1e8] sm:$0xff] %v542
                  %v544 = vld [vmem:[%s418 + $0x2f0] sm:$0xff]
                  %545 = vst [vmem:[%s419 + $0x1f0] sm:$0xff] %v544
                  %v546 = vld [vmem:[%s418 + $0x2f8] sm:$0xff]
                  %547 = vst [vmem:[%s419 + $0x1f8] sm:$0xff] %v546
                  %v548 = vld [vmem:[%s418 + $0x400] sm:$0xff]
                  %549 = vst [vmem:[%s419 + $0x200] sm:$0xff] %v548
                  %v550 = vld [vmem:[%s418 + $0x408] sm:$0xff]
                  %551 = vst [vmem:[%s419 + $0x208] sm:$0xff] %v550
                  %v552 = vld [vmem:[%s418 + $0x410] sm:$0xff]
                  %553 = vst [vmem:[%s419 + $0x210] sm:$0xff] %v552
                  %v554 = vld [vmem:[%s418 + $0x418] sm:$0xff]
                  %555 = vst [vmem:[%s419 + $0x218] sm:$0xff] %v554
                  %v556 = vld [vmem:[%s418 + $0x420] sm:$0xff]
                  %557 = vst [vmem:[%s419 + $0x220] sm:$0xff] %v556
                  %v558 = vld [vmem:[%s418 + $0x428] sm:$0xff]
                  %559 = vst [vmem:[%s419 + $0x228] sm:$0xff] %v558
                  %v560 = vld [vmem:[%s418 + $0x430] sm:$0xff]
                  %561 = vst [vmem:[%s419 + $0x230] sm:$0xff] %v560
                  %v562 = vld [vmem:[%s418 + $0x438] sm:$0xff]
                  %563 = vst [vmem:[%s419 + $0x238] sm:$0xff] %v562
                  %v564 = vld [vmem:[%s418 + $0x440] sm:$0xff]
                  %565 = vst [vmem:[%s419 + $0x240] sm:$0xff] %v564
                  %v566 = vld [vmem:[%s418 + $0x448] sm:$0xff]
                  %567 = vst [vmem:[%s419 + $0x248] sm:$0xff] %v566
                  %v568 = vld [vmem:[%s418 + $0x450] sm:$0xff]
                  %569 = vst [vmem:[%s419 + $0x250] sm:$0xff] %v568
                  %v570 = vld [vmem:[%s418 + $0x458] sm:$0xff]
                  %571 = vst [vmem:[%s419 + $0x258] sm:$0xff] %v570
                  %v572 = vld [vmem:[%s418 + $0x460] sm:$0xff]
                  %573 = vst [vmem:[%s419 + $0x260] sm:$0xff] %v572
                  %v574 = vld [vmem:[%s418 + $0x468] sm:$0xff]
                  %575 = vst [vmem:[%s419 + $0x268] sm:$0xff] %v574
                  %v576 = vld [vmem:[%s418 + $0x470] sm:$0xff]
                  %577 = vst [vmem:[%s419 + $0x270] sm:$0xff] %v576
                  %v578 = vld [vmem:[%s418 + $0x478] sm:$0xff]
                  %579 = vst [vmem:[%s419 + $0x278] sm:$0xff] %v578
                  %v580 = vld [vmem:[%s418 + $0x480] sm:$0xff]
                  %581 = vst [vmem:[%s419 + $0x280] sm:$0xff] %v580
                  %v582 = vld [vmem:[%s418 + $0x488] sm:$0xff]
                  %583 = vst [vmem:[%s419 + $0x288] sm:$0xff] %v582
                  %v584 = vld [vmem:[%s418 + $0x490] sm:$0xff]
                  %585 = vst [vmem:[%s419 + $0x290] sm:$0xff] %v584
                  %v586 = vld [vmem:[%s418 + $0x498] sm:$0xff]
                  %587 = vst [vmem:[%s419 + $0x298] sm:$0xff] %v586
                  %v588 = vld [vmem:[%s418 + $0x4a0] sm:$0xff]
                  %589 = vst [vmem:[%s419 + $0x2a0] sm:$0xff] %v588
                  %v590 = vld [vmem:[%s418 + $0x4a8] sm:$0xff]
                  %591 = vst [vmem:[%s419 + $0x2a8] sm:$0xff] %v590
                  %v592 = vld [vmem:[%s418 + $0x4b0] sm:$0xff]
                  %593 = vst [vmem:[%s419 + $0x2b0] sm:$0xff] %v592
                  %v594 = vld [vmem:[%s418 + $0x4b8] sm:$0xff]
                  %595 = vst [vmem:[%s419 + $0x2b8] sm:$0xff] %v594
                  %v596 = vld [vmem:[%s418 + $0x4c0] sm:$0xff]
                  %597 = vst [vmem:[%s419 + $0x2c0] sm:$0xff] %v596
                  %v598 = vld [vmem:[%s418 + $0x4c8] sm:$0xff]
                  %599 = vst [vmem:[%s419 + $0x2c8] sm:$0xff] %v598
                  %v600 = vld [vmem:[%s418 + $0x4d0] sm:$0xff]
                  %601 = vst [vmem:[%s419 + $0x2d0] sm:$0xff] %v600
                  %v602 = vld [vmem:[%s418 + $0x4d8] sm:$0xff]
                  %603 = vst [vmem:[%s419 + $0x2d8] sm:$0xff] %v602
                  %v604 = vld [vmem:[%s418 + $0x4e0] sm:$0xff]
                  %605 = vst [vmem:[%s419 + $0x2e0] sm:$0xff] %v604
                  %v606 = vld [vmem:[%s418 + $0x4e8] sm:$0xff]
                  %607 = vst [vmem:[%s419 + $0x2e8] sm:$0xff] %v606
                  %v608 = vld [vmem:[%s418 + $0x4f0] sm:$0xff]
                  %609 = vst [vmem:[%s419 + $0x2f0] sm:$0xff] %v608
                  %v610 = vld [vmem:[%s418 + $0x4f8] sm:$0xff]
                  %611 = vst [vmem:[%s419 + $0x2f8] sm:$0xff] %v610
                  %v612 = vld [vmem:[%s418 + $0x600] sm:$0xff]
                  %613 = vst [vmem:[%s419 + $0x300] sm:$0xff] %v612
                  %v614 = vld [vmem:[%s418 + $0x608] sm:$0xff]
                  %615 = vst [vmem:[%s419 + $0x308] sm:$0xff] %v614
                  %v616 = vld [vmem:[%s418 + $0x610] sm:$0xff]
                  %617 = vst [vmem:[%s419 + $0x310] sm:$0xff] %v616
                  %v618 = vld [vmem:[%s418 + $0x618] sm:$0xff]
                  %619 = vst [vmem:[%s419 + $0x318] sm:$0xff] %v618
                  %v620 = vld [vmem:[%s418 + $0x620] sm:$0xff]
                  %621 = vst [vmem:[%s419 + $0x320] sm:$0xff] %v620
                  %v622 = vld [vmem:[%s418 + $0x628] sm:$0xff]
                  %623 = vst [vmem:[%s419 + $0x328] sm:$0xff] %v622
                  %v624 = vld [vmem:[%s418 + $0x630] sm:$0xff]
                  %625 = vst [vmem:[%s419 + $0x330] sm:$0xff] %v624
                  %v626 = vld [vmem:[%s418 + $0x638] sm:$0xff]
                  %627 = vst [vmem:[%s419 + $0x338] sm:$0xff] %v626
                  %v628 = vld [vmem:[%s418 + $0x640] sm:$0xff]
                  %629 = vst [vmem:[%s419 + $0x340] sm:$0xff] %v628
                  %v630 = vld [vmem:[%s418 + $0x648] sm:$0xff]
                  %631 = vst [vmem:[%s419 + $0x348] sm:$0xff] %v630
                  %v632 = vld [vmem:[%s418 + $0x650] sm:$0xff]
                  %633 = vst [vmem:[%s419 + $0x350] sm:$0xff] %v632
                  %v634 = vld [vmem:[%s418 + $0x658] sm:$0xff]
                  %635 = vst [vmem:[%s419 + $0x358] sm:$0xff] %v634
                  %v636 = vld [vmem:[%s418 + $0x660] sm:$0xff]
                  %637 = vst [vmem:[%s419 + $0x360] sm:$0xff] %v636
                  %v638 = vld [vmem:[%s418 + $0x668] sm:$0xff]
                  %639 = vst [vmem:[%s419 + $0x368] sm:$0xff] %v638
                  %v640 = vld [vmem:[%s418 + $0x670] sm:$0xff]
                  %641 = vst [vmem:[%s419 + $0x370] sm:$0xff] %v640
                  %v642 = vld [vmem:[%s418 + $0x678] sm:$0xff]
                  %643 = vst [vmem:[%s419 + $0x378] sm:$0xff] %v642
                  %v644 = vld [vmem:[%s418 + $0x680] sm:$0xff]
                  %645 = vst [vmem:[%s419 + $0x380] sm:$0xff] %v644
                  %v646 = vld [vmem:[%s418 + $0x688] sm:$0xff]
                  %647 = vst [vmem:[%s419 + $0x388] sm:$0xff] %v646
                  %v648 = vld [vmem:[%s418 + $0x690] sm:$0xff]
                  %649 = vst [vmem:[%s419 + $0x390] sm:$0xff] %v648
                  %v650 = vld [vmem:[%s418 + $0x698] sm:$0xff]
                  %651 = vst [vmem:[%s419 + $0x398] sm:$0xff] %v650
                  %v652 = vld [vmem:[%s418 + $0x6a0] sm:$0xff]
                  %653 = vst [vmem:[%s419 + $0x3a0] sm:$0xff] %v652
                  %v654 = vld [vmem:[%s418 + $0x6a8] sm:$0xff]
                  %655 = vst [vmem:[%s419 + $0x3a8] sm:$0xff] %v654
                  %v656 = vld [vmem:[%s418 + $0x6b0] sm:$0xff]
                  %657 = vst [vmem:[%s419 + $0x3b0] sm:$0xff] %v656
                  %v658 = vld [vmem:[%s418 + $0x6b8] sm:$0xff]
                  %659 = vst [vmem:[%s419 + $0x3b8] sm:$0xff] %v658
                  %v660 = vld [vmem:[%s418 + $0x6c0] sm:$0xff]
                  %661 = vst [vmem:[%s419 + $0x3c0] sm:$0xff] %v660
                  %v662 = vld [vmem:[%s418 + $0x6c8] sm:$0xff]
                  %663 = vst [vmem:[%s419 + $0x3c8] sm:$0xff] %v662
                  %v664 = vld [vmem:[%s418 + $0x6d0] sm:$0xff]
                  %665 = vst [vmem:[%s419 + $0x3d0] sm:$0xff] %v664
                  %v666 = vld [vmem:[%s418 + $0x6d8] sm:$0xff]
                  %667 = vst [vmem:[%s419 + $0x3d8] sm:$0xff] %v666
                  %v668 = vld [vmem:[%s418 + $0x6e0] sm:$0xff]
                  %669 = vst [vmem:[%s419 + $0x3e0] sm:$0xff] %v668
                  %v670 = vld [vmem:[%s418 + $0x6e8] sm:$0xff]
                  %671 = vst [vmem:[%s419 + $0x3e8] sm:$0xff] %v670
                  %v672 = vld [vmem:[%s418 + $0x6f0] sm:$0xff]
                  %673 = vst [vmem:[%s419 + $0x3f0] sm:$0xff] %v672
                  %v674 = vld [vmem:[%s418 + $0x6f8] sm:$0xff]
                  %675 = vst [vmem:[%s419 + $0x3f8] sm:$0xff] %v674
                $region56: #{convnet_mnist_forward.3} parent=50 // loop_footer
                  %s417 = sadd.s32 1, %s413
                $region57: #{convnet_mnist_forward.3} parent=50 // loop_footer_branch
                  %412 = sbr.rel target = $region53
                $region58: #{convnet_mnist_forward.3} parent=50 // loop_exit
                  _
              $region51: #{convnet_mnist_forward.3} parent=35 // pred_fallthru
                _
              // Predicated region
              $region59: #{convnet_mnist_forward.3} parent=35 // pred_check
                _
              $region60: #{convnet_mnist_forward.3} parent=35 // pred_check_branch
                %677 = sbr.rel target = $region62
              $region61: #{convnet_mnist_forward.3} parent=35 // pred_region
                _
              $region62: #{convnet_mnist_forward.3} parent=35 // pred_fallthru
                _
            $region36: #{convnet_mnist_forward.3} parent=31 // pred_fallthru
              _
            // Predicated region
            $region37: #{convnet_mnist_forward.3} parent=31 // pred_check
              _
            $region38: #{convnet_mnist_forward.3} parent=31 // pred_check_branch
              %143 = sbr.rel target = $region40
            $region39: #{convnet_mnist_forward.3} parent=31 // pred_region
              %s145 = ssub.s32 256, 1
              loop: start=0, step=1, limit=1
              $region41: #{convnet_mnist_forward.3} parent=39 // loop_pre_header
                _
              $region42: #{convnet_mnist_forward.3} parent=39 // loop_header
                %s147 = sphi 0, %s151
                %p148 = scmp.ge.s32.totalorder %s147, 1
                %s152 = sphi %s137, %s137
                %s153 = sphi %s134, %s134
              $region43: #{convnet_mnist_forward.3} parent=39 // loop_header_branch
                %150 = sbr.rel (%p148) target = $region47
              $region44: #{convnet_mnist_forward.3} parent=39 // loop_body
                %v154 = vld [vmem:[%s152] sm:%s145]
                %155 = vst [vmem:[%s153] sm:%s145] %v154
                %v156 = vld [vmem:[%s152 + $0x8] sm:%s145]
                %157 = vst [vmem:[%s153 + $0x8] sm:%s145] %v156
                %v158 = vld [vmem:[%s152 + $0x10] sm:%s145]
                %159 = vst [vmem:[%s153 + $0x10] sm:%s145] %v158
                %v160 = vld [vmem:[%s152 + $0x18] sm:%s145]
                %161 = vst [vmem:[%s153 + $0x18] sm:%s145] %v160
                %v162 = vld [vmem:[%s152 + $0x20] sm:%s145]
                %163 = vst [vmem:[%s153 + $0x20] sm:%s145] %v162
                %v164 = vld [vmem:[%s152 + $0x28] sm:%s145]
                %165 = vst [vmem:[%s153 + $0x28] sm:%s145] %v164
                %v166 = vld [vmem:[%s152 + $0x30] sm:%s145]
                %167 = vst [vmem:[%s153 + $0x30] sm:%s145] %v166
                %v168 = vld [vmem:[%s152 + $0x38] sm:%s145]
                %169 = vst [vmem:[%s153 + $0x38] sm:%s145] %v168
                %v170 = vld [vmem:[%s152 + $0x40] sm:%s145]
                %171 = vst [vmem:[%s153 + $0x40] sm:%s145] %v170
                %v172 = vld [vmem:[%s152 + $0x48] sm:%s145]
                %173 = vst [vmem:[%s153 + $0x48] sm:%s145] %v172
                %v174 = vld [vmem:[%s152 + $0x50] sm:%s145]
                %175 = vst [vmem:[%s153 + $0x50] sm:%s145] %v174
                %v176 = vld [vmem:[%s152 + $0x58] sm:%s145]
                %177 = vst [vmem:[%s153 + $0x58] sm:%s145] %v176
                %v178 = vld [vmem:[%s152 + $0x60] sm:%s145]
                %179 = vst [vmem:[%s153 + $0x60] sm:%s145] %v178
                %v180 = vld [vmem:[%s152 + $0x68] sm:%s145]
                %181 = vst [vmem:[%s153 + $0x68] sm:%s145] %v180
                %v182 = vld [vmem:[%s152 + $0x70] sm:%s145]
                %183 = vst [vmem:[%s153 + $0x70] sm:%s145] %v182
                %v184 = vld [vmem:[%s152 + $0x78] sm:%s145]
                %185 = vst [vmem:[%s153 + $0x78] sm:%s145] %v184
                %v186 = vld [vmem:[%s152 + $0x80] sm:%s145]
                %187 = vst [vmem:[%s153 + $0x80] sm:%s145] %v186
                %v188 = vld [vmem:[%s152 + $0x88] sm:%s145]
                %189 = vst [vmem:[%s153 + $0x88] sm:%s145] %v188
                %v190 = vld [vmem:[%s152 + $0x90] sm:%s145]
                %191 = vst [vmem:[%s153 + $0x90] sm:%s145] %v190
                %v192 = vld [vmem:[%s152 + $0x98] sm:%s145]
                %193 = vst [vmem:[%s153 + $0x98] sm:%s145] %v192
                %v194 = vld [vmem:[%s152 + $0xa0] sm:%s145]
                %195 = vst [vmem:[%s153 + $0xa0] sm:%s145] %v194
                %v196 = vld [vmem:[%s152 + $0xa8] sm:%s145]
                %197 = vst [vmem:[%s153 + $0xa8] sm:%s145] %v196
                %v198 = vld [vmem:[%s152 + $0xb0] sm:%s145]
                %199 = vst [vmem:[%s153 + $0xb0] sm:%s145] %v198
                %v200 = vld [vmem:[%s152 + $0xb8] sm:%s145]
                %201 = vst [vmem:[%s153 + $0xb8] sm:%s145] %v200
                %v202 = vld [vmem:[%s152 + $0xc0] sm:%s145]
                %203 = vst [vmem:[%s153 + $0xc0] sm:%s145] %v202
                %v204 = vld [vmem:[%s152 + $0xc8] sm:%s145]
                %205 = vst [vmem:[%s153 + $0xc8] sm:%s145] %v204
                %v206 = vld [vmem:[%s152 + $0xd0] sm:%s145]
                %207 = vst [vmem:[%s153 + $0xd0] sm:%s145] %v206
                %v208 = vld [vmem:[%s152 + $0xd8] sm:%s145]
                %209 = vst [vmem:[%s153 + $0xd8] sm:%s145] %v208
                %v210 = vld [vmem:[%s152 + $0xe0] sm:%s145]
                %211 = vst [vmem:[%s153 + $0xe0] sm:%s145] %v210
                %v212 = vld [vmem:[%s152 + $0xe8] sm:%s145]
                %213 = vst [vmem:[%s153 + $0xe8] sm:%s145] %v212
                %v214 = vld [vmem:[%s152 + $0xf0] sm:%s145]
                %215 = vst [vmem:[%s153 + $0xf0] sm:%s145] %v214
                %v216 = vld [vmem:[%s152 + $0xf8] sm:%s145]
                %217 = vst [vmem:[%s153 + $0xf8] sm:%s145] %v216
                %v218 = vld [vmem:[%s152 + $0x200] sm:%s145]
                %219 = vst [vmem:[%s153 + $0x100] sm:%s145] %v218
                %v220 = vld [vmem:[%s152 + $0x208] sm:%s145]
                %221 = vst [vmem:[%s153 + $0x108] sm:%s145] %v220
                %v222 = vld [vmem:[%s152 + $0x210] sm:%s145]
                %223 = vst [vmem:[%s153 + $0x110] sm:%s145] %v222
                %v224 = vld [vmem:[%s152 + $0x218] sm:%s145]
                %225 = vst [vmem:[%s153 + $0x118] sm:%s145] %v224
                %v226 = vld [vmem:[%s152 + $0x220] sm:%s145]
                %227 = vst [vmem:[%s153 + $0x120] sm:%s145] %v226
                %v228 = vld [vmem:[%s152 + $0x228] sm:%s145]
                %229 = vst [vmem:[%s153 + $0x128] sm:%s145] %v228
                %v230 = vld [vmem:[%s152 + $0x230] sm:%s145]
                %231 = vst [vmem:[%s153 + $0x130] sm:%s145] %v230
                %v232 = vld [vmem:[%s152 + $0x238] sm:%s145]
                %233 = vst [vmem:[%s153 + $0x138] sm:%s145] %v232
                %v234 = vld [vmem:[%s152 + $0x240] sm:%s145]
                %235 = vst [vmem:[%s153 + $0x140] sm:%s145] %v234
                %v236 = vld [vmem:[%s152 + $0x248] sm:%s145]
                %237 = vst [vmem:[%s153 + $0x148] sm:%s145] %v236
                %v238 = vld [vmem:[%s152 + $0x250] sm:%s145]
                %239 = vst [vmem:[%s153 + $0x150] sm:%s145] %v238
                %v240 = vld [vmem:[%s152 + $0x258] sm:%s145]
                %241 = vst [vmem:[%s153 + $0x158] sm:%s145] %v240
                %v242 = vld [vmem:[%s152 + $0x260] sm:%s145]
                %243 = vst [vmem:[%s153 + $0x160] sm:%s145] %v242
                %v244 = vld [vmem:[%s152 + $0x268] sm:%s145]
                %245 = vst [vmem:[%s153 + $0x168] sm:%s145] %v244
                %v246 = vld [vmem:[%s152 + $0x270] sm:%s145]
                %247 = vst [vmem:[%s153 + $0x170] sm:%s145] %v246
                %v248 = vld [vmem:[%s152 + $0x278] sm:%s145]
                %249 = vst [vmem:[%s153 + $0x178] sm:%s145] %v248
                %v250 = vld [vmem:[%s152 + $0x280] sm:%s145]
                %251 = vst [vmem:[%s153 + $0x180] sm:%s145] %v250
                %v252 = vld [vmem:[%s152 + $0x288] sm:%s145]
                %253 = vst [vmem:[%s153 + $0x188] sm:%s145] %v252
                %v254 = vld [vmem:[%s152 + $0x290] sm:%s145]
                %255 = vst [vmem:[%s153 + $0x190] sm:%s145] %v254
                %v256 = vld [vmem:[%s152 + $0x298] sm:%s145]
                %257 = vst [vmem:[%s153 + $0x198] sm:%s145] %v256
                %v258 = vld [vmem:[%s152 + $0x2a0] sm:%s145]
                %259 = vst [vmem:[%s153 + $0x1a0] sm:%s145] %v258
                %v260 = vld [vmem:[%s152 + $0x2a8] sm:%s145]
                %261 = vst [vmem:[%s153 + $0x1a8] sm:%s145] %v260
                %v262 = vld [vmem:[%s152 + $0x2b0] sm:%s145]
                %263 = vst [vmem:[%s153 + $0x1b0] sm:%s145] %v262
                %v264 = vld [vmem:[%s152 + $0x2b8] sm:%s145]
                %265 = vst [vmem:[%s153 + $0x1b8] sm:%s145] %v264
                %v266 = vld [vmem:[%s152 + $0x2c0] sm:%s145]
                %267 = vst [vmem:[%s153 + $0x1c0] sm:%s145] %v266
                %v268 = vld [vmem:[%s152 + $0x2c8] sm:%s145]
                %269 = vst [vmem:[%s153 + $0x1c8] sm:%s145] %v268
                %v270 = vld [vmem:[%s152 + $0x2d0] sm:%s145]
                %271 = vst [vmem:[%s153 + $0x1d0] sm:%s145] %v270
                %v272 = vld [vmem:[%s152 + $0x2d8] sm:%s145]
                %273 = vst [vmem:[%s153 + $0x1d8] sm:%s145] %v272
                %v274 = vld [vmem:[%s152 + $0x2e0] sm:%s145]
                %275 = vst [vmem:[%s153 + $0x1e0] sm:%s145] %v274
                %v276 = vld [vmem:[%s152 + $0x2e8] sm:%s145]
                %277 = vst [vmem:[%s153 + $0x1e8] sm:%s145] %v276
                %v278 = vld [vmem:[%s152 + $0x2f0] sm:%s145]
                %279 = vst [vmem:[%s153 + $0x1f0] sm:%s145] %v278
                %v280 = vld [vmem:[%s152 + $0x2f8] sm:%s145]
                %281 = vst [vmem:[%s153 + $0x1f8] sm:%s145] %v280
                %v282 = vld [vmem:[%s152 + $0x400] sm:%s145]
                %283 = vst [vmem:[%s153 + $0x200] sm:%s145] %v282
                %v284 = vld [vmem:[%s152 + $0x408] sm:%s145]
                %285 = vst [vmem:[%s153 + $0x208] sm:%s145] %v284
                %v286 = vld [vmem:[%s152 + $0x410] sm:%s145]
                %287 = vst [vmem:[%s153 + $0x210] sm:%s145] %v286
                %v288 = vld [vmem:[%s152 + $0x418] sm:%s145]
                %289 = vst [vmem:[%s153 + $0x218] sm:%s145] %v288
                %v290 = vld [vmem:[%s152 + $0x420] sm:%s145]
                %291 = vst [vmem:[%s153 + $0x220] sm:%s145] %v290
                %v292 = vld [vmem:[%s152 + $0x428] sm:%s145]
                %293 = vst [vmem:[%s153 + $0x228] sm:%s145] %v292
                %v294 = vld [vmem:[%s152 + $0x430] sm:%s145]
                %295 = vst [vmem:[%s153 + $0x230] sm:%s145] %v294
                %v296 = vld [vmem:[%s152 + $0x438] sm:%s145]
                %297 = vst [vmem:[%s153 + $0x238] sm:%s145] %v296
                %v298 = vld [vmem:[%s152 + $0x440] sm:%s145]
                %299 = vst [vmem:[%s153 + $0x240] sm:%s145] %v298
                %v300 = vld [vmem:[%s152 + $0x448] sm:%s145]
                %301 = vst [vmem:[%s153 + $0x248] sm:%s145] %v300
                %v302 = vld [vmem:[%s152 + $0x450] sm:%s145]
                %303 = vst [vmem:[%s153 + $0x250] sm:%s145] %v302
                %v304 = vld [vmem:[%s152 + $0x458] sm:%s145]
                %305 = vst [vmem:[%s153 + $0x258] sm:%s145] %v304
                %v306 = vld [vmem:[%s152 + $0x460] sm:%s145]
                %307 = vst [vmem:[%s153 + $0x260] sm:%s145] %v306
                %v308 = vld [vmem:[%s152 + $0x468] sm:%s145]
                %309 = vst [vmem:[%s153 + $0x268] sm:%s145] %v308
                %v310 = vld [vmem:[%s152 + $0x470] sm:%s145]
                %311 = vst [vmem:[%s153 + $0x270] sm:%s145] %v310
                %v312 = vld [vmem:[%s152 + $0x478] sm:%s145]
                %313 = vst [vmem:[%s153 + $0x278] sm:%s145] %v312
                %v314 = vld [vmem:[%s152 + $0x480] sm:%s145]
                %315 = vst [vmem:[%s153 + $0x280] sm:%s145] %v314
                %v316 = vld [vmem:[%s152 + $0x488] sm:%s145]
                %317 = vst [vmem:[%s153 + $0x288] sm:%s145] %v316
                %v318 = vld [vmem:[%s152 + $0x490] sm:%s145]
                %319 = vst [vmem:[%s153 + $0x290] sm:%s145] %v318
                %v320 = vld [vmem:[%s152 + $0x498] sm:%s145]
                %321 = vst [vmem:[%s153 + $0x298] sm:%s145] %v320
                %v322 = vld [vmem:[%s152 + $0x4a0] sm:%s145]
                %323 = vst [vmem:[%s153 + $0x2a0] sm:%s145] %v322
                %v324 = vld [vmem:[%s152 + $0x4a8] sm:%s145]
                %325 = vst [vmem:[%s153 + $0x2a8] sm:%s145] %v324
                %v326 = vld [vmem:[%s152 + $0x4b0] sm:%s145]
                %327 = vst [vmem:[%s153 + $0x2b0] sm:%s145] %v326
                %v328 = vld [vmem:[%s152 + $0x4b8] sm:%s145]
                %329 = vst [vmem:[%s153 + $0x2b8] sm:%s145] %v328
                %v330 = vld [vmem:[%s152 + $0x4c0] sm:%s145]
                %331 = vst [vmem:[%s153 + $0x2c0] sm:%s145] %v330
                %v332 = vld [vmem:[%s152 + $0x4c8] sm:%s145]
                %333 = vst [vmem:[%s153 + $0x2c8] sm:%s145] %v332
                %v334 = vld [vmem:[%s152 + $0x4d0] sm:%s145]
                %335 = vst [vmem:[%s153 + $0x2d0] sm:%s145] %v334
                %v336 = vld [vmem:[%s152 + $0x4d8] sm:%s145]
                %337 = vst [vmem:[%s153 + $0x2d8] sm:%s145] %v336
                %v338 = vld [vmem:[%s152 + $0x4e0] sm:%s145]
                %339 = vst [vmem:[%s153 + $0x2e0] sm:%s145] %v338
                %v340 = vld [vmem:[%s152 + $0x4e8] sm:%s145]
                %341 = vst [vmem:[%s153 + $0x2e8] sm:%s145] %v340
                %v342 = vld [vmem:[%s152 + $0x4f0] sm:%s145]
                %343 = vst [vmem:[%s153 + $0x2f0] sm:%s145] %v342
                %v344 = vld [vmem:[%s152 + $0x4f8] sm:%s145]
                %345 = vst [vmem:[%s153 + $0x2f8] sm:%s145] %v344
                %v346 = vld [vmem:[%s152 + $0x600] sm:%s145]
                %347 = vst [vmem:[%s153 + $0x300] sm:%s145] %v346
                %v348 = vld [vmem:[%s152 + $0x608] sm:%s145]
                %349 = vst [vmem:[%s153 + $0x308] sm:%s145] %v348
                %v350 = vld [vmem:[%s152 + $0x610] sm:%s145]
                %351 = vst [vmem:[%s153 + $0x310] sm:%s145] %v350
                %v352 = vld [vmem:[%s152 + $0x618] sm:%s145]
                %353 = vst [vmem:[%s153 + $0x318] sm:%s145] %v352
                %v354 = vld [vmem:[%s152 + $0x620] sm:%s145]
                %355 = vst [vmem:[%s153 + $0x320] sm:%s145] %v354
                %v356 = vld [vmem:[%s152 + $0x628] sm:%s145]
                %357 = vst [vmem:[%s153 + $0x328] sm:%s145] %v356
                %v358 = vld [vmem:[%s152 + $0x630] sm:%s145]
                %359 = vst [vmem:[%s153 + $0x330] sm:%s145] %v358
                %v360 = vld [vmem:[%s152 + $0x638] sm:%s145]
                %361 = vst [vmem:[%s153 + $0x338] sm:%s145] %v360
                %v362 = vld [vmem:[%s152 + $0x640] sm:%s145]
                %363 = vst [vmem:[%s153 + $0x340] sm:%s145] %v362
                %v364 = vld [vmem:[%s152 + $0x648] sm:%s145]
                %365 = vst [vmem:[%s153 + $0x348] sm:%s145] %v364
                %v366 = vld [vmem:[%s152 + $0x650] sm:%s145]
                %367 = vst [vmem:[%s153 + $0x350] sm:%s145] %v366
                %v368 = vld [vmem:[%s152 + $0x658] sm:%s145]
                %369 = vst [vmem:[%s153 + $0x358] sm:%s145] %v368
                %v370 = vld [vmem:[%s152 + $0x660] sm:%s145]
                %371 = vst [vmem:[%s153 + $0x360] sm:%s145] %v370
                %v372 = vld [vmem:[%s152 + $0x668] sm:%s145]
                %373 = vst [vmem:[%s153 + $0x368] sm:%s145] %v372
                %v374 = vld [vmem:[%s152 + $0x670] sm:%s145]
                %375 = vst [vmem:[%s153 + $0x370] sm:%s145] %v374
                %v376 = vld [vmem:[%s152 + $0x678] sm:%s145]
                %377 = vst [vmem:[%s153 + $0x378] sm:%s145] %v376
                %v378 = vld [vmem:[%s152 + $0x680] sm:%s145]
                %379 = vst [vmem:[%s153 + $0x380] sm:%s145] %v378
                %v380 = vld [vmem:[%s152 + $0x688] sm:%s145]
                %381 = vst [vmem:[%s153 + $0x388] sm:%s145] %v380
                %v382 = vld [vmem:[%s152 + $0x690] sm:%s145]
                %383 = vst [vmem:[%s153 + $0x390] sm:%s145] %v382
                %v384 = vld [vmem:[%s152 + $0x698] sm:%s145]
                %385 = vst [vmem:[%s153 + $0x398] sm:%s145] %v384
                %v386 = vld [vmem:[%s152 + $0x6a0] sm:%s145]
                %387 = vst [vmem:[%s153 + $0x3a0] sm:%s145] %v386
                %v388 = vld [vmem:[%s152 + $0x6a8] sm:%s145]
                %389 = vst [vmem:[%s153 + $0x3a8] sm:%s145] %v388
                %v390 = vld [vmem:[%s152 + $0x6b0] sm:%s145]
                %391 = vst [vmem:[%s153 + $0x3b0] sm:%s145] %v390
                %v392 = vld [vmem:[%s152 + $0x6b8] sm:%s145]
                %393 = vst [vmem:[%s153 + $0x3b8] sm:%s145] %v392
                %v394 = vld [vmem:[%s152 + $0x6c0] sm:%s145]
                %395 = vst [vmem:[%s153 + $0x3c0] sm:%s145] %v394
                %v396 = vld [vmem:[%s152 + $0x6c8] sm:%s145]
                %397 = vst [vmem:[%s153 + $0x3c8] sm:%s145] %v396
                %v398 = vld [vmem:[%s152 + $0x6d0] sm:%s145]
                %399 = vst [vmem:[%s153 + $0x3d0] sm:%s145] %v398
                %v400 = vld [vmem:[%s152 + $0x6d8] sm:%s145]
                %401 = vst [vmem:[%s153 + $0x3d8] sm:%s145] %v400
                %v402 = vld [vmem:[%s152 + $0x6e0] sm:%s145]
                %403 = vst [vmem:[%s153 + $0x3e0] sm:%s145] %v402
                %v404 = vld [vmem:[%s152 + $0x6e8] sm:%s145]
                %405 = vst [vmem:[%s153 + $0x3e8] sm:%s145] %v404
                %v406 = vld [vmem:[%s152 + $0x6f0] sm:%s145]
                %407 = vst [vmem:[%s153 + $0x3f0] sm:%s145] %v406
                %v408 = vld [vmem:[%s152 + $0x6f8] sm:%s145]
                %409 = vst [vmem:[%s153 + $0x3f8] sm:%s145] %v408
              $region45: #{convnet_mnist_forward.3} parent=39 // loop_footer
                %s151 = sadd.s32 1, %s147
              $region46: #{convnet_mnist_forward.3} parent=39 // loop_footer_branch
                %146 = sbr.rel target = $region42
              $region47: #{convnet_mnist_forward.3} parent=39 // loop_exit
                _
            $region40: #{convnet_mnist_forward.3} parent=31 // pred_fallthru
              _
          $region32: #{convnet_mnist_forward.3} parent=27 // pred_fallthru
            _
          %678 = vnop
        $region28: #{convnet_mnist_forward.3} parent=23 // pred_fallthru
          _
      $region24: #{convnet_mnist_forward.3} parent=5 // pred_fallthru
        _
      %p679 = scmp.le.s32.totalorder 1, %s9
      %p680 = scmp.lt.s32.totalorder %s9, 3
      %p681 = pnand %p679, %p680
      %p682 = pneg %p681
      // Predicated region
      $region63: #{convnet_mnist_forward.3} parent=5 // pred_check
        _
      $region64: #{convnet_mnist_forward.3} parent=5 // pred_check_branch
        %684 = sbr.rel (%p681) target = $region66
      $region65: #{convnet_mnist_forward.3} parent=5 // pred_region
        %s685 = ssub.s32 %s9, 1
        %s686 = sand.u32 %s22, 1
        %s687 = sand.u32 %s22, 1
        %s688 = smul.addr %s687, 1024
        %s689 = scalar_lea.vmem [#allocation2], %s688
        // Predicated region
        $region67: #{convnet_mnist_forward.3} parent=65 // pred_check
          %p690 = pneg %p35
        $region68: #{convnet_mnist_forward.3} parent=65 // pred_check_branch
          %692 = sbr.rel (%p690) target = $region70
        $region69: #{convnet_mnist_forward.3} parent=65 // pred_region
          _
        $region70: #{convnet_mnist_forward.3} parent=65 // pred_fallthru
          _
        %s693 = sand.u32 %s22, 1
        %s694 = sand.u32 %s22, 1
        %s695 = smul.addr %s694, 1024
        %s696 = scalar_lea.vmem [#allocation2], %s695
        %p697 = pneg %p35
        %p698 = pneg %p32
        %p699 = pneg %p56
        %p700 = pneg %p53
        %p701 = pneg %p77
        %p702 = pneg %p74
        %p703 = pneg %p103
        %p704 = pneg %p100
        %s705 = smul.u32 32, %s14
        %p706 = scmp.lt.s32.totalorder %s705, 63
        %s707 = scalar_select %p706, %s705, 63
        %s708 = smul.addr %s707, 8
        %s709 = scalar_lea.vmem %s3, %s708
        %s710 = smul.u32 32, %s14
        %s711 = smul.u32 32, %s14
        %p712 = scmp.lt.s32.totalorder %s711, 63
        %s713 = scalar_select %p712, %s711, 63
        %s714 = smul.addr %s713, 8
        %s715 = scalar_lea.vmem %s3, %s714
        %s716 = smul.u32 32, %s14
        %v717 = vld [vmem:[%s1] sm:$0xff]
        %v718 = vld [vmem:[%s1 + $0x8] sm:$0xff]
        %v719 = vld [vmem:[%s1 + $0x10] sm:$0xff]
        %v720 = vld [vmem:[%s1 + $0x18] sm:$0x1]
        %v721 = vld [vmem:[%s689] sm:$0xff]
        %v722 = vld [vmem:[%s689 + $0x8] sm:$0xff]
        %v723 = vld [vmem:[%s689 + $0x10] sm:$0xff]
        %v724 = vld [vmem:[%s689 + $0x18] sm:$0xff]
        %v725 = vld [vmem:[%s689 + $0x20] sm:$0xff]
        %v726 = vld [vmem:[%s689 + $0x28] sm:$0xff]
        %v727 = vld [vmem:[%s689 + $0x30] sm:$0xff]
        %v728 = vld [vmem:[%s689 + $0x38] sm:$0xff]
        %v729 = vld [vmem:[%s689 + $0x40] sm:$0xff]
        %v730 = vld [vmem:[%s689 + $0x48] sm:$0xff]
        %v731 = vld [vmem:[%s689 + $0x50] sm:$0xff]
        %v732 = vld [vmem:[%s689 + $0x58] sm:$0xff]
        %v733 = vld [vmem:[%s689 + $0x60] sm:$0xff]
        %v734 = vld [vmem:[%s689 + $0x68] sm:$0xff]
        %v735 = vld [vmem:[%s689 + $0x70] sm:$0xff]
        %v736 = vld [vmem:[%s689 + $0x78] sm:$0xff]
        %v737 = vld [vmem:[%s689 + $0x80] sm:$0xff]
        %v738 = vld [vmem:[%s689 + $0x88] sm:$0xff]
        %v739 = vld [vmem:[%s689 + $0x90] sm:$0xff]
        %v740 = vld [vmem:[%s689 + $0x98] sm:$0xff]
        %v741 = vld [vmem:[%s689 + $0xa0] sm:$0xff]
        %v742 = vld [vmem:[%s689 + $0xa8] sm:$0xff]
        %v743 = vld [vmem:[%s689 + $0xb0] sm:$0xff]
        %v744 = vld [vmem:[%s689 + $0xb8] sm:$0xff]
        %v745 = vld [vmem:[%s689 + $0xc0] sm:$0xff]
        %v746 = vld [vmem:[%s689 + $0xc8] sm:$0xff]
        %v747 = vld [vmem:[%s689 + $0xd0] sm:$0xff]
        %v748 = vld [vmem:[%s689 + $0xd8] sm:$0xff]
        %v749 = vld [vmem:[%s689 + $0xe0] sm:$0xff]
        %v750 = vld [vmem:[%s689 + $0xe8] sm:$0xff]
        %v751 = vld [vmem:[%s689 + $0xf0] sm:$0xff]
        %v752 = vld [vmem:[%s689 + $0xf8] sm:$0xff]
        %vm753 = vcmask 203776
        %v755 = vsel %vm753, %v721, 0
        %v758 = vsel %vm753, %v722, 0
        %v761 = vsel %vm753, %v723, 0
        %v764 = vsel %vm753, %v724, 0
        %v767 = vsel %vm753, %v725, 0
        %v770 = vsel %vm753, %v726, 0
        %v773 = vsel %vm753, %v727, 0
        %v776 = vsel %vm753, %v728, 0
        %v779 = vsel %vm753, %v729, 0
        %v782 = vsel %vm753, %v730, 0
        %v785 = vsel %vm753, %v731, 0
        %v788 = vsel %vm753, %v732, 0
        %v791 = vsel %vm753, %v733, 0
        %v794 = vsel %vm753, %v734, 0
        %v797 = vsel %vm753, %v735, 0
        %v800 = vsel %vm753, %v736, 0
        %v803 = vsel %vm753, %v737, 0
        %v806 = vsel %vm753, %v738, 0
        %v809 = vsel %vm753, %v739, 0
        %v812 = vsel %vm753, %v740, 0
        %v815 = vsel %vm753, %v741, 0
        %v818 = vsel %vm753, %v742, 0
        %v821 = vsel %vm753, %v743, 0
        %v824 = vsel %vm753, %v744, 0
        %v827 = vsel %vm753, %v745, 0
        %v830 = vsel %vm753, %v746, 0
        %v833 = vsel %vm753, %v747, 0
        %v836 = vsel %vm753, %v748, 0
        %v839 = vsel %vm753, %v749, 0
        %v842 = vsel %vm753, %v750, 0
        %v845 = vsel %vm753, %v751, 0
        %v848 = vsel %vm753, %v752, 0
        %vm850 = vcmask 1040384
        %v852 = vsel %vm850, %v720, 0
        %854 = vmatprep.subr.mxu0 0.0
        %855 = vmatpush1.msra.mxu0 0.0
        %856 = vmatprep.subr.mxu0 0.0
        %857 = vmatpush1.msra.mxu0 0.0
        %858 = vmatprep.subr.mxu0 0.0
        %859 = vmatpush1.msra.mxu0 0.0
        %860 = vmatprep.subr.mxu0 0.0
        %861 = vmatpush1.msra.mxu0 0.0
        %862 = vmatprep.subr.mxu0 0.0
        %863 = vmatpush1.msra.mxu0 0.0
        %864 = vmatprep.subr.mxu0 0.0
        %865 = vmatpush1.msra.mxu0 0.0
        %866 = vmatprep.subr.mxu0 0.0
        %867 = vmatpush1.msra.mxu0 0.0
        %868 = vmatprep.subr.mxu0 0.0
        %869 = vmatpush1.msra.mxu0 0.0
        %870 = vmatprep.subr.mxu0 0.0
        %871 = vmatpush1.msra.mxu0 0.0
        %872 = vmatprep.subr.mxu0 0.0
        %873 = vmatpush1.msra.mxu0 0.0
        %874 = vmatprep.subr.mxu0 0.0
        %875 = vmatpush1.msra.mxu0 0.0
        %876 = vmatprep.subr.mxu0 0.0
        %877 = vmatpush1.msra.mxu0 0.0
        %878 = vmatprep.subr.mxu0 0.0
        %879 = vmatpush1.msra.mxu0 %v852
        %880 = vmatprep.subr.mxu0 0.0
        %881 = vmatpush1.msra.mxu0 %v719
        %882 = vmatprep.subr.mxu0 0.0
        %883 = vmatpush1.msra.mxu0 %v718
        %884 = vmatprep.subr.mxu0 0.0
        %885 = vmatpush1.msra.mxu0 %v717
        %886 = vmatprep.subr.mxu0 0.0
        %887 = vmatpush2.msra.mxu0 0.0
        %888 = vmatprep.subr.mxu0 0.0
        %889 = vmatpush2.msra.mxu0 0.0
        %890 = vmatprep.subr.mxu0 0.0
        %891 = vmatpush2.msra.mxu0 0.0
        %892 = vmatprep.subr.mxu0 0.0
        %893 = vmatpush2.msra.mxu0 0.0
        %894 = vmatprep.subr.mxu0 0.0
        %895 = vmatpush2.msra.mxu0 0.0
        %896 = vmatprep.subr.mxu0 0.0
        %897 = vmatpush2.msra.mxu0 0.0
        %898 = vmatprep.subr.mxu0 0.0
        %899 = vmatpush2.msra.mxu0 0.0
        %900 = vmatprep.subr.mxu0 0.0
        %901 = vmatpush2.msra.mxu0 0.0
        %902 = vmatprep.subr.mxu0 0.0
        %903 = vmatpush2.msra.mxu0 0.0
        %904 = vmatprep.subr.mxu0 0.0
        %905 = vmatpush2.msra.mxu0 0.0
        %906 = vmatprep.subr.mxu0 0.0
        %907 = vmatpush2.msra.mxu0 0.0
        %908 = vmatprep.subr.mxu0 0.0
        %909 = vmatpush2.msra.mxu0 0.0
        %910 = vmatprep.subr.mxu0 0.0
        %911 = vmatpush2.msra.mxu0 0.0
        %912 = vmatprep.subr.mxu0 0.0
        %913 = vmatpush2.msra.mxu0 0.0
        %914 = vmatprep.subr.mxu0 0.0
        %915 = vmatpush2.msra.mxu0 0.0
        %916 = vmatprep.subr.mxu0 0.0
        %917 = vmatpush2.msra.mxu0 0.0
        %918 = vmatprep.mubr.f32.mxu0 0.0
        %919 = vmatmul.mubr.f32.gmra.mxu0 %v755
        %v920 = vpop.f32.mrf.mxu0
        %v921 = vadd.f32 0.0, %v920
        %v922 = vpop.f32.mrf.mxu0
        %923 = vmatprep.mubr.f32.mxu0 0.0
        %924 = vmatmul.mubr.f32.gmra.mxu0 %v758
        %v925 = vpop.f32.mrf.mxu0
        %v926 = vadd.f32 0.0, %v925
        %v927 = vpop.f32.mrf.mxu0
        %928 = vmatprep.mubr.f32.mxu0 0.0
        %929 = vmatmul.mubr.f32.gmra.mxu0 %v761
        %v930 = vpop.f32.mrf.mxu0
        %v931 = vadd.f32 0.0, %v930
        %v932 = vpop.f32.mrf.mxu0
        %933 = vmatprep.mubr.f32.mxu0 0.0
        %934 = vmatmul.mubr.f32.gmra.mxu0 %v764
        %v935 = vpop.f32.mrf.mxu0
        %v936 = vadd.f32 0.0, %v935
        %v937 = vpop.f32.mrf.mxu0
        %938 = vmatprep.mubr.f32.mxu0 0.0
        %939 = vmatmul.mubr.f32.gmra.mxu0 %v767
        %v940 = vpop.f32.mrf.mxu0
        %v941 = vadd.f32 0.0, %v940
        %v942 = vpop.f32.mrf.mxu0
        %943 = vmatprep.mubr.f32.mxu0 0.0
        %944 = vmatmul.mubr.f32.gmra.mxu0 %v770
        %v945 = vpop.f32.mrf.mxu0
        %v946 = vadd.f32 0.0, %v945
        %v947 = vpop.f32.mrf.mxu0
        %948 = vmatprep.mubr.f32.mxu0 0.0
        %949 = vmatmul.mubr.f32.gmra.mxu0 %v773
        %v950 = vpop.f32.mrf.mxu0
        %v951 = vadd.f32 0.0, %v950
        %v952 = vpop.f32.mrf.mxu0
        %953 = vmatprep.mubr.f32.mxu0 0.0
        %954 = vmatmul.mubr.f32.gmra.mxu0 %v776
        %v955 = vpop.f32.mrf.mxu0
        %v956 = vadd.f32 0.0, %v955
        %v957 = vpop.f32.mrf.mxu0
        %958 = vmatprep.mubr.f32.mxu0 0.0
        %959 = vmatmul.mubr.f32.gmra.mxu0 %v779
        %v960 = vpop.f32.mrf.mxu0
        %v961 = vadd.f32 0.0, %v960
        %v962 = vpop.f32.mrf.mxu0
        %963 = vmatprep.mubr.f32.mxu0 0.0
        %964 = vmatmul.mubr.f32.gmra.mxu0 %v782
        %v965 = vpop.f32.mrf.mxu0
        %v966 = vadd.f32 0.0, %v965
        %v967 = vpop.f32.mrf.mxu0
        %968 = vmatprep.mubr.f32.mxu0 0.0
        %969 = vmatmul.mubr.f32.gmra.mxu0 %v785
        %v970 = vpop.f32.mrf.mxu0
        %v971 = vadd.f32 0.0, %v970
        %v972 = vpop.f32.mrf.mxu0
        %973 = vmatprep.mubr.f32.mxu0 0.0
        %974 = vmatmul.mubr.f32.gmra.mxu0 %v788
        %v975 = vpop.f32.mrf.mxu0
        %v976 = vadd.f32 0.0, %v975
        %v977 = vpop.f32.mrf.mxu0
        %978 = vmatprep.mubr.f32.mxu0 0.0
        %979 = vmatmul.mubr.f32.gmra.mxu0 %v791
        %v980 = vpop.f32.mrf.mxu0
        %v981 = vadd.f32 0.0, %v980
        %v982 = vpop.f32.mrf.mxu0
        %983 = vmatprep.mubr.f32.mxu0 0.0
        %984 = vmatmul.mubr.f32.gmra.mxu0 %v794
        %v985 = vpop.f32.mrf.mxu0
        %v986 = vadd.f32 0.0, %v985
        %v987 = vpop.f32.mrf.mxu0
        %988 = vmatprep.mubr.f32.mxu0 0.0
        %989 = vmatmul.mubr.f32.gmra.mxu0 %v797
        %v990 = vpop.f32.mrf.mxu0
        %v991 = vadd.f32 0.0, %v990
        %v992 = vpop.f32.mrf.mxu0
        %993 = vmatprep.mubr.f32.mxu0 0.0
        %994 = vmatmul.mubr.f32.gmra.mxu0 %v800
        %v995 = vpop.f32.mrf.mxu0
        %v996 = vadd.f32 0.0, %v995
        %v997 = vpop.f32.mrf.mxu0
        %998 = vmatprep.mubr.f32.mxu0 0.0
        %999 = vmatmul.mubr.f32.gmra.mxu0 %v803
        %v1000 = vpop.f32.mrf.mxu0
        %v1001 = vadd.f32 0.0, %v1000
        %v1002 = vpop.f32.mrf.mxu0
        %1003 = vmatprep.mubr.f32.mxu0 0.0
        %1004 = vmatmul.mubr.f32.gmra.mxu0 %v806
        %v1005 = vpop.f32.mrf.mxu0
        %v1006 = vadd.f32 0.0, %v1005
        %v1007 = vpop.f32.mrf.mxu0
        %1008 = vmatprep.mubr.f32.mxu0 0.0
        %1009 = vmatmul.mubr.f32.gmra.mxu0 %v809
        %v1010 = vpop.f32.mrf.mxu0
        %v1011 = vadd.f32 0.0, %v1010
        %v1012 = vpop.f32.mrf.mxu0
        %1013 = vmatprep.mubr.f32.mxu0 0.0
        %1014 = vmatmul.mubr.f32.gmra.mxu0 %v812
        %v1015 = vpop.f32.mrf.mxu0
        %v1016 = vadd.f32 0.0, %v1015
        %v1017 = vpop.f32.mrf.mxu0
        %1018 = vmatprep.mubr.f32.mxu0 0.0
        %1019 = vmatmul.mubr.f32.gmra.mxu0 %v815
        %v1020 = vpop.f32.mrf.mxu0
        %v1021 = vadd.f32 0.0, %v1020
        %v1022 = vpop.f32.mrf.mxu0
        %1023 = vmatprep.mubr.f32.mxu0 0.0
        %1024 = vmatmul.mubr.f32.gmra.mxu0 %v818
        %v1025 = vpop.f32.mrf.mxu0
        %v1026 = vadd.f32 0.0, %v1025
        %v1027 = vpop.f32.mrf.mxu0
        %1028 = vmatprep.mubr.f32.mxu0 0.0
        %1029 = vmatmul.mubr.f32.gmra.mxu0 %v821
        %v1030 = vpop.f32.mrf.mxu0
        %v1031 = vadd.f32 0.0, %v1030
        %v1032 = vpop.f32.mrf.mxu0
        %1033 = vmatprep.mubr.f32.mxu0 0.0
        %1034 = vmatmul.mubr.f32.gmra.mxu0 %v824
        %v1035 = vpop.f32.mrf.mxu0
        %v1036 = vadd.f32 0.0, %v1035
        %v1037 = vpop.f32.mrf.mxu0
        %1038 = vmatprep.mubr.f32.mxu0 0.0
        %1039 = vmatmul.mubr.f32.gmra.mxu0 %v827
        %v1040 = vpop.f32.mrf.mxu0
        %v1041 = vadd.f32 0.0, %v1040
        %v1042 = vpop.f32.mrf.mxu0
        %1043 = vmatprep.mubr.f32.mxu0 0.0
        %1044 = vmatmul.mubr.f32.gmra.mxu0 %v830
        %v1045 = vpop.f32.mrf.mxu0
        %v1046 = vadd.f32 0.0, %v1045
        %v1047 = vpop.f32.mrf.mxu0
        %1048 = vmatprep.mubr.f32.mxu0 0.0
        %1049 = vmatmul.mubr.f32.gmra.mxu0 %v833
        %v1050 = vpop.f32.mrf.mxu0
        %v1051 = vadd.f32 0.0, %v1050
        %v1052 = vpop.f32.mrf.mxu0
        %1053 = vmatprep.mubr.f32.mxu0 0.0
        %1054 = vmatmul.mubr.f32.gmra.mxu0 %v836
        %v1055 = vpop.f32.mrf.mxu0
        %v1056 = vadd.f32 0.0, %v1055
        %v1057 = vpop.f32.mrf.mxu0
        %1058 = vmatprep.mubr.f32.mxu0 0.0
        %1059 = vmatmul.mubr.f32.gmra.mxu0 %v839
        %v1060 = vpop.f32.mrf.mxu0
        %v1061 = vadd.f32 0.0, %v1060
        %v1062 = vpop.f32.mrf.mxu0
        %1063 = vmatprep.mubr.f32.mxu0 0.0
        %1064 = vmatmul.mubr.f32.gmra.mxu0 %v842
        %v1065 = vpop.f32.mrf.mxu0
        %v1066 = vadd.f32 0.0, %v1065
        %v1067 = vpop.f32.mrf.mxu0
        %1068 = vmatprep.mubr.f32.mxu0 0.0
        %1069 = vmatmul.mubr.f32.gmra.mxu0 %v845
        %v1070 = vpop.f32.mrf.mxu0
        %v1071 = vadd.f32 0.0, %v1070
        %v1072 = vpop.f32.mrf.mxu0
        %1073 = vmatprep.mubr.f32.mxu0 0.0
        %1074 = vmatmul.mubr.f32.gmra.mxu0 %v848
        %v1075 = vpop.f32.mrf.mxu0
        %v1076 = vadd.f32 0.0, %v1075
        %v1077 = vpop.f32.mrf.mxu0
        %1078 = vdwg.mxu0
        %s1079 = scalar_lea.vmem %s689, 256 [#allocation2]
        %v1080 = vld [vmem:[%s1079] sm:$0xff]
        %v1081 = vld [vmem:[%s1079 + $0x8] sm:$0xff]
        %v1082 = vld [vmem:[%s1079 + $0x10] sm:$0xff]
        %v1083 = vld [vmem:[%s1079 + $0x18] sm:$0xff]
        %v1084 = vld [vmem:[%s1079 + $0x20] sm:$0xff]
        %v1085 = vld [vmem:[%s1079 + $0x28] sm:$0xff]
        %v1086 = vld [vmem:[%s1079 + $0x30] sm:$0xff]
        %v1087 = vld [vmem:[%s1079 + $0x38] sm:$0xff]
        %v1088 = vld [vmem:[%s1079 + $0x40] sm:$0xff]
        %v1089 = vld [vmem:[%s1079 + $0x48] sm:$0xff]
        %v1090 = vld [vmem:[%s1079 + $0x50] sm:$0xff]
        %v1091 = vld [vmem:[%s1079 + $0x58] sm:$0xff]
        %v1092 = vld [vmem:[%s1079 + $0x60] sm:$0xff]
        %v1093 = vld [vmem:[%s1079 + $0x68] sm:$0xff]
        %v1094 = vld [vmem:[%s1079 + $0x70] sm:$0xff]
        %v1095 = vld [vmem:[%s1079 + $0x78] sm:$0xff]
        %v1096 = vld [vmem:[%s1079 + $0x80] sm:$0xff]
        %v1097 = vld [vmem:[%s1079 + $0x88] sm:$0xff]
        %v1098 = vld [vmem:[%s1079 + $0x90] sm:$0xff]
        %v1099 = vld [vmem:[%s1079 + $0x98] sm:$0xff]
        %v1100 = vld [vmem:[%s1079 + $0xa0] sm:$0xff]
        %v1101 = vld [vmem:[%s1079 + $0xa8] sm:$0xff]
        %v1102 = vld [vmem:[%s1079 + $0xb0] sm:$0xff]
        %v1103 = vld [vmem:[%s1079 + $0xb8] sm:$0xff]
        %v1104 = vld [vmem:[%s1079 + $0xc0] sm:$0xff]
        %v1105 = vld [vmem:[%s1079 + $0xc8] sm:$0xff]
        %v1106 = vld [vmem:[%s1079 + $0xd0] sm:$0xff]
        %v1107 = vld [vmem:[%s1079 + $0xd8] sm:$0xff]
        %v1108 = vld [vmem:[%s1079 + $0xe0] sm:$0xff]
        %v1109 = vld [vmem:[%s1079 + $0xe8] sm:$0xff]
        %v1110 = vld [vmem:[%s1079 + $0xf0] sm:$0xff]
        %v1111 = vld [vmem:[%s1079 + $0xf8] sm:$0xff]
        %v1113 = vsel %vm753, %v1080, 0
        %v1116 = vsel %vm753, %v1081, 0
        %v1119 = vsel %vm753, %v1082, 0
        %v1122 = vsel %vm753, %v1083, 0
        %v1125 = vsel %vm753, %v1084, 0
        %v1128 = vsel %vm753, %v1085, 0
        %v1131 = vsel %vm753, %v1086, 0
        %v1134 = vsel %vm753, %v1087, 0
        %v1137 = vsel %vm753, %v1088, 0
        %v1140 = vsel %vm753, %v1089, 0
        %v1143 = vsel %vm753, %v1090, 0
        %v1146 = vsel %vm753, %v1091, 0
        %v1149 = vsel %vm753, %v1092, 0
        %v1152 = vsel %vm753, %v1093, 0
        %v1155 = vsel %vm753, %v1094, 0
        %v1158 = vsel %vm753, %v1095, 0
        %v1161 = vsel %vm753, %v1096, 0
        %v1164 = vsel %vm753, %v1097, 0
        %v1167 = vsel %vm753, %v1098, 0
        %v1170 = vsel %vm753, %v1099, 0
        %v1173 = vsel %vm753, %v1100, 0
        %v1176 = vsel %vm753, %v1101, 0
        %v1179 = vsel %vm753, %v1102, 0
        %v1182 = vsel %vm753, %v1103, 0
        %v1185 = vsel %vm753, %v1104, 0
        %v1188 = vsel %vm753, %v1105, 0
        %v1191 = vsel %vm753, %v1106, 0
        %v1194 = vsel %vm753, %v1107, 0
        %v1197 = vsel %vm753, %v1108, 0
        %v1200 = vsel %vm753, %v1109, 0
        %v1203 = vsel %vm753, %v1110, 0
        %v1206 = vsel %vm753, %v1111, 0
        %1208 = vmatprep.subr.mxu0 0.0
        %1209 = vmatpush1.msra.mxu0 0.0
        %1210 = vmatprep.subr.mxu0 0.0
        %1211 = vmatpush1.msra.mxu0 0.0
        %1212 = vmatprep.subr.mxu0 0.0
        %1213 = vmatpush1.msra.mxu0 0.0
        %1214 = vmatprep.subr.mxu0 0.0
        %1215 = vmatpush1.msra.mxu0 0.0
        %1216 = vmatprep.subr.mxu0 0.0
        %1217 = vmatpush1.msra.mxu0 0.0
        %1218 = vmatprep.subr.mxu0 0.0
        %1219 = vmatpush1.msra.mxu0 0.0
        %1220 = vmatprep.subr.mxu0 0.0
        %1221 = vmatpush1.msra.mxu0 0.0
        %1222 = vmatprep.subr.mxu0 0.0
        %1223 = vmatpush1.msra.mxu0 0.0
        %1224 = vmatprep.subr.mxu0 0.0
        %1225 = vmatpush1.msra.mxu0 0.0
        %1226 = vmatprep.subr.mxu0 0.0
        %1227 = vmatpush1.msra.mxu0 0.0
        %1228 = vmatprep.subr.mxu0 0.0
        %1229 = vmatpush1.msra.mxu0 0.0
        %1230 = vmatprep.subr.mxu0 0.0
        %1231 = vmatpush1.msra.mxu0 0.0
        %1232 = vmatprep.subr.mxu0 0.0
        %1233 = vmatpush1.msra.mxu0 %v852
        %1234 = vmatprep.subr.mxu0 0.0
        %1235 = vmatpush1.msra.mxu0 %v719
        %1236 = vmatprep.subr.mxu0 0.0
        %1237 = vmatpush1.msra.mxu0 %v718
        %1238 = vmatprep.subr.mxu0 0.0
        %1239 = vmatpush1.msra.mxu0 %v717
        %1240 = vmatprep.subr.mxu0 0.0
        %1241 = vmatpush2.msra.mxu0 0.0
        %1242 = vmatprep.subr.mxu0 0.0
        %1243 = vmatpush2.msra.mxu0 0.0
        %1244 = vmatprep.subr.mxu0 0.0
        %1245 = vmatpush2.msra.mxu0 0.0
        %1246 = vmatprep.subr.mxu0 0.0
        %1247 = vmatpush2.msra.mxu0 0.0
        %1248 = vmatprep.subr.mxu0 0.0
        %1249 = vmatpush2.msra.mxu0 0.0
        %1250 = vmatprep.subr.mxu0 0.0
        %1251 = vmatpush2.msra.mxu0 0.0
        %1252 = vmatprep.subr.mxu0 0.0
        %1253 = vmatpush2.msra.mxu0 0.0
        %1254 = vmatprep.subr.mxu0 0.0
        %1255 = vmatpush2.msra.mxu0 0.0
        %1256 = vmatprep.subr.mxu0 0.0
        %1257 = vmatpush2.msra.mxu0 0.0
        %1258 = vmatprep.subr.mxu0 0.0
        %1259 = vmatpush2.msra.mxu0 0.0
        %1260 = vmatprep.subr.mxu0 0.0
        %1261 = vmatpush2.msra.mxu0 0.0
        %1262 = vmatprep.subr.mxu0 0.0
        %1263 = vmatpush2.msra.mxu0 0.0
        %1264 = vmatprep.subr.mxu0 0.0
        %1265 = vmatpush2.msra.mxu0 0.0
        %1266 = vmatprep.subr.mxu0 0.0
        %1267 = vmatpush2.msra.mxu0 0.0
        %1268 = vmatprep.subr.mxu0 0.0
        %1269 = vmatpush2.msra.mxu0 0.0
        %1270 = vmatprep.subr.mxu0 0.0
        %1271 = vmatpush2.msra.mxu0 0.0
        %1272 = vmatprep.mubr.f32.mxu0 0.0
        %1273 = vmatmul.mubr.f32.gmra.mxu0 %v1113
        %v1274 = vpop.f32.mrf.mxu0
        %v1275 = vadd.f32 0.0, %v1274
        %v1276 = vpop.f32.mrf.mxu0
        %1277 = vmatprep.mubr.f32.mxu0 0.0
        %1278 = vmatmul.mubr.f32.gmra.mxu0 %v1116
        %v1279 = vpop.f32.mrf.mxu0
        %v1280 = vadd.f32 0.0, %v1279
        %v1281 = vpop.f32.mrf.mxu0
        %1282 = vmatprep.mubr.f32.mxu0 0.0
        %1283 = vmatmul.mubr.f32.gmra.mxu0 %v1119
        %v1284 = vpop.f32.mrf.mxu0
        %v1285 = vadd.f32 0.0, %v1284
        %v1286 = vpop.f32.mrf.mxu0
        %1287 = vmatprep.mubr.f32.mxu0 0.0
        %1288 = vmatmul.mubr.f32.gmra.mxu0 %v1122
        %v1289 = vpop.f32.mrf.mxu0
        %v1290 = vadd.f32 0.0, %v1289
        %v1291 = vpop.f32.mrf.mxu0
        %1292 = vmatprep.mubr.f32.mxu0 0.0
        %1293 = vmatmul.mubr.f32.gmra.mxu0 %v1125
        %v1294 = vpop.f32.mrf.mxu0
        %v1295 = vadd.f32 0.0, %v1294
        %v1296 = vpop.f32.mrf.mxu0
        %1297 = vmatprep.mubr.f32.mxu0 0.0
        %1298 = vmatmul.mubr.f32.gmra.mxu0 %v1128
        %v1299 = vpop.f32.mrf.mxu0
        %v1300 = vadd.f32 0.0, %v1299
        %v1301 = vpop.f32.mrf.mxu0
        %1302 = vmatprep.mubr.f32.mxu0 0.0
        %1303 = vmatmul.mubr.f32.gmra.mxu0 %v1131
        %v1304 = vpop.f32.mrf.mxu0
        %v1305 = vadd.f32 0.0, %v1304
        %v1306 = vpop.f32.mrf.mxu0
        %1307 = vmatprep.mubr.f32.mxu0 0.0
        %1308 = vmatmul.mubr.f32.gmra.mxu0 %v1134
        %v1309 = vpop.f32.mrf.mxu0
        %v1310 = vadd.f32 0.0, %v1309
        %v1311 = vpop.f32.mrf.mxu0
        %1312 = vmatprep.mubr.f32.mxu0 0.0
        %1313 = vmatmul.mubr.f32.gmra.mxu0 %v1137
        %v1314 = vpop.f32.mrf.mxu0
        %v1315 = vadd.f32 0.0, %v1314
        %v1316 = vpop.f32.mrf.mxu0
        %1317 = vmatprep.mubr.f32.mxu0 0.0
        %1318 = vmatmul.mubr.f32.gmra.mxu0 %v1140
        %v1319 = vpop.f32.mrf.mxu0
        %v1320 = vadd.f32 0.0, %v1319
        %v1321 = vpop.f32.mrf.mxu0
        %1322 = vmatprep.mubr.f32.mxu0 0.0
        %1323 = vmatmul.mubr.f32.gmra.mxu0 %v1143
        %v1324 = vpop.f32.mrf.mxu0
        %v1325 = vadd.f32 0.0, %v1324
        %v1326 = vpop.f32.mrf.mxu0
        %1327 = vmatprep.mubr.f32.mxu0 0.0
        %1328 = vmatmul.mubr.f32.gmra.mxu0 %v1146
        %v1329 = vpop.f32.mrf.mxu0
        %v1330 = vadd.f32 0.0, %v1329
        %v1331 = vpop.f32.mrf.mxu0
        %1332 = vmatprep.mubr.f32.mxu0 0.0
        %1333 = vmatmul.mubr.f32.gmra.mxu0 %v1149
        %v1334 = vpop.f32.mrf.mxu0
        %v1335 = vadd.f32 0.0, %v1334
        %v1336 = vpop.f32.mrf.mxu0
        %1337 = vmatprep.mubr.f32.mxu0 0.0
        %1338 = vmatmul.mubr.f32.gmra.mxu0 %v1152
        %v1339 = vpop.f32.mrf.mxu0
        %v1340 = vadd.f32 0.0, %v1339
        %v1341 = vpop.f32.mrf.mxu0
        %1342 = vmatprep.mubr.f32.mxu0 0.0
        %1343 = vmatmul.mubr.f32.gmra.mxu0 %v1155
        %v1344 = vpop.f32.mrf.mxu0
        %v1345 = vadd.f32 0.0, %v1344
        %v1346 = vpop.f32.mrf.mxu0
        %1347 = vmatprep.mubr.f32.mxu0 0.0
        %1348 = vmatmul.mubr.f32.gmra.mxu0 %v1158
        %v1349 = vpop.f32.mrf.mxu0
        %v1350 = vadd.f32 0.0, %v1349
        %v1351 = vpop.f32.mrf.mxu0
        %1352 = vmatprep.mubr.f32.mxu0 0.0
        %1353 = vmatmul.mubr.f32.gmra.mxu0 %v1161
        %v1354 = vpop.f32.mrf.mxu0
        %v1355 = vadd.f32 0.0, %v1354
        %v1356 = vpop.f32.mrf.mxu0
        %1357 = vmatprep.mubr.f32.mxu0 0.0
        %1358 = vmatmul.mubr.f32.gmra.mxu0 %v1164
        %v1359 = vpop.f32.mrf.mxu0
        %v1360 = vadd.f32 0.0, %v1359
        %v1361 = vpop.f32.mrf.mxu0
        %1362 = vmatprep.mubr.f32.mxu0 0.0
        %1363 = vmatmul.mubr.f32.gmra.mxu0 %v1167
        %v1364 = vpop.f32.mrf.mxu0
        %v1365 = vadd.f32 0.0, %v1364
        %v1366 = vpop.f32.mrf.mxu0
        %1367 = vmatprep.mubr.f32.mxu0 0.0
        %1368 = vmatmul.mubr.f32.gmra.mxu0 %v1170
        %v1369 = vpop.f32.mrf.mxu0
        %v1370 = vadd.f32 0.0, %v1369
        %v1371 = vpop.f32.mrf.mxu0
        %1372 = vmatprep.mubr.f32.mxu0 0.0
        %1373 = vmatmul.mubr.f32.gmra.mxu0 %v1173
        %v1374 = vpop.f32.mrf.mxu0
        %v1375 = vadd.f32 0.0, %v1374
        %v1376 = vpop.f32.mrf.mxu0
        %1377 = vmatprep.mubr.f32.mxu0 0.0
        %1378 = vmatmul.mubr.f32.gmra.mxu0 %v1176
        %v1379 = vpop.f32.mrf.mxu0
        %v1380 = vadd.f32 0.0, %v1379
        %v1381 = vpop.f32.mrf.mxu0
        %1382 = vmatprep.mubr.f32.mxu0 0.0
        %1383 = vmatmul.mubr.f32.gmra.mxu0 %v1179
        %v1384 = vpop.f32.mrf.mxu0
        %v1385 = vadd.f32 0.0, %v1384
        %v1386 = vpop.f32.mrf.mxu0
        %1387 = vmatprep.mubr.f32.mxu0 0.0
        %1388 = vmatmul.mubr.f32.gmra.mxu0 %v1182
        %v1389 = vpop.f32.mrf.mxu0
        %v1390 = vadd.f32 0.0, %v1389
        %v1391 = vpop.f32.mrf.mxu0
        %1392 = vmatprep.mubr.f32.mxu0 0.0
        %1393 = vmatmul.mubr.f32.gmra.mxu0 %v1185
        %v1394 = vpop.f32.mrf.mxu0
        %v1395 = vadd.f32 0.0, %v1394
        %v1396 = vpop.f32.mrf.mxu0
        %1397 = vmatprep.mubr.f32.mxu0 0.0
        %1398 = vmatmul.mubr.f32.gmra.mxu0 %v1188
        %v1399 = vpop.f32.mrf.mxu0
        %v1400 = vadd.f32 0.0, %v1399
        %v1401 = vpop.f32.mrf.mxu0
        %1402 = vmatprep.mubr.f32.mxu0 0.0
        %1403 = vmatmul.mubr.f32.gmra.mxu0 %v1191
        %v1404 = vpop.f32.mrf.mxu0
        %v1405 = vadd.f32 0.0, %v1404
        %v1406 = vpop.f32.mrf.mxu0
        %1407 = vmatprep.mubr.f32.mxu0 0.0
        %1408 = vmatmul.mubr.f32.gmra.mxu0 %v1194
        %v1409 = vpop.f32.mrf.mxu0
        %v1410 = vadd.f32 0.0, %v1409
        %v1411 = vpop.f32.mrf.mxu0
        %1412 = vmatprep.mubr.f32.mxu0 0.0
        %1413 = vmatmul.mubr.f32.gmra.mxu0 %v1197
        %v1414 = vpop.f32.mrf.mxu0
        %v1415 = vadd.f32 0.0, %v1414
        %v1416 = vpop.f32.mrf.mxu0
        %1417 = vmatprep.mubr.f32.mxu0 0.0
        %1418 = vmatmul.mubr.f32.gmra.mxu0 %v1200
        %v1419 = vpop.f32.mrf.mxu0
        %v1420 = vadd.f32 0.0, %v1419
        %v1421 = vpop.f32.mrf.mxu0
        %1422 = vmatprep.mubr.f32.mxu0 0.0
        %1423 = vmatmul.mubr.f32.gmra.mxu0 %v1203
        %v1424 = vpop.f32.mrf.mxu0
        %v1425 = vadd.f32 0.0, %v1424
        %v1426 = vpop.f32.mrf.mxu0
        %1427 = vmatprep.mubr.f32.mxu0 0.0
        %1428 = vmatmul.mubr.f32.gmra.mxu0 %v1206
        %v1429 = vpop.f32.mrf.mxu0
        %v1430 = vadd.f32 0.0, %v1429
        %v1431 = vpop.f32.mrf.mxu0
        %1432 = vdwg.mxu0
        %v1433 = vmax.f32 %v921, %v1275
        %v1434 = vmax.f32 %v926, %v1280
        %v1435 = vmax.f32 %v931, %v1285
        %v1436 = vmax.f32 %v936, %v1290
        %v1437 = vmax.f32 %v941, %v1295
        %v1438 = vmax.f32 %v946, %v1300
        %v1439 = vmax.f32 %v951, %v1305
        %v1440 = vmax.f32 %v956, %v1310
        %v1441 = vmax.f32 %v961, %v1315
        %v1442 = vmax.f32 %v966, %v1320
        %v1443 = vmax.f32 %v971, %v1325
        %v1444 = vmax.f32 %v976, %v1330
        %v1445 = vmax.f32 %v981, %v1335
        %v1446 = vmax.f32 %v986, %v1340
        %v1447 = vmax.f32 %v991, %v1345
        %v1448 = vmax.f32 %v996, %v1350
        %v1449 = vmax.f32 %v1001, %v1355
        %v1450 = vmax.f32 %v1006, %v1360
        %v1451 = vmax.f32 %v1011, %v1365
        %v1452 = vmax.f32 %v1016, %v1370
        %v1453 = vmax.f32 %v1021, %v1375
        %v1454 = vmax.f32 %v1026, %v1380
        %v1455 = vmax.f32 %v1031, %v1385
        %v1456 = vmax.f32 %v1036, %v1390
        %v1457 = vmax.f32 %v1041, %v1395
        %v1458 = vmax.f32 %v1046, %v1400
        %v1459 = vmax.f32 %v1051, %v1405
        %v1460 = vmax.f32 %v1056, %v1410
        %v1461 = vmax.f32 %v1061, %v1415
        %v1462 = vmax.f32 %v1066, %v1420
        %v1463 = vmax.f32 %v1071, %v1425
        %v1464 = vmax.f32 %v1076, %v1430
        %s1465 = scalar_lea.vmem %s689, 512 [#allocation2]
        %v1466 = vld [vmem:[%s1465] sm:$0xff]
        %v1467 = vld [vmem:[%s1465 + $0x8] sm:$0xff]
        %v1468 = vld [vmem:[%s1465 + $0x10] sm:$0xff]
        %v1469 = vld [vmem:[%s1465 + $0x18] sm:$0xff]
        %v1470 = vld [vmem:[%s1465 + $0x20] sm:$0xff]
        %v1471 = vld [vmem:[%s1465 + $0x28] sm:$0xff]
        %v1472 = vld [vmem:[%s1465 + $0x30] sm:$0xff]
        %v1473 = vld [vmem:[%s1465 + $0x38] sm:$0xff]
        %v1474 = vld [vmem:[%s1465 + $0x40] sm:$0xff]
        %v1475 = vld [vmem:[%s1465 + $0x48] sm:$0xff]
        %v1476 = vld [vmem:[%s1465 + $0x50] sm:$0xff]
        %v1477 = vld [vmem:[%s1465 + $0x58] sm:$0xff]
        %v1478 = vld [vmem:[%s1465 + $0x60] sm:$0xff]
        %v1479 = vld [vmem:[%s1465 + $0x68] sm:$0xff]
        %v1480 = vld [vmem:[%s1465 + $0x70] sm:$0xff]
        %v1481 = vld [vmem:[%s1465 + $0x78] sm:$0xff]
        %v1482 = vld [vmem:[%s1465 + $0x80] sm:$0xff]
        %v1483 = vld [vmem:[%s1465 + $0x88] sm:$0xff]
        %v1484 = vld [vmem:[%s1465 + $0x90] sm:$0xff]
        %v1485 = vld [vmem:[%s1465 + $0x98] sm:$0xff]
        %v1486 = vld [vmem:[%s1465 + $0xa0] sm:$0xff]
        %v1487 = vld [vmem:[%s1465 + $0xa8] sm:$0xff]
        %v1488 = vld [vmem:[%s1465 + $0xb0] sm:$0xff]
        %v1489 = vld [vmem:[%s1465 + $0xb8] sm:$0xff]
        %v1490 = vld [vmem:[%s1465 + $0xc0] sm:$0xff]
        %v1491 = vld [vmem:[%s1465 + $0xc8] sm:$0xff]
        %v1492 = vld [vmem:[%s1465 + $0xd0] sm:$0xff]
        %v1493 = vld [vmem:[%s1465 + $0xd8] sm:$0xff]
        %v1494 = vld [vmem:[%s1465 + $0xe0] sm:$0xff]
        %v1495 = vld [vmem:[%s1465 + $0xe8] sm:$0xff]
        %v1496 = vld [vmem:[%s1465 + $0xf0] sm:$0xff]
        %v1497 = vld [vmem:[%s1465 + $0xf8] sm:$0xff]
        %v1499 = vsel %vm753, %v1466, 0
        %v1502 = vsel %vm753, %v1467, 0
        %v1505 = vsel %vm753, %v1468, 0
        %v1508 = vsel %vm753, %v1469, 0
        %v1511 = vsel %vm753, %v1470, 0
        %v1514 = vsel %vm753, %v1471, 0
        %v1517 = vsel %vm753, %v1472, 0
        %v1520 = vsel %vm753, %v1473, 0
        %v1523 = vsel %vm753, %v1474, 0
        %v1526 = vsel %vm753, %v1475, 0
        %v1529 = vsel %vm753, %v1476, 0
        %v1532 = vsel %vm753, %v1477, 0
        %v1535 = vsel %vm753, %v1478, 0
        %v1538 = vsel %vm753, %v1479, 0
        %v1541 = vsel %vm753, %v1480, 0
        %v1544 = vsel %vm753, %v1481, 0
        %v1547 = vsel %vm753, %v1482, 0
        %v1550 = vsel %vm753, %v1483, 0
        %v1553 = vsel %vm753, %v1484, 0
        %v1556 = vsel %vm753, %v1485, 0
        %v1559 = vsel %vm753, %v1486, 0
        %v1562 = vsel %vm753, %v1487, 0
        %v1565 = vsel %vm753, %v1488, 0
        %v1568 = vsel %vm753, %v1489, 0
        %v1571 = vsel %vm753, %v1490, 0
        %v1574 = vsel %vm753, %v1491, 0
        %v1577 = vsel %vm753, %v1492, 0
        %v1580 = vsel %vm753, %v1493, 0
        %v1583 = vsel %vm753, %v1494, 0
        %v1586 = vsel %vm753, %v1495, 0
        %v1589 = vsel %vm753, %v1496, 0
        %v1592 = vsel %vm753, %v1497, 0
        %1594 = vmatprep.subr.mxu0 0.0
        %1595 = vmatpush1.msra.mxu0 0.0
        %1596 = vmatprep.subr.mxu0 0.0
        %1597 = vmatpush1.msra.mxu0 0.0
        %1598 = vmatprep.subr.mxu0 0.0
        %1599 = vmatpush1.msra.mxu0 0.0
        %1600 = vmatprep.subr.mxu0 0.0
        %1601 = vmatpush1.msra.mxu0 0.0
        %1602 = vmatprep.subr.mxu0 0.0
        %1603 = vmatpush1.msra.mxu0 0.0
        %1604 = vmatprep.subr.mxu0 0.0
        %1605 = vmatpush1.msra.mxu0 0.0
        %1606 = vmatprep.subr.mxu0 0.0
        %1607 = vmatpush1.msra.mxu0 0.0
        %1608 = vmatprep.subr.mxu0 0.0
        %1609 = vmatpush1.msra.mxu0 0.0
        %1610 = vmatprep.subr.mxu0 0.0
        %1611 = vmatpush1.msra.mxu0 0.0
        %1612 = vmatprep.subr.mxu0 0.0
        %1613 = vmatpush1.msra.mxu0 0.0
        %1614 = vmatprep.subr.mxu0 0.0
        %1615 = vmatpush1.msra.mxu0 0.0
        %1616 = vmatprep.subr.mxu0 0.0
        %1617 = vmatpush1.msra.mxu0 0.0
        %1618 = vmatprep.subr.mxu0 0.0
        %1619 = vmatpush1.msra.mxu0 %v852
        %1620 = vmatprep.subr.mxu0 0.0
        %1621 = vmatpush1.msra.mxu0 %v719
        %1622 = vmatprep.subr.mxu0 0.0
        %1623 = vmatpush1.msra.mxu0 %v718
        %1624 = vmatprep.subr.mxu0 0.0
        %1625 = vmatpush1.msra.mxu0 %v717
        %1626 = vmatprep.subr.mxu0 0.0
        %1627 = vmatpush2.msra.mxu0 0.0
        %1628 = vmatprep.subr.mxu0 0.0
        %1629 = vmatpush2.msra.mxu0 0.0
        %1630 = vmatprep.subr.mxu0 0.0
        %1631 = vmatpush2.msra.mxu0 0.0
        %1632 = vmatprep.subr.mxu0 0.0
        %1633 = vmatpush2.msra.mxu0 0.0
        %1634 = vmatprep.subr.mxu0 0.0
        %1635 = vmatpush2.msra.mxu0 0.0
        %1636 = vmatprep.subr.mxu0 0.0
        %1637 = vmatpush2.msra.mxu0 0.0
        %1638 = vmatprep.subr.mxu0 0.0
        %1639 = vmatpush2.msra.mxu0 0.0
        %1640 = vmatprep.subr.mxu0 0.0
        %1641 = vmatpush2.msra.mxu0 0.0
        %1642 = vmatprep.subr.mxu0 0.0
        %1643 = vmatpush2.msra.mxu0 0.0
        %1644 = vmatprep.subr.mxu0 0.0
        %1645 = vmatpush2.msra.mxu0 0.0
        %1646 = vmatprep.subr.mxu0 0.0
        %1647 = vmatpush2.msra.mxu0 0.0
        %1648 = vmatprep.subr.mxu0 0.0
        %1649 = vmatpush2.msra.mxu0 0.0
        %1650 = vmatprep.subr.mxu0 0.0
        %1651 = vmatpush2.msra.mxu0 0.0
        %1652 = vmatprep.subr.mxu0 0.0
        %1653 = vmatpush2.msra.mxu0 0.0
        %1654 = vmatprep.subr.mxu0 0.0
        %1655 = vmatpush2.msra.mxu0 0.0
        %1656 = vmatprep.subr.mxu0 0.0
        %1657 = vmatpush2.msra.mxu0 0.0
        %1658 = vmatprep.mubr.f32.mxu0 0.0
        %1659 = vmatmul.mubr.f32.gmra.mxu0 %v1499
        %v1660 = vpop.f32.mrf.mxu0
        %v1661 = vadd.f32 0.0, %v1660
        %v1662 = vpop.f32.mrf.mxu0
        %1663 = vmatprep.mubr.f32.mxu0 0.0
        %1664 = vmatmul.mubr.f32.gmra.mxu0 %v1502
        %v1665 = vpop.f32.mrf.mxu0
        %v1666 = vadd.f32 0.0, %v1665
        %v1667 = vpop.f32.mrf.mxu0
        %1668 = vmatprep.mubr.f32.mxu0 0.0
        %1669 = vmatmul.mubr.f32.gmra.mxu0 %v1505
        %v1670 = vpop.f32.mrf.mxu0
        %v1671 = vadd.f32 0.0, %v1670
        %v1672 = vpop.f32.mrf.mxu0
        %1673 = vmatprep.mubr.f32.mxu0 0.0
        %1674 = vmatmul.mubr.f32.gmra.mxu0 %v1508
        %v1675 = vpop.f32.mrf.mxu0
        %v1676 = vadd.f32 0.0, %v1675
        %v1677 = vpop.f32.mrf.mxu0
        %1678 = vmatprep.mubr.f32.mxu0 0.0
        %1679 = vmatmul.mubr.f32.gmra.mxu0 %v1511
        %v1680 = vpop.f32.mrf.mxu0
        %v1681 = vadd.f32 0.0, %v1680
        %v1682 = vpop.f32.mrf.mxu0
        %1683 = vmatprep.mubr.f32.mxu0 0.0
        %1684 = vmatmul.mubr.f32.gmra.mxu0 %v1514
        %v1685 = vpop.f32.mrf.mxu0
        %v1686 = vadd.f32 0.0, %v1685
        %v1687 = vpop.f32.mrf.mxu0
        %1688 = vmatprep.mubr.f32.mxu0 0.0
        %1689 = vmatmul.mubr.f32.gmra.mxu0 %v1517
        %v1690 = vpop.f32.mrf.mxu0
        %v1691 = vadd.f32 0.0, %v1690
        %v1692 = vpop.f32.mrf.mxu0
        %1693 = vmatprep.mubr.f32.mxu0 0.0
        %1694 = vmatmul.mubr.f32.gmra.mxu0 %v1520
        %v1695 = vpop.f32.mrf.mxu0
        %v1696 = vadd.f32 0.0, %v1695
        %v1697 = vpop.f32.mrf.mxu0
        %1698 = vmatprep.mubr.f32.mxu0 0.0
        %1699 = vmatmul.mubr.f32.gmra.mxu0 %v1523
        %v1700 = vpop.f32.mrf.mxu0
        %v1701 = vadd.f32 0.0, %v1700
        %v1702 = vpop.f32.mrf.mxu0
        %1703 = vmatprep.mubr.f32.mxu0 0.0
        %1704 = vmatmul.mubr.f32.gmra.mxu0 %v1526
        %v1705 = vpop.f32.mrf.mxu0
        %v1706 = vadd.f32 0.0, %v1705
        %v1707 = vpop.f32.mrf.mxu0
        %1708 = vmatprep.mubr.f32.mxu0 0.0
        %1709 = vmatmul.mubr.f32.gmra.mxu0 %v1529
        %v1710 = vpop.f32.mrf.mxu0
        %v1711 = vadd.f32 0.0, %v1710
        %v1712 = vpop.f32.mrf.mxu0
        %1713 = vmatprep.mubr.f32.mxu0 0.0
        %1714 = vmatmul.mubr.f32.gmra.mxu0 %v1532
        %v1715 = vpop.f32.mrf.mxu0
        %v1716 = vadd.f32 0.0, %v1715
        %v1717 = vpop.f32.mrf.mxu0
        %1718 = vmatprep.mubr.f32.mxu0 0.0
        %1719 = vmatmul.mubr.f32.gmra.mxu0 %v1535
        %v1720 = vpop.f32.mrf.mxu0
        %v1721 = vadd.f32 0.0, %v1720
        %v1722 = vpop.f32.mrf.mxu0
        %1723 = vmatprep.mubr.f32.mxu0 0.0
        %1724 = vmatmul.mubr.f32.gmra.mxu0 %v1538
        %v1725 = vpop.f32.mrf.mxu0
        %v1726 = vadd.f32 0.0, %v1725
        %v1727 = vpop.f32.mrf.mxu0
        %1728 = vmatprep.mubr.f32.mxu0 0.0
        %1729 = vmatmul.mubr.f32.gmra.mxu0 %v1541
        %v1730 = vpop.f32.mrf.mxu0
        %v1731 = vadd.f32 0.0, %v1730
        %v1732 = vpop.f32.mrf.mxu0
        %1733 = vmatprep.mubr.f32.mxu0 0.0
        %1734 = vmatmul.mubr.f32.gmra.mxu0 %v1544
        %v1735 = vpop.f32.mrf.mxu0
        %v1736 = vadd.f32 0.0, %v1735
        %v1737 = vpop.f32.mrf.mxu0
        %1738 = vmatprep.mubr.f32.mxu0 0.0
        %1739 = vmatmul.mubr.f32.gmra.mxu0 %v1547
        %v1740 = vpop.f32.mrf.mxu0
        %v1741 = vadd.f32 0.0, %v1740
        %v1742 = vpop.f32.mrf.mxu0
        %1743 = vmatprep.mubr.f32.mxu0 0.0
        %1744 = vmatmul.mubr.f32.gmra.mxu0 %v1550
        %v1745 = vpop.f32.mrf.mxu0
        %v1746 = vadd.f32 0.0, %v1745
        %v1747 = vpop.f32.mrf.mxu0
        %1748 = vmatprep.mubr.f32.mxu0 0.0
        %1749 = vmatmul.mubr.f32.gmra.mxu0 %v1553
        %v1750 = vpop.f32.mrf.mxu0
        %v1751 = vadd.f32 0.0, %v1750
        %v1752 = vpop.f32.mrf.mxu0
        %1753 = vmatprep.mubr.f32.mxu0 0.0
        %1754 = vmatmul.mubr.f32.gmra.mxu0 %v1556
        %v1755 = vpop.f32.mrf.mxu0
        %v1756 = vadd.f32 0.0, %v1755
        %v1757 = vpop.f32.mrf.mxu0
        %1758 = vmatprep.mubr.f32.mxu0 0.0
        %1759 = vmatmul.mubr.f32.gmra.mxu0 %v1559
        %v1760 = vpop.f32.mrf.mxu0
        %v1761 = vadd.f32 0.0, %v1760
        %v1762 = vpop.f32.mrf.mxu0
        %1763 = vmatprep.mubr.f32.mxu0 0.0
        %1764 = vmatmul.mubr.f32.gmra.mxu0 %v1562
        %v1765 = vpop.f32.mrf.mxu0
        %v1766 = vadd.f32 0.0, %v1765
        %v1767 = vpop.f32.mrf.mxu0
        %1768 = vmatprep.mubr.f32.mxu0 0.0
        %1769 = vmatmul.mubr.f32.gmra.mxu0 %v1565
        %v1770 = vpop.f32.mrf.mxu0
        %v1771 = vadd.f32 0.0, %v1770
        %v1772 = vpop.f32.mrf.mxu0
        %1773 = vmatprep.mubr.f32.mxu0 0.0
        %1774 = vmatmul.mubr.f32.gmra.mxu0 %v1568
        %v1775 = vpop.f32.mrf.mxu0
        %v1776 = vadd.f32 0.0, %v1775
        %v1777 = vpop.f32.mrf.mxu0
        %1778 = vmatprep.mubr.f32.mxu0 0.0
        %1779 = vmatmul.mubr.f32.gmra.mxu0 %v1571
        %v1780 = vpop.f32.mrf.mxu0
        %v1781 = vadd.f32 0.0, %v1780
        %v1782 = vpop.f32.mrf.mxu0
        %1783 = vmatprep.mubr.f32.mxu0 0.0
        %1784 = vmatmul.mubr.f32.gmra.mxu0 %v1574
        %v1785 = vpop.f32.mrf.mxu0
        %v1786 = vadd.f32 0.0, %v1785
        %v1787 = vpop.f32.mrf.mxu0
        %1788 = vmatprep.mubr.f32.mxu0 0.0
        %1789 = vmatmul.mubr.f32.gmra.mxu0 %v1577
        %v1790 = vpop.f32.mrf.mxu0
        %v1791 = vadd.f32 0.0, %v1790
        %v1792 = vpop.f32.mrf.mxu0
        %1793 = vmatprep.mubr.f32.mxu0 0.0
        %1794 = vmatmul.mubr.f32.gmra.mxu0 %v1580
        %v1795 = vpop.f32.mrf.mxu0
        %v1796 = vadd.f32 0.0, %v1795
        %v1797 = vpop.f32.mrf.mxu0
        %1798 = vmatprep.mubr.f32.mxu0 0.0
        %1799 = vmatmul.mubr.f32.gmra.mxu0 %v1583
        %v1800 = vpop.f32.mrf.mxu0
        %v1801 = vadd.f32 0.0, %v1800
        %v1802 = vpop.f32.mrf.mxu0
        %1803 = vmatprep.mubr.f32.mxu0 0.0
        %1804 = vmatmul.mubr.f32.gmra.mxu0 %v1586
        %v1805 = vpop.f32.mrf.mxu0
        %v1806 = vadd.f32 0.0, %v1805
        %v1807 = vpop.f32.mrf.mxu0
        %1808 = vmatprep.mubr.f32.mxu0 0.0
        %1809 = vmatmul.mubr.f32.gmra.mxu0 %v1589
        %v1810 = vpop.f32.mrf.mxu0
        %v1811 = vadd.f32 0.0, %v1810
        %v1812 = vpop.f32.mrf.mxu0
        %1813 = vmatprep.mubr.f32.mxu0 0.0
        %1814 = vmatmul.mubr.f32.gmra.mxu0 %v1592
        %v1815 = vpop.f32.mrf.mxu0
        %v1816 = vadd.f32 0.0, %v1815
        %v1817 = vpop.f32.mrf.mxu0
        %1818 = vdwg.mxu0
        %v1819 = vmax.f32 %v1433, %v1661
        %v1820 = vmax.f32 %v1434, %v1666
        %v1821 = vmax.f32 %v1435, %v1671
        %v1822 = vmax.f32 %v1436, %v1676
        %v1823 = vmax.f32 %v1437, %v1681
        %v1824 = vmax.f32 %v1438, %v1686
        %v1825 = vmax.f32 %v1439, %v1691
        %v1826 = vmax.f32 %v1440, %v1696
        %v1827 = vmax.f32 %v1441, %v1701
        %v1828 = vmax.f32 %v1442, %v1706
        %v1829 = vmax.f32 %v1443, %v1711
        %v1830 = vmax.f32 %v1444, %v1716
        %v1831 = vmax.f32 %v1445, %v1721
        %v1832 = vmax.f32 %v1446, %v1726
        %v1833 = vmax.f32 %v1447, %v1731
        %v1834 = vmax.f32 %v1448, %v1736
        %v1835 = vmax.f32 %v1449, %v1741
        %v1836 = vmax.f32 %v1450, %v1746
        %v1837 = vmax.f32 %v1451, %v1751
        %v1838 = vmax.f32 %v1452, %v1756
        %v1839 = vmax.f32 %v1453, %v1761
        %v1840 = vmax.f32 %v1454, %v1766
        %v1841 = vmax.f32 %v1455, %v1771
        %v1842 = vmax.f32 %v1456, %v1776
        %v1843 = vmax.f32 %v1457, %v1781
        %v1844 = vmax.f32 %v1458, %v1786
        %v1845 = vmax.f32 %v1459, %v1791
        %v1846 = vmax.f32 %v1460, %v1796
        %v1847 = vmax.f32 %v1461, %v1801
        %v1848 = vmax.f32 %v1462, %v1806
        %v1849 = vmax.f32 %v1463, %v1811
        %v1850 = vmax.f32 %v1464, %v1816
        %s1851 = scalar_lea.vmem %s689, 768 [#allocation2]
        %v1852 = vld [vmem:[%s1851] sm:$0xff]
        %v1853 = vld [vmem:[%s1851 + $0x8] sm:$0xff]
        %v1854 = vld [vmem:[%s1851 + $0x10] sm:$0xff]
        %v1855 = vld [vmem:[%s1851 + $0x18] sm:$0xff]
        %v1856 = vld [vmem:[%s1851 + $0x20] sm:$0xff]
        %v1857 = vld [vmem:[%s1851 + $0x28] sm:$0xff]
        %v1858 = vld [vmem:[%s1851 + $0x30] sm:$0xff]
        %v1859 = vld [vmem:[%s1851 + $0x38] sm:$0xff]
        %v1860 = vld [vmem:[%s1851 + $0x40] sm:$0xff]
        %v1861 = vld [vmem:[%s1851 + $0x48] sm:$0xff]
        %v1862 = vld [vmem:[%s1851 + $0x50] sm:$0xff]
        %v1863 = vld [vmem:[%s1851 + $0x58] sm:$0xff]
        %v1864 = vld [vmem:[%s1851 + $0x60] sm:$0xff]
        %v1865 = vld [vmem:[%s1851 + $0x68] sm:$0xff]
        %v1866 = vld [vmem:[%s1851 + $0x70] sm:$0xff]
        %v1867 = vld [vmem:[%s1851 + $0x78] sm:$0xff]
        %v1868 = vld [vmem:[%s1851 + $0x80] sm:$0xff]
        %v1869 = vld [vmem:[%s1851 + $0x88] sm:$0xff]
        %v1870 = vld [vmem:[%s1851 + $0x90] sm:$0xff]
        %v1871 = vld [vmem:[%s1851 + $0x98] sm:$0xff]
        %v1872 = vld [vmem:[%s1851 + $0xa0] sm:$0xff]
        %v1873 = vld [vmem:[%s1851 + $0xa8] sm:$0xff]
        %v1874 = vld [vmem:[%s1851 + $0xb0] sm:$0xff]
        %v1875 = vld [vmem:[%s1851 + $0xb8] sm:$0xff]
        %v1876 = vld [vmem:[%s1851 + $0xc0] sm:$0xff]
        %v1877 = vld [vmem:[%s1851 + $0xc8] sm:$0xff]
        %v1878 = vld [vmem:[%s1851 + $0xd0] sm:$0xff]
        %v1879 = vld [vmem:[%s1851 + $0xd8] sm:$0xff]
        %v1880 = vld [vmem:[%s1851 + $0xe0] sm:$0xff]
        %v1881 = vld [vmem:[%s1851 + $0xe8] sm:$0xff]
        %v1882 = vld [vmem:[%s1851 + $0xf0] sm:$0xff]
        %v1883 = vld [vmem:[%s1851 + $0xf8] sm:$0xff]
        %v1885 = vsel %vm753, %v1852, 0
        %v1888 = vsel %vm753, %v1853, 0
        %v1891 = vsel %vm753, %v1854, 0
        %v1894 = vsel %vm753, %v1855, 0
        %v1897 = vsel %vm753, %v1856, 0
        %v1900 = vsel %vm753, %v1857, 0
        %v1903 = vsel %vm753, %v1858, 0
        %v1906 = vsel %vm753, %v1859, 0
        %v1909 = vsel %vm753, %v1860, 0
        %v1912 = vsel %vm753, %v1861, 0
        %v1915 = vsel %vm753, %v1862, 0
        %v1918 = vsel %vm753, %v1863, 0
        %v1921 = vsel %vm753, %v1864, 0
        %v1924 = vsel %vm753, %v1865, 0
        %v1927 = vsel %vm753, %v1866, 0
        %v1930 = vsel %vm753, %v1867, 0
        %v1933 = vsel %vm753, %v1868, 0
        %v1936 = vsel %vm753, %v1869, 0
        %v1939 = vsel %vm753, %v1870, 0
        %v1942 = vsel %vm753, %v1871, 0
        %v1945 = vsel %vm753, %v1872, 0
        %v1948 = vsel %vm753, %v1873, 0
        %v1951 = vsel %vm753, %v1874, 0
        %v1954 = vsel %vm753, %v1875, 0
        %v1957 = vsel %vm753, %v1876, 0
        %v1960 = vsel %vm753, %v1877, 0
        %v1963 = vsel %vm753, %v1878, 0
        %v1966 = vsel %vm753, %v1879, 0
        %v1969 = vsel %vm753, %v1880, 0
        %v1972 = vsel %vm753, %v1881, 0
        %v1975 = vsel %vm753, %v1882, 0
        %v1978 = vsel %vm753, %v1883, 0
        %1980 = vmatprep.subr.mxu0 0.0
        %1981 = vmatpush1.msra.mxu0 0.0
        %1982 = vmatprep.subr.mxu0 0.0
        %1983 = vmatpush1.msra.mxu0 0.0
        %1984 = vmatprep.subr.mxu0 0.0
        %1985 = vmatpush1.msra.mxu0 0.0
        %1986 = vmatprep.subr.mxu0 0.0
        %1987 = vmatpush1.msra.mxu0 0.0
        %1988 = vmatprep.subr.mxu0 0.0
        %1989 = vmatpush1.msra.mxu0 0.0
        %1990 = vmatprep.subr.mxu0 0.0
        %1991 = vmatpush1.msra.mxu0 0.0
        %1992 = vmatprep.subr.mxu0 0.0
        %1993 = vmatpush1.msra.mxu0 0.0
        %1994 = vmatprep.subr.mxu0 0.0
        %1995 = vmatpush1.msra.mxu0 0.0
        %1996 = vmatprep.subr.mxu0 0.0
        %1997 = vmatpush1.msra.mxu0 0.0
        %1998 = vmatprep.subr.mxu0 0.0
        %1999 = vmatpush1.msra.mxu0 0.0
        %2000 = vmatprep.subr.mxu0 0.0
        %2001 = vmatpush1.msra.mxu0 0.0
        %2002 = vmatprep.subr.mxu0 0.0
        %2003 = vmatpush1.msra.mxu0 0.0
        %2004 = vmatprep.subr.mxu0 0.0
        %2005 = vmatpush1.msra.mxu0 %v852
        %2006 = vmatprep.subr.mxu0 0.0
        %2007 = vmatpush1.msra.mxu0 %v719
        %2008 = vmatprep.subr.mxu0 0.0
        %2009 = vmatpush1.msra.mxu0 %v718
        %2010 = vmatprep.subr.mxu0 0.0
        %2011 = vmatpush1.msra.mxu0 %v717
        %2012 = vmatprep.subr.mxu0 0.0
        %2013 = vmatpush2.msra.mxu0 0.0
        %2014 = vmatprep.subr.mxu0 0.0
        %2015 = vmatpush2.msra.mxu0 0.0
        %2016 = vmatprep.subr.mxu0 0.0
        %2017 = vmatpush2.msra.mxu0 0.0
        %2018 = vmatprep.subr.mxu0 0.0
        %2019 = vmatpush2.msra.mxu0 0.0
        %2020 = vmatprep.subr.mxu0 0.0
        %2021 = vmatpush2.msra.mxu0 0.0
        %2022 = vmatprep.subr.mxu0 0.0
        %2023 = vmatpush2.msra.mxu0 0.0
        %2024 = vmatprep.subr.mxu0 0.0
        %2025 = vmatpush2.msra.mxu0 0.0
        %2026 = vmatprep.subr.mxu0 0.0
        %2027 = vmatpush2.msra.mxu0 0.0
        %2028 = vmatprep.subr.mxu0 0.0
        %2029 = vmatpush2.msra.mxu0 0.0
        %2030 = vmatprep.subr.mxu0 0.0
        %2031 = vmatpush2.msra.mxu0 0.0
        %2032 = vmatprep.subr.mxu0 0.0
        %2033 = vmatpush2.msra.mxu0 0.0
        %2034 = vmatprep.subr.mxu0 0.0
        %2035 = vmatpush2.msra.mxu0 0.0
        %2036 = vmatprep.subr.mxu0 0.0
        %2037 = vmatpush2.msra.mxu0 0.0
        %2038 = vmatprep.subr.mxu0 0.0
        %2039 = vmatpush2.msra.mxu0 0.0
        %2040 = vmatprep.subr.mxu0 0.0
        %2041 = vmatpush2.msra.mxu0 0.0
        %2042 = vmatprep.subr.mxu0 0.0
        %2043 = vmatpush2.msra.mxu0 0.0
        %2044 = vmatprep.mubr.f32.mxu0 0.0
        %2045 = vmatmul.mubr.f32.gmra.mxu0 %v1885
        %v2046 = vpop.f32.mrf.mxu0
        %v2047 = vadd.f32 0.0, %v2046
        %v2048 = vpop.f32.mrf.mxu0
        %2049 = vmatprep.mubr.f32.mxu0 0.0
        %2050 = vmatmul.mubr.f32.gmra.mxu0 %v1888
        %v2051 = vpop.f32.mrf.mxu0
        %v2052 = vadd.f32 0.0, %v2051
        %v2053 = vpop.f32.mrf.mxu0
        %2054 = vmatprep.mubr.f32.mxu0 0.0
        %2055 = vmatmul.mubr.f32.gmra.mxu0 %v1891
        %v2056 = vpop.f32.mrf.mxu0
        %v2057 = vadd.f32 0.0, %v2056
        %v2058 = vpop.f32.mrf.mxu0
        %2059 = vmatprep.mubr.f32.mxu0 0.0
        %2060 = vmatmul.mubr.f32.gmra.mxu0 %v1894
        %v2061 = vpop.f32.mrf.mxu0
        %v2062 = vadd.f32 0.0, %v2061
        %v2063 = vpop.f32.mrf.mxu0
        %2064 = vmatprep.mubr.f32.mxu0 0.0
        %2065 = vmatmul.mubr.f32.gmra.mxu0 %v1897
        %v2066 = vpop.f32.mrf.mxu0
        %v2067 = vadd.f32 0.0, %v2066
        %v2068 = vpop.f32.mrf.mxu0
        %2069 = vmatprep.mubr.f32.mxu0 0.0
        %2070 = vmatmul.mubr.f32.gmra.mxu0 %v1900
        %v2071 = vpop.f32.mrf.mxu0
        %v2072 = vadd.f32 0.0, %v2071
        %v2073 = vpop.f32.mrf.mxu0
        %2074 = vmatprep.mubr.f32.mxu0 0.0
        %2075 = vmatmul.mubr.f32.gmra.mxu0 %v1903
        %v2076 = vpop.f32.mrf.mxu0
        %v2077 = vadd.f32 0.0, %v2076
        %v2078 = vpop.f32.mrf.mxu0
        %2079 = vmatprep.mubr.f32.mxu0 0.0
        %2080 = vmatmul.mubr.f32.gmra.mxu0 %v1906
        %v2081 = vpop.f32.mrf.mxu0
        %v2082 = vadd.f32 0.0, %v2081
        %v2083 = vpop.f32.mrf.mxu0
        %2084 = vmatprep.mubr.f32.mxu0 0.0
        %2085 = vmatmul.mubr.f32.gmra.mxu0 %v1909
        %v2086 = vpop.f32.mrf.mxu0
        %v2087 = vadd.f32 0.0, %v2086
        %v2088 = vpop.f32.mrf.mxu0
        %2089 = vmatprep.mubr.f32.mxu0 0.0
        %2090 = vmatmul.mubr.f32.gmra.mxu0 %v1912
        %v2091 = vpop.f32.mrf.mxu0
        %v2092 = vadd.f32 0.0, %v2091
        %v2093 = vpop.f32.mrf.mxu0
        %2094 = vmatprep.mubr.f32.mxu0 0.0
        %2095 = vmatmul.mubr.f32.gmra.mxu0 %v1915
        %v2096 = vpop.f32.mrf.mxu0
        %v2097 = vadd.f32 0.0, %v2096
        %v2098 = vpop.f32.mrf.mxu0
        %2099 = vmatprep.mubr.f32.mxu0 0.0
        %2100 = vmatmul.mubr.f32.gmra.mxu0 %v1918
        %v2101 = vpop.f32.mrf.mxu0
        %v2102 = vadd.f32 0.0, %v2101
        %v2103 = vpop.f32.mrf.mxu0
        %2104 = vmatprep.mubr.f32.mxu0 0.0
        %2105 = vmatmul.mubr.f32.gmra.mxu0 %v1921
        %v2106 = vpop.f32.mrf.mxu0
        %v2107 = vadd.f32 0.0, %v2106
        %v2108 = vpop.f32.mrf.mxu0
        %2109 = vmatprep.mubr.f32.mxu0 0.0
        %2110 = vmatmul.mubr.f32.gmra.mxu0 %v1924
        %v2111 = vpop.f32.mrf.mxu0
        %v2112 = vadd.f32 0.0, %v2111
        %v2113 = vpop.f32.mrf.mxu0
        %2114 = vmatprep.mubr.f32.mxu0 0.0
        %2115 = vmatmul.mubr.f32.gmra.mxu0 %v1927
        %v2116 = vpop.f32.mrf.mxu0
        %v2117 = vadd.f32 0.0, %v2116
        %v2118 = vpop.f32.mrf.mxu0
        %2119 = vmatprep.mubr.f32.mxu0 0.0
        %2120 = vmatmul.mubr.f32.gmra.mxu0 %v1930
        %v2121 = vpop.f32.mrf.mxu0
        %v2122 = vadd.f32 0.0, %v2121
        %v2123 = vpop.f32.mrf.mxu0
        %2124 = vmatprep.mubr.f32.mxu0 0.0
        %2125 = vmatmul.mubr.f32.gmra.mxu0 %v1933
        %v2126 = vpop.f32.mrf.mxu0
        %v2127 = vadd.f32 0.0, %v2126
        %v2128 = vpop.f32.mrf.mxu0
        %2129 = vmatprep.mubr.f32.mxu0 0.0
        %2130 = vmatmul.mubr.f32.gmra.mxu0 %v1936
        %v2131 = vpop.f32.mrf.mxu0
        %v2132 = vadd.f32 0.0, %v2131
        %v2133 = vpop.f32.mrf.mxu0
        %2134 = vmatprep.mubr.f32.mxu0 0.0
        %2135 = vmatmul.mubr.f32.gmra.mxu0 %v1939
        %v2136 = vpop.f32.mrf.mxu0
        %v2137 = vadd.f32 0.0, %v2136
        %v2138 = vpop.f32.mrf.mxu0
        %2139 = vmatprep.mubr.f32.mxu0 0.0
        %2140 = vmatmul.mubr.f32.gmra.mxu0 %v1942
        %v2141 = vpop.f32.mrf.mxu0
        %v2142 = vadd.f32 0.0, %v2141
        %v2143 = vpop.f32.mrf.mxu0
        %2144 = vmatprep.mubr.f32.mxu0 0.0
        %2145 = vmatmul.mubr.f32.gmra.mxu0 %v1945
        %v2146 = vpop.f32.mrf.mxu0
        %v2147 = vadd.f32 0.0, %v2146
        %v2148 = vpop.f32.mrf.mxu0
        %2149 = vmatprep.mubr.f32.mxu0 0.0
        %2150 = vmatmul.mubr.f32.gmra.mxu0 %v1948
        %v2151 = vpop.f32.mrf.mxu0
        %v2152 = vadd.f32 0.0, %v2151
        %v2153 = vpop.f32.mrf.mxu0
        %2154 = vmatprep.mubr.f32.mxu0 0.0
        %2155 = vmatmul.mubr.f32.gmra.mxu0 %v1951
        %v2156 = vpop.f32.mrf.mxu0
        %v2157 = vadd.f32 0.0, %v2156
        %v2158 = vpop.f32.mrf.mxu0
        %2159 = vmatprep.mubr.f32.mxu0 0.0
        %2160 = vmatmul.mubr.f32.gmra.mxu0 %v1954
        %v2161 = vpop.f32.mrf.mxu0
        %v2162 = vadd.f32 0.0, %v2161
        %v2163 = vpop.f32.mrf.mxu0
        %2164 = vmatprep.mubr.f32.mxu0 0.0
        %2165 = vmatmul.mubr.f32.gmra.mxu0 %v1957
        %v2166 = vpop.f32.mrf.mxu0
        %v2167 = vadd.f32 0.0, %v2166
        %v2168 = vpop.f32.mrf.mxu0
        %2169 = vmatprep.mubr.f32.mxu0 0.0
        %2170 = vmatmul.mubr.f32.gmra.mxu0 %v1960
        %v2171 = vpop.f32.mrf.mxu0
        %v2172 = vadd.f32 0.0, %v2171
        %v2173 = vpop.f32.mrf.mxu0
        %2174 = vmatprep.mubr.f32.mxu0 0.0
        %2175 = vmatmul.mubr.f32.gmra.mxu0 %v1963
        %v2176 = vpop.f32.mrf.mxu0
        %v2177 = vadd.f32 0.0, %v2176
        %v2178 = vpop.f32.mrf.mxu0
        %2179 = vmatprep.mubr.f32.mxu0 0.0
        %2180 = vmatmul.mubr.f32.gmra.mxu0 %v1966
        %v2181 = vpop.f32.mrf.mxu0
        %v2182 = vadd.f32 0.0, %v2181
        %v2183 = vpop.f32.mrf.mxu0
        %2184 = vmatprep.mubr.f32.mxu0 0.0
        %2185 = vmatmul.mubr.f32.gmra.mxu0 %v1969
        %v2186 = vpop.f32.mrf.mxu0
        %v2187 = vadd.f32 0.0, %v2186
        %v2188 = vpop.f32.mrf.mxu0
        %2189 = vmatprep.mubr.f32.mxu0 0.0
        %2190 = vmatmul.mubr.f32.gmra.mxu0 %v1972
        %v2191 = vpop.f32.mrf.mxu0
        %v2192 = vadd.f32 0.0, %v2191
        %v2193 = vpop.f32.mrf.mxu0
        %2194 = vmatprep.mubr.f32.mxu0 0.0
        %2195 = vmatmul.mubr.f32.gmra.mxu0 %v1975
        %v2196 = vpop.f32.mrf.mxu0
        %v2197 = vadd.f32 0.0, %v2196
        %v2198 = vpop.f32.mrf.mxu0
        %2199 = vmatprep.mubr.f32.mxu0 0.0
        %2200 = vmatmul.mubr.f32.gmra.mxu0 %v1978
        %v2201 = vpop.f32.mrf.mxu0
        %v2202 = vadd.f32 0.0, %v2201
        %v2203 = vpop.f32.mrf.mxu0
        %2204 = vdwg.mxu0
        %v2205 = vmax.f32 %v1819, %v2047
        %v2206 = vmax.f32 %v1820, %v2052
        %v2207 = vmax.f32 %v1821, %v2057
        %v2208 = vmax.f32 %v1822, %v2062
        %v2209 = vmax.f32 %v1823, %v2067
        %v2210 = vmax.f32 %v1824, %v2072
        %v2211 = vmax.f32 %v1825, %v2077
        %v2212 = vmax.f32 %v1826, %v2082
        %v2213 = vmax.f32 %v1827, %v2087
        %v2214 = vmax.f32 %v1828, %v2092
        %v2215 = vmax.f32 %v1829, %v2097
        %v2216 = vmax.f32 %v1830, %v2102
        %v2217 = vmax.f32 %v1831, %v2107
        %v2218 = vmax.f32 %v1832, %v2112
        %v2219 = vmax.f32 %v1833, %v2117
        %v2220 = vmax.f32 %v1834, %v2122
        %v2221 = vmax.f32 %v1835, %v2127
        %v2222 = vmax.f32 %v1836, %v2132
        %v2223 = vmax.f32 %v1837, %v2137
        %v2224 = vmax.f32 %v1838, %v2142
        %v2225 = vmax.f32 %v1839, %v2147
        %v2226 = vmax.f32 %v1840, %v2152
        %v2227 = vmax.f32 %v1841, %v2157
        %v2228 = vmax.f32 %v1842, %v2162
        %v2229 = vmax.f32 %v1843, %v2167
        %v2230 = vmax.f32 %v1844, %v2172
        %v2231 = vmax.f32 %v1845, %v2177
        %v2232 = vmax.f32 %v1846, %v2182
        %v2233 = vmax.f32 %v1847, %v2187
        %v2234 = vmax.f32 %v1848, %v2192
        %v2235 = vmax.f32 %v1849, %v2197
        %v2236 = vmax.f32 %v1850, %v2202
        %v2237 = vld [vmem:[%s2] sm:$0x1]
        %v2239 = vlaneseq
        %v2240 = vshrl.u32 %v2239, 7
        %v2241 = vsub.s32 0, %v2240
        %v2242 = vrot.slane %v2237, %v2241
        %v2244 = vadd.f32 %v2205, %v2242
        %v2245 = vadd.f32 %v2206, %v2242
        %v2246 = vadd.f32 %v2207, %v2242
        %v2247 = vadd.f32 %v2208, %v2242
        %v2248 = vadd.f32 %v2209, %v2242
        %v2249 = vadd.f32 %v2210, %v2242
        %v2250 = vadd.f32 %v2211, %v2242
        %v2251 = vadd.f32 %v2212, %v2242
        %v2252 = vadd.f32 %v2213, %v2242
        %v2253 = vadd.f32 %v2214, %v2242
        %v2254 = vadd.f32 %v2215, %v2242
        %v2255 = vadd.f32 %v2216, %v2242
        %v2256 = vadd.f32 %v2217, %v2242
        %v2257 = vadd.f32 %v2218, %v2242
        %v2258 = vadd.f32 %v2219, %v2242
        %v2259 = vadd.f32 %v2220, %v2242
        %v2260 = vadd.f32 %v2221, %v2242
        %v2261 = vadd.f32 %v2222, %v2242
        %v2262 = vadd.f32 %v2223, %v2242
        %v2263 = vadd.f32 %v2224, %v2242
        %v2264 = vadd.f32 %v2225, %v2242
        %v2265 = vadd.f32 %v2226, %v2242
        %v2266 = vadd.f32 %v2227, %v2242
        %v2267 = vadd.f32 %v2228, %v2242
        %v2268 = vadd.f32 %v2229, %v2242
        %v2269 = vadd.f32 %v2230, %v2242
        %v2270 = vadd.f32 %v2231, %v2242
        %v2271 = vadd.f32 %v2232, %v2242
        %v2272 = vadd.f32 %v2233, %v2242
        %v2273 = vadd.f32 %v2234, %v2242
        %v2274 = vadd.f32 %v2235, %v2242
        %v2275 = vadd.f32 %v2236, %v2242
        %v2276 = vmax.f32 %v2244, 0.0
        %v2277 = vmax.f32 %v2245, 0.0
        %v2278 = vmax.f32 %v2246, 0.0
        %v2279 = vmax.f32 %v2247, 0.0
        %v2280 = vmax.f32 %v2248, 0.0
        %v2281 = vmax.f32 %v2249, 0.0
        %v2282 = vmax.f32 %v2250, 0.0
        %v2283 = vmax.f32 %v2251, 0.0
        %v2284 = vmax.f32 %v2252, 0.0
        %v2285 = vmax.f32 %v2253, 0.0
        %v2286 = vmax.f32 %v2254, 0.0
        %v2287 = vmax.f32 %v2255, 0.0
        %v2288 = vmax.f32 %v2256, 0.0
        %v2289 = vmax.f32 %v2257, 0.0
        %v2290 = vmax.f32 %v2258, 0.0
        %v2291 = vmax.f32 %v2259, 0.0
        %v2292 = vmax.f32 %v2260, 0.0
        %v2293 = vmax.f32 %v2261, 0.0
        %v2294 = vmax.f32 %v2262, 0.0
        %v2295 = vmax.f32 %v2263, 0.0
        %v2296 = vmax.f32 %v2264, 0.0
        %v2297 = vmax.f32 %v2265, 0.0
        %v2298 = vmax.f32 %v2266, 0.0
        %v2299 = vmax.f32 %v2267, 0.0
        %v2300 = vmax.f32 %v2268, 0.0
        %v2301 = vmax.f32 %v2269, 0.0
        %v2302 = vmax.f32 %v2270, 0.0
        %v2303 = vmax.f32 %v2271, 0.0
        %v2304 = vmax.f32 %v2272, 0.0
        %v2305 = vmax.f32 %v2273, 0.0
        %v2306 = vmax.f32 %v2274, 0.0
        %v2307 = vmax.f32 %v2275, 0.0
        %2308 = vst [vmem:[%s715] sm:$0xff] %v2276
        %2309 = vst [vmem:[%s715 + $0x8] sm:$0xff] %v2277
        %2310 = vst [vmem:[%s715 + $0x10] sm:$0xff] %v2278
        %2311 = vst [vmem:[%s715 + $0x18] sm:$0xff] %v2279
        %2312 = vst [vmem:[%s715 + $0x20] sm:$0xff] %v2280
        %2313 = vst [vmem:[%s715 + $0x28] sm:$0xff] %v2281
        %2314 = vst [vmem:[%s715 + $0x30] sm:$0xff] %v2282
        %2315 = vst [vmem:[%s715 + $0x38] sm:$0xff] %v2283
        %2316 = vst [vmem:[%s715 + $0x40] sm:$0xff] %v2284
        %2317 = vst [vmem:[%s715 + $0x48] sm:$0xff] %v2285
        %2318 = vst [vmem:[%s715 + $0x50] sm:$0xff] %v2286
        %2319 = vst [vmem:[%s715 + $0x58] sm:$0xff] %v2287
        %2320 = vst [vmem:[%s715 + $0x60] sm:$0xff] %v2288
        %2321 = vst [vmem:[%s715 + $0x68] sm:$0xff] %v2289
        %2322 = vst [vmem:[%s715 + $0x70] sm:$0xff] %v2290
        %2323 = vst [vmem:[%s715 + $0x78] sm:$0xff] %v2291
        %2324 = vst [vmem:[%s715 + $0x80] sm:$0xff] %v2292
        %2325 = vst [vmem:[%s715 + $0x88] sm:$0xff] %v2293
        %2326 = vst [vmem:[%s715 + $0x90] sm:$0xff] %v2294
        %2327 = vst [vmem:[%s715 + $0x98] sm:$0xff] %v2295
        %2328 = vst [vmem:[%s715 + $0xa0] sm:$0xff] %v2296
        %2329 = vst [vmem:[%s715 + $0xa8] sm:$0xff] %v2297
        %2330 = vst [vmem:[%s715 + $0xb0] sm:$0xff] %v2298
        %2331 = vst [vmem:[%s715 + $0xb8] sm:$0xff] %v2299
        %2332 = vst [vmem:[%s715 + $0xc0] sm:$0xff] %v2300
        %2333 = vst [vmem:[%s715 + $0xc8] sm:$0xff] %v2301
        %2334 = vst [vmem:[%s715 + $0xd0] sm:$0xff] %v2302
        %2335 = vst [vmem:[%s715 + $0xd8] sm:$0xff] %v2303
        %2336 = vst [vmem:[%s715 + $0xe0] sm:$0xff] %v2304
        %2337 = vst [vmem:[%s715 + $0xe8] sm:$0xff] %v2305
        %2338 = vst [vmem:[%s715 + $0xf0] sm:$0xff] %v2306
        %2339 = vst [vmem:[%s715 + $0xf8] sm:$0xff] %v2307
        %s2340 = smul.u32 32, %s14
        %p2341 = scmp.lt.s32.totalorder %s2340, 63
        %s2342 = scalar_select %p2341, %s2340, 63
        %s2343 = smul.addr %s2342, 8
        %s2344 = scalar_lea.vmem %s3, %s2343
        // Predicated region
        $region71: #{convnet_mnist_forward.3} parent=65 // pred_check
          %p2345 = pneg %p100
        $region72: #{convnet_mnist_forward.3} parent=65 // pred_check_branch
          %2347 = sbr.rel (%p2345) target = $region74
        $region73: #{convnet_mnist_forward.3} parent=65 // pred_region
          %s2348 = smul.u32 32, %s14
        $region74: #{convnet_mnist_forward.3} parent=65 // pred_fallthru
          _
      $region66: #{convnet_mnist_forward.3} parent=5 // pred_fallthru
        _
      %p2349 = scmp.le.s32.totalorder 2, %s9
      // Predicated region
      $region75: #{convnet_mnist_forward.3} parent=5 // pred_check
        %p2350 = pneg %p2349
      $region76: #{convnet_mnist_forward.3} parent=5 // pred_check_branch
        %2352 = sbr.rel (%p2350) target = $region78
      $region77: #{convnet_mnist_forward.3} parent=5 // pred_region
        %s2353 = ssub.s32 %s9, 2
        // Predicated region
        $region79: #{convnet_mnist_forward.3} parent=77 // pred_check
          %p2354 = pneg %p106
        $region80: #{convnet_mnist_forward.3} parent=77 // pred_check_branch
          %2356 = sbr.rel (%p2354) target = $region82
        $region81: #{convnet_mnist_forward.3} parent=77 // pred_region
          %s2357 = smul.u32 32, %s15
          %p2358 = scmp.lt.s32.totalorder %s2357, 63
          %s2359 = scalar_select %p2358, %s2357, 63
          %s2360 = smul.addr %s2359, 8
          %s2361 = scalar_lea.vmem %s3, %s2360
        $region82: #{convnet_mnist_forward.3} parent=77 // pred_fallthru
          _
      $region78: #{convnet_mnist_forward.3} parent=5 // pred_fallthru
        _
    $region6: #{convnet_mnist_forward.3} parent=1 // loop_footer
      %s13 = sadd.s32 1, %s9
    $region7: #{convnet_mnist_forward.3} parent=1 // loop_footer_branch
      %8 = sbr.rel target = $region3
    $region8: #{convnet_mnist_forward.3} parent=1 // loop_exit
      _

// kernel: convnet_mnist_forward.4
$region0: #{convnet_mnist_forward.4}
  #allocation0 [shape = 'u32[]', space=smem, size = 0x4, offset = 0x4, fixed_abs, tag = 'smem constant byte address 0x4 - core index']
  #allocation1 [shape = 'u32[144,128]{1,0:T(1,128)}', space=vmem, size = 0x12000, scoped, tag = 'internal scratch']
  %s0 = inlined_call_operand.vmem [shape: f32[4,32,800], index: 0, kind: input, shape index: {}]
  %s1 = inlined_call_operand.vmem [shape: f32[800,128], index: 1, kind: input, shape index: {}]
  %s2 = inlined_call_operand.vmem [shape: f32[1,128], index: 2, kind: input, shape index: {}]
  %s3 = inlined_call_operand.vmem [shape: f32[32,128], index: 3, kind: output, shape index: {}]
  %s4 = sld [smem:[#allocation0]]
  $region22: #{convnet_mnist_forward.4} parent=0
    _
  %s6 = ssub.s32 1, %s4
  %s7 = scalar_select 0, %s6, %s4
  // Predicated region
  $region2: #{convnet_mnist_forward.4} parent=0 // pred_check
    _
  $region3: #{convnet_mnist_forward.4} parent=0 // pred_check_branch
    %9 = sbr.rel (0) target = $region5
  $region4: #{convnet_mnist_forward.4} parent=0 // pred_region
    _
  $region5: #{convnet_mnist_forward.4} parent=0 // pred_fallthru
    _
  // Predicated region
  $region6: #{convnet_mnist_forward.4} parent=0 // pred_check
    _
  $region7: #{convnet_mnist_forward.4} parent=0 // pred_check_branch
    %11 = sbr.rel (0) target = $region9
  $region8: #{convnet_mnist_forward.4} parent=0 // pred_region
    _
  $region9: #{convnet_mnist_forward.4} parent=0 // pred_fallthru
    _
  // Predicated region
  $region10: #{convnet_mnist_forward.4} parent=0 // pred_check
    _
  $region11: #{convnet_mnist_forward.4} parent=0 // pred_check_branch
    %13 = sbr.rel (0) target = $region13
  $region12: #{convnet_mnist_forward.4} parent=0 // pred_region
    _
  $region13: #{convnet_mnist_forward.4} parent=0 // pred_fallthru
    _
  %v14 = vld [vmem:[%s1] sm:$0xff]
  %v15 = vld [vmem:[%s1 + $0x8] sm:$0xff]
  %v16 = vld [vmem:[%s1 + $0x10] sm:$0xff]
  %v17 = vld [vmem:[%s1 + $0x18] sm:$0xff]
  %v18 = vld [vmem:[%s1 + $0x20] sm:$0xff]
  %v19 = vld [vmem:[%s1 + $0x28] sm:$0xff]
  %v20 = vld [vmem:[%s1 + $0x30] sm:$0xff]
  %v21 = vld [vmem:[%s1 + $0x38] sm:$0xff]
  %v22 = vld [vmem:[%s1 + $0x40] sm:$0xff]
  %v23 = vld [vmem:[%s1 + $0x48] sm:$0xff]
  %v24 = vld [vmem:[%s1 + $0x50] sm:$0xff]
  %v25 = vld [vmem:[%s1 + $0x58] sm:$0xff]
  %v26 = vld [vmem:[%s1 + $0x60] sm:$0xff]
  %v27 = vld [vmem:[%s1 + $0x68] sm:$0xff]
  %v28 = vld [vmem:[%s1 + $0x70] sm:$0xff]
  %v29 = vld [vmem:[%s1 + $0x78] sm:$0xff]
  %v30 = vld [vmem:[%s1 + $0x80] sm:$0xff]
  %v31 = vld [vmem:[%s1 + $0x88] sm:$0xff]
  %v32 = vld [vmem:[%s1 + $0x90] sm:$0xff]
  %v33 = vld [vmem:[%s1 + $0x98] sm:$0xff]
  %v34 = vld [vmem:[%s1 + $0xa0] sm:$0xff]
  %v35 = vld [vmem:[%s1 + $0xa8] sm:$0xff]
  %v36 = vld [vmem:[%s1 + $0xb0] sm:$0xff]
  %v37 = vld [vmem:[%s1 + $0xb8] sm:$0xff]
  %v38 = vld [vmem:[%s1 + $0xc0] sm:$0xff]
  %v39 = vld [vmem:[%s1 + $0xc8] sm:$0xff]
  %v40 = vld [vmem:[%s1 + $0xd0] sm:$0xff]
  %v41 = vld [vmem:[%s1 + $0xd8] sm:$0xff]
  %v42 = vld [vmem:[%s1 + $0xe0] sm:$0xff]
  %v43 = vld [vmem:[%s1 + $0xe8] sm:$0xff]
  %v44 = vld [vmem:[%s1 + $0xf0] sm:$0xff]
  %v45 = vld [vmem:[%s1 + $0xf8] sm:$0xff]
  %v46 = vld [vmem:[%s1 + $0x100] sm:$0xff]
  %v47 = vld [vmem:[%s1 + $0x108] sm:$0xff]
  %v48 = vld [vmem:[%s1 + $0x110] sm:$0xff]
  %v49 = vld [vmem:[%s1 + $0x118] sm:$0xff]
  %v50 = vld [vmem:[%s1 + $0x120] sm:$0xff]
  %v51 = vld [vmem:[%s1 + $0x128] sm:$0xff]
  %v52 = vld [vmem:[%s1 + $0x130] sm:$0xff]
  %v53 = vld [vmem:[%s1 + $0x138] sm:$0xff]
  %v54 = vld [vmem:[%s1 + $0x140] sm:$0xff]
  %v55 = vld [vmem:[%s1 + $0x148] sm:$0xff]
  %v56 = vld [vmem:[%s1 + $0x150] sm:$0xff]
  %v57 = vld [vmem:[%s1 + $0x158] sm:$0xff]
  %v58 = vld [vmem:[%s1 + $0x160] sm:$0xff]
  %v59 = vld [vmem:[%s1 + $0x168] sm:$0xff]
  %v60 = vld [vmem:[%s1 + $0x170] sm:$0xff]
  %v61 = vld [vmem:[%s1 + $0x178] sm:$0xff]
  %v62 = vld [vmem:[%s1 + $0x180] sm:$0xff]
  %v63 = vld [vmem:[%s1 + $0x188] sm:$0xff]
  %v64 = vld [vmem:[%s1 + $0x190] sm:$0xff]
  %v65 = vld [vmem:[%s1 + $0x198] sm:$0xff]
  %v66 = vld [vmem:[%s1 + $0x1a0] sm:$0xff]
  %v67 = vld [vmem:[%s1 + $0x1a8] sm:$0xff]
  %v68 = vld [vmem:[%s1 + $0x1b0] sm:$0xff]
  %v69 = vld [vmem:[%s1 + $0x1b8] sm:$0xff]
  %v70 = vld [vmem:[%s1 + $0x1c0] sm:$0xff]
  %v71 = vld [vmem:[%s1 + $0x1c8] sm:$0xff]
  %v72 = vld [vmem:[%s1 + $0x1d0] sm:$0xff]
  %v73 = vld [vmem:[%s1 + $0x1d8] sm:$0xff]
  %v74 = vld [vmem:[%s1 + $0x1e0] sm:$0xff]
  %v75 = vld [vmem:[%s1 + $0x1e8] sm:$0xff]
  %v76 = vld [vmem:[%s1 + $0x1f0] sm:$0xff]
  %v77 = vld [vmem:[%s1 + $0x1f8] sm:$0xff]
  %v78 = vld [vmem:[%s1 + $0x200] sm:$0xff]
  %v79 = vld [vmem:[%s1 + $0x208] sm:$0xff]
  %v80 = vld [vmem:[%s1 + $0x210] sm:$0xff]
  %v81 = vld [vmem:[%s1 + $0x218] sm:$0xff]
  %v82 = vld [vmem:[%s1 + $0x220] sm:$0xff]
  %v83 = vld [vmem:[%s1 + $0x228] sm:$0xff]
  %v84 = vld [vmem:[%s1 + $0x230] sm:$0xff]
  %v85 = vld [vmem:[%s1 + $0x238] sm:$0xff]
  %v86 = vld [vmem:[%s1 + $0x240] sm:$0xff]
  %v87 = vld [vmem:[%s1 + $0x248] sm:$0xff]
  %v88 = vld [vmem:[%s1 + $0x250] sm:$0xff]
  %v89 = vld [vmem:[%s1 + $0x258] sm:$0xff]
  %v90 = vld [vmem:[%s1 + $0x260] sm:$0xff]
  %v91 = vld [vmem:[%s1 + $0x268] sm:$0xff]
  %v92 = vld [vmem:[%s1 + $0x270] sm:$0xff]
  %v93 = vld [vmem:[%s1 + $0x278] sm:$0xff]
  %v94 = vld [vmem:[%s1 + $0x280] sm:$0xff]
  %v95 = vld [vmem:[%s1 + $0x288] sm:$0xff]
  %v96 = vld [vmem:[%s1 + $0x290] sm:$0xff]
  %v97 = vld [vmem:[%s1 + $0x298] sm:$0xff]
  %v98 = vld [vmem:[%s1 + $0x2a0] sm:$0xff]
  %v99 = vld [vmem:[%s1 + $0x2a8] sm:$0xff]
  %v100 = vld [vmem:[%s1 + $0x2b0] sm:$0xff]
  %v101 = vld [vmem:[%s1 + $0x2b8] sm:$0xff]
  %v102 = vld [vmem:[%s1 + $0x2c0] sm:$0xff]
  %v103 = vld [vmem:[%s1 + $0x2c8] sm:$0xff]
  %v104 = vld [vmem:[%s1 + $0x2d0] sm:$0xff]
  %v105 = vld [vmem:[%s1 + $0x2d8] sm:$0xff]
  %v106 = vld [vmem:[%s1 + $0x2e0] sm:$0xff]
  %v107 = vld [vmem:[%s1 + $0x2e8] sm:$0xff]
  %v108 = vld [vmem:[%s1 + $0x2f0] sm:$0xff]
  %v109 = vld [vmem:[%s1 + $0x2f8] sm:$0xff]
  %v110 = vld [vmem:[%s1 + $0x300] sm:$0xff]
  %v111 = vld [vmem:[%s1 + $0x308] sm:$0xff]
  %v112 = vld [vmem:[%s1 + $0x310] sm:$0xff]
  %v113 = vld [vmem:[%s1 + $0x318] sm:$0xff]
  %v114 = vld [vmem:[%s0] sm:$0xff]
  %v115 = vld [vmem:[%s0 + $0x8] sm:$0xff]
  %v116 = vld [vmem:[%s0 + $0x10] sm:$0xff]
  %v117 = vld [vmem:[%s0 + $0x18] sm:$0xff]
  %v118 = vld [vmem:[%s0 + $0x20] sm:$0xff]
  %v119 = vld [vmem:[%s0 + $0x28] sm:$0xff]
  %v120 = vld [vmem:[%s0 + $0x30] sm:$0xff]
  %v121 = vld [vmem:[%s0 + $0x38] sm:$0xff]
  %v122 = vld [vmem:[%s0 + $0x40] sm:$0xff]
  %v123 = vld [vmem:[%s0 + $0x48] sm:$0xff]
  %v124 = vld [vmem:[%s0 + $0x50] sm:$0xff]
  %v125 = vld [vmem:[%s0 + $0x58] sm:$0xff]
  %v126 = vld [vmem:[%s0 + $0x60] sm:$0xff]
  %v127 = vld [vmem:[%s0 + $0x68] sm:$0xff]
  %v128 = vld [vmem:[%s0 + $0x70] sm:$0xff]
  %v129 = vld [vmem:[%s0 + $0x78] sm:$0xff]
  %v130 = vld [vmem:[%s0 + $0x80] sm:$0xff]
  %v131 = vld [vmem:[%s0 + $0x88] sm:$0xff]
  %v132 = vld [vmem:[%s0 + $0x90] sm:$0xff]
  %v133 = vld [vmem:[%s0 + $0x98] sm:$0xff]
  %v134 = vld [vmem:[%s0 + $0xa0] sm:$0xff]
  %v135 = vld [vmem:[%s0 + $0xa8] sm:$0xff]
  %v136 = vld [vmem:[%s0 + $0xb0] sm:$0xff]
  %v137 = vld [vmem:[%s0 + $0xb8] sm:$0xff]
  %v138 = vld [vmem:[%s0 + $0xc0] sm:$0xff]
  %v139 = vld [vmem:[%s0 + $0xc8] sm:$0xff]
  %v140 = vld [vmem:[%s0 + $0xd0] sm:$0xff]
  %v141 = vld [vmem:[%s0 + $0xd8] sm:$0xff]
  %vm142 = vcmask 261120
  %v144 = vsel %vm142, %v120, 0
  %v147 = vsel %vm142, %v127, 0
  %v150 = vsel %vm142, %v134, 0
  %v153 = vsel %vm142, %v141, 0
  %155 = vmatprep.subr.mxu0 0.0
  %156 = vmatpush1.msra.mxu0 %v29
  %157 = vmatprep.subr.mxu0 0.0
  %158 = vmatpush1.msra.mxu0 %v28
  %159 = vmatprep.subr.mxu0 0.0
  %160 = vmatpush1.msra.mxu0 %v27
  %161 = vmatprep.subr.mxu0 0.0
  %162 = vmatpush1.msra.mxu0 %v26
  %163 = vmatprep.subr.mxu0 0.0
  %164 = vmatpush1.msra.mxu0 %v25
  %165 = vmatprep.subr.mxu0 0.0
  %166 = vmatpush1.msra.mxu0 %v24
  %167 = vmatprep.subr.mxu0 0.0
  %168 = vmatpush1.msra.mxu0 %v23
  %169 = vmatprep.subr.mxu0 0.0
  %170 = vmatpush1.msra.mxu0 %v22
  %171 = vmatprep.subr.mxu0 0.0
  %172 = vmatpush1.msra.mxu0 %v21
  %173 = vmatprep.subr.mxu0 0.0
  %174 = vmatpush1.msra.mxu0 %v20
  %175 = vmatprep.subr.mxu0 0.0
  %176 = vmatpush1.msra.mxu0 %v19
  %177 = vmatprep.subr.mxu0 0.0
  %178 = vmatpush1.msra.mxu0 %v18
  %179 = vmatprep.subr.mxu0 0.0
  %180 = vmatpush1.msra.mxu0 %v17
  %181 = vmatprep.subr.mxu0 0.0
  %182 = vmatpush1.msra.mxu0 %v16
  %183 = vmatprep.subr.mxu0 0.0
  %184 = vmatpush1.msra.mxu0 %v15
  %185 = vmatprep.subr.mxu0 0.0
  %186 = vmatpush1.msra.mxu0 %v14
  %187 = vmatprep.subr.mxu0 0.0
  %188 = vmatpush2.msra.mxu0 %v45
  %189 = vmatprep.subr.mxu0 0.0
  %190 = vmatpush2.msra.mxu0 %v44
  %191 = vmatprep.subr.mxu0 0.0
  %192 = vmatpush2.msra.mxu0 %v43
  %193 = vmatprep.subr.mxu0 0.0
  %194 = vmatpush2.msra.mxu0 %v42
  %195 = vmatprep.subr.mxu0 0.0
  %196 = vmatpush2.msra.mxu0 %v41
  %197 = vmatprep.subr.mxu0 0.0
  %198 = vmatpush2.msra.mxu0 %v40
  %199 = vmatprep.subr.mxu0 0.0
  %200 = vmatpush2.msra.mxu0 %v39
  %201 = vmatprep.subr.mxu0 0.0
  %202 = vmatpush2.msra.mxu0 %v38
  %203 = vmatprep.subr.mxu0 0.0
  %204 = vmatpush2.msra.mxu0 %v37
  %205 = vmatprep.subr.mxu0 0.0
  %206 = vmatpush2.msra.mxu0 %v36
  %207 = vmatprep.subr.mxu0 0.0
  %208 = vmatpush2.msra.mxu0 %v35
  %209 = vmatprep.subr.mxu0 0.0
  %210 = vmatpush2.msra.mxu0 %v34
  %211 = vmatprep.subr.mxu0 0.0
  %212 = vmatpush2.msra.mxu0 %v33
  %213 = vmatprep.subr.mxu0 0.0
  %214 = vmatpush2.msra.mxu0 %v32
  %215 = vmatprep.subr.mxu0 0.0
  %216 = vmatpush2.msra.mxu0 %v31
  %217 = vmatprep.subr.mxu0 0.0
  %218 = vmatpush2.msra.mxu0 %v30
  %219 = vmatprep.mubr.f32.mxu0 %v115
  %220 = vmatmul.mubr.f32.gmra.mxu0 %v114
  %v221 = vpop.f32.mrf.mxu0
  %v222 = vadd.f32 0.0, %v221
  %v223 = vpop.f32.mrf.mxu0
  %224 = vmatprep.mubr.f32.mxu0 %v122
  %225 = vmatmul.mubr.f32.gmra.mxu0 %v121
  %v226 = vpop.f32.mrf.mxu0
  %v227 = vadd.f32 0.0, %v226
  %v228 = vpop.f32.mrf.mxu0
  %229 = vmatprep.mubr.f32.mxu0 %v129
  %230 = vmatmul.mubr.f32.gmra.mxu0 %v128
  %v231 = vpop.f32.mrf.mxu0
  %v232 = vadd.f32 0.0, %v231
  %v233 = vpop.f32.mrf.mxu0
  %234 = vmatprep.mubr.f32.mxu0 %v136
  %235 = vmatmul.mubr.f32.gmra.mxu0 %v135
  %v236 = vpop.f32.mrf.mxu0
  %v237 = vadd.f32 0.0, %v236
  %v238 = vpop.f32.mrf.mxu0
  %239 = vdwg.mxu0
  %240 = vmatprep.subr.mxu0 0.0
  %241 = vmatpush1.msra.mxu0 %v61
  %242 = vmatprep.subr.mxu0 0.0
  %243 = vmatpush1.msra.mxu0 %v60
  %244 = vmatprep.subr.mxu0 0.0
  %245 = vmatpush1.msra.mxu0 %v59
  %246 = vmatprep.subr.mxu0 0.0
  %247 = vmatpush1.msra.mxu0 %v58
  %248 = vmatprep.subr.mxu0 0.0
  %249 = vmatpush1.msra.mxu0 %v57
  %250 = vmatprep.subr.mxu0 0.0
  %251 = vmatpush1.msra.mxu0 %v56
  %252 = vmatprep.subr.mxu0 0.0
  %253 = vmatpush1.msra.mxu0 %v55
  %254 = vmatprep.subr.mxu0 0.0
  %255 = vmatpush1.msra.mxu0 %v54
  %256 = vmatprep.subr.mxu0 0.0
  %257 = vmatpush1.msra.mxu0 %v53
  %258 = vmatprep.subr.mxu0 0.0
  %259 = vmatpush1.msra.mxu0 %v52
  %260 = vmatprep.subr.mxu0 0.0
  %261 = vmatpush1.msra.mxu0 %v51
  %262 = vmatprep.subr.mxu0 0.0
  %263 = vmatpush1.msra.mxu0 %v50
  %264 = vmatprep.subr.mxu0 0.0
  %265 = vmatpush1.msra.mxu0 %v49
  %266 = vmatprep.subr.mxu0 0.0
  %267 = vmatpush1.msra.mxu0 %v48
  %268 = vmatprep.subr.mxu0 0.0
  %269 = vmatpush1.msra.mxu0 %v47
  %270 = vmatprep.subr.mxu0 0.0
  %271 = vmatpush1.msra.mxu0 %v46
  %272 = vmatprep.subr.mxu0 0.0
  %273 = vmatpush2.msra.mxu0 %v77
  %274 = vmatprep.subr.mxu0 0.0
  %275 = vmatpush2.msra.mxu0 %v76
  %276 = vmatprep.subr.mxu0 0.0
  %277 = vmatpush2.msra.mxu0 %v75
  %278 = vmatprep.subr.mxu0 0.0
  %279 = vmatpush2.msra.mxu0 %v74
  %280 = vmatprep.subr.mxu0 0.0
  %281 = vmatpush2.msra.mxu0 %v73
  %282 = vmatprep.subr.mxu0 0.0
  %283 = vmatpush2.msra.mxu0 %v72
  %284 = vmatprep.subr.mxu0 0.0
  %285 = vmatpush2.msra.mxu0 %v71
  %286 = vmatprep.subr.mxu0 0.0
  %287 = vmatpush2.msra.mxu0 %v70
  %288 = vmatprep.subr.mxu0 0.0
  %289 = vmatpush2.msra.mxu0 %v69
  %290 = vmatprep.subr.mxu0 0.0
  %291 = vmatpush2.msra.mxu0 %v68
  %292 = vmatprep.subr.mxu0 0.0
  %293 = vmatpush2.msra.mxu0 %v67
  %294 = vmatprep.subr.mxu0 0.0
  %295 = vmatpush2.msra.mxu0 %v66
  %296 = vmatprep.subr.mxu0 0.0
  %297 = vmatpush2.msra.mxu0 %v65
  %298 = vmatprep.subr.mxu0 0.0
  %299 = vmatpush2.msra.mxu0 %v64
  %300 = vmatprep.subr.mxu0 0.0
  %301 = vmatpush2.msra.mxu0 %v63
  %302 = vmatprep.subr.mxu0 0.0
  %303 = vmatpush2.msra.mxu0 %v62
  %304 = vmatprep.mubr.f32.mxu0 %v117
  %305 = vmatmul.mubr.f32.gmra.mxu0 %v116
  %v306 = vpop.f32.mrf.mxu0
  %v307 = vadd.f32 %v222, %v306
  %v308 = vpop.f32.mrf.mxu0
  %309 = vmatprep.mubr.f32.mxu0 %v124
  %310 = vmatmul.mubr.f32.gmra.mxu0 %v123
  %v311 = vpop.f32.mrf.mxu0
  %v312 = vadd.f32 %v227, %v311
  %v313 = vpop.f32.mrf.mxu0
  %314 = vmatprep.mubr.f32.mxu0 %v131
  %315 = vmatmul.mubr.f32.gmra.mxu0 %v130
  %v316 = vpop.f32.mrf.mxu0
  %v317 = vadd.f32 %v232, %v316
  %v318 = vpop.f32.mrf.mxu0
  %319 = vmatprep.mubr.f32.mxu0 %v138
  %320 = vmatmul.mubr.f32.gmra.mxu0 %v137
  %v321 = vpop.f32.mrf.mxu0
  %v322 = vadd.f32 %v237, %v321
  %v323 = vpop.f32.mrf.mxu0
  %324 = vdwg.mxu0
  %325 = vmatprep.subr.mxu0 0.0
  %326 = vmatpush1.msra.mxu0 %v93
  %327 = vmatprep.subr.mxu0 0.0
  %328 = vmatpush1.msra.mxu0 %v92
  %329 = vmatprep.subr.mxu0 0.0
  %330 = vmatpush1.msra.mxu0 %v91
  %331 = vmatprep.subr.mxu0 0.0
  %332 = vmatpush1.msra.mxu0 %v90
  %333 = vmatprep.subr.mxu0 0.0
  %334 = vmatpush1.msra.mxu0 %v89
  %335 = vmatprep.subr.mxu0 0.0
  %336 = vmatpush1.msra.mxu0 %v88
  %337 = vmatprep.subr.mxu0 0.0
  %338 = vmatpush1.msra.mxu0 %v87
  %339 = vmatprep.subr.mxu0 0.0
  %340 = vmatpush1.msra.mxu0 %v86
  %341 = vmatprep.subr.mxu0 0.0
  %342 = vmatpush1.msra.mxu0 %v85
  %343 = vmatprep.subr.mxu0 0.0
  %344 = vmatpush1.msra.mxu0 %v84
  %345 = vmatprep.subr.mxu0 0.0
  %346 = vmatpush1.msra.mxu0 %v83
  %347 = vmatprep.subr.mxu0 0.0
  %348 = vmatpush1.msra.mxu0 %v82
  %349 = vmatprep.subr.mxu0 0.0
  %350 = vmatpush1.msra.mxu0 %v81
  %351 = vmatprep.subr.mxu0 0.0
  %352 = vmatpush1.msra.mxu0 %v80
  %353 = vmatprep.subr.mxu0 0.0
  %354 = vmatpush1.msra.mxu0 %v79
  %355 = vmatprep.subr.mxu0 0.0
  %356 = vmatpush1.msra.mxu0 %v78
  %357 = vmatprep.subr.mxu0 0.0
  %358 = vmatpush2.msra.mxu0 %v109
  %359 = vmatprep.subr.mxu0 0.0
  %360 = vmatpush2.msra.mxu0 %v108
  %361 = vmatprep.subr.mxu0 0.0
  %362 = vmatpush2.msra.mxu0 %v107
  %363 = vmatprep.subr.mxu0 0.0
  %364 = vmatpush2.msra.mxu0 %v106
  %365 = vmatprep.subr.mxu0 0.0
  %366 = vmatpush2.msra.mxu0 %v105
  %367 = vmatprep.subr.mxu0 0.0
  %368 = vmatpush2.msra.mxu0 %v104
  %369 = vmatprep.subr.mxu0 0.0
  %370 = vmatpush2.msra.mxu0 %v103
  %371 = vmatprep.subr.mxu0 0.0
  %372 = vmatpush2.msra.mxu0 %v102
  %373 = vmatprep.subr.mxu0 0.0
  %374 = vmatpush2.msra.mxu0 %v101
  %375 = vmatprep.subr.mxu0 0.0
  %376 = vmatpush2.msra.mxu0 %v100
  %377 = vmatprep.subr.mxu0 0.0
  %378 = vmatpush2.msra.mxu0 %v99
  %379 = vmatprep.subr.mxu0 0.0
  %380 = vmatpush2.msra.mxu0 %v98
  %381 = vmatprep.subr.mxu0 0.0
  %382 = vmatpush2.msra.mxu0 %v97
  %383 = vmatprep.subr.mxu0 0.0
  %384 = vmatpush2.msra.mxu0 %v96
  %385 = vmatprep.subr.mxu0 0.0
  %386 = vmatpush2.msra.mxu0 %v95
  %387 = vmatprep.subr.mxu0 0.0
  %388 = vmatpush2.msra.mxu0 %v94
  %389 = vmatprep.mubr.f32.mxu0 %v119
  %390 = vmatmul.mubr.f32.gmra.mxu0 %v118
  %v391 = vpop.f32.mrf.mxu0
  %v392 = vadd.f32 %v307, %v391
  %v393 = vpop.f32.mrf.mxu0
  %394 = vmatprep.mubr.f32.mxu0 %v126
  %395 = vmatmul.mubr.f32.gmra.mxu0 %v125
  %v396 = vpop.f32.mrf.mxu0
  %v397 = vadd.f32 %v312, %v396
  %v398 = vpop.f32.mrf.mxu0
  %399 = vmatprep.mubr.f32.mxu0 %v133
  %400 = vmatmul.mubr.f32.gmra.mxu0 %v132
  %v401 = vpop.f32.mrf.mxu0
  %v402 = vadd.f32 %v317, %v401
  %v403 = vpop.f32.mrf.mxu0
  %404 = vmatprep.mubr.f32.mxu0 %v140
  %405 = vmatmul.mubr.f32.gmra.mxu0 %v139
  %v406 = vpop.f32.mrf.mxu0
  %v407 = vadd.f32 %v322, %v406
  %v408 = vpop.f32.mrf.mxu0
  %409 = vdwg.mxu0
  %410 = vmatprep.subr.mxu0 0.0
  %411 = vmatpush1.msra.mxu0 0.0
  %412 = vmatprep.subr.mxu0 0.0
  %413 = vmatpush1.msra.mxu0 0.0
  %414 = vmatprep.subr.mxu0 0.0
  %415 = vmatpush1.msra.mxu0 0.0
  %416 = vmatprep.subr.mxu0 0.0
  %417 = vmatpush1.msra.mxu0 0.0
  %418 = vmatprep.subr.mxu0 0.0
  %419 = vmatpush1.msra.mxu0 0.0
  %420 = vmatprep.subr.mxu0 0.0
  %421 = vmatpush1.msra.mxu0 0.0
  %422 = vmatprep.subr.mxu0 0.0
  %423 = vmatpush1.msra.mxu0 0.0
  %424 = vmatprep.subr.mxu0 0.0
  %425 = vmatpush1.msra.mxu0 0.0
  %426 = vmatprep.subr.mxu0 0.0
  %427 = vmatpush1.msra.mxu0 0.0
  %428 = vmatprep.subr.mxu0 0.0
  %429 = vmatpush1.msra.mxu0 0.0
  %430 = vmatprep.subr.mxu0 0.0
  %431 = vmatpush1.msra.mxu0 0.0
  %432 = vmatprep.subr.mxu0 0.0
  %433 = vmatpush1.msra.mxu0 0.0
  %434 = vmatprep.subr.mxu0 0.0
  %435 = vmatpush1.msra.mxu0 %v113
  %436 = vmatprep.subr.mxu0 0.0
  %437 = vmatpush1.msra.mxu0 %v112
  %438 = vmatprep.subr.mxu0 0.0
  %439 = vmatpush1.msra.mxu0 %v111
  %440 = vmatprep.subr.mxu0 0.0
  %441 = vmatpush1.msra.mxu0 %v110
  %442 = vmatprep.subr.mxu0 0.0
  %443 = vmatpush2.msra.mxu0 0.0
  %444 = vmatprep.subr.mxu0 0.0
  %445 = vmatpush2.msra.mxu0 0.0
  %446 = vmatprep.subr.mxu0 0.0
  %447 = vmatpush2.msra.mxu0 0.0
  %448 = vmatprep.subr.mxu0 0.0
  %449 = vmatpush2.msra.mxu0 0.0
  %450 = vmatprep.subr.mxu0 0.0
  %451 = vmatpush2.msra.mxu0 0.0
  %452 = vmatprep.subr.mxu0 0.0
  %453 = vmatpush2.msra.mxu0 0.0
  %454 = vmatprep.subr.mxu0 0.0
  %455 = vmatpush2.msra.mxu0 0.0
  %456 = vmatprep.subr.mxu0 0.0
  %457 = vmatpush2.msra.mxu0 0.0
  %458 = vmatprep.subr.mxu0 0.0
  %459 = vmatpush2.msra.mxu0 0.0
  %460 = vmatprep.subr.mxu0 0.0
  %461 = vmatpush2.msra.mxu0 0.0
  %462 = vmatprep.subr.mxu0 0.0
  %463 = vmatpush2.msra.mxu0 0.0
  %464 = vmatprep.subr.mxu0 0.0
  %465 = vmatpush2.msra.mxu0 0.0
  %466 = vmatprep.subr.mxu0 0.0
  %467 = vmatpush2.msra.mxu0 0.0
  %468 = vmatprep.subr.mxu0 0.0
  %469 = vmatpush2.msra.mxu0 0.0
  %470 = vmatprep.subr.mxu0 0.0
  %471 = vmatpush2.msra.mxu0 0.0
  %472 = vmatprep.subr.mxu0 0.0
  %473 = vmatpush2.msra.mxu0 0.0
  %474 = vmatprep.mubr.f32.mxu0 0.0
  %475 = vmatmul.mubr.f32.gmra.mxu0 %v144
  %v476 = vpop.f32.mrf.mxu0
  %v477 = vadd.f32 %v392, %v476
  %v478 = vpop.f32.mrf.mxu0
  %479 = vmatprep.mubr.f32.mxu0 0.0
  %480 = vmatmul.mubr.f32.gmra.mxu0 %v147
  %v481 = vpop.f32.mrf.mxu0
  %v482 = vadd.f32 %v397, %v481
  %v483 = vpop.f32.mrf.mxu0
  %484 = vmatprep.mubr.f32.mxu0 0.0
  %485 = vmatmul.mubr.f32.gmra.mxu0 %v150
  %v486 = vpop.f32.mrf.mxu0
  %v487 = vadd.f32 %v402, %v486
  %v488 = vpop.f32.mrf.mxu0
  %489 = vmatprep.mubr.f32.mxu0 0.0
  %490 = vmatmul.mubr.f32.gmra.mxu0 %v153
  %v491 = vpop.f32.mrf.mxu0
  %v492 = vadd.f32 %v407, %v491
  %v493 = vpop.f32.mrf.mxu0
  %494 = vdwg.mxu0
  %s495 = scalar_lea.vmem %s0, 224
  %v496 = vld [vmem:[%s495] sm:$0xff]
  %v497 = vld [vmem:[%s495 + $0x8] sm:$0xff]
  %v498 = vld [vmem:[%s495 + $0x10] sm:$0xff]
  %v499 = vld [vmem:[%s495 + $0x18] sm:$0xff]
  %v500 = vld [vmem:[%s495 + $0x20] sm:$0xff]
  %v501 = vld [vmem:[%s495 + $0x28] sm:$0xff]
  %v502 = vld [vmem:[%s495 + $0x30] sm:$0xff]
  %v503 = vld [vmem:[%s495 + $0x38] sm:$0xff]
  %v504 = vld [vmem:[%s495 + $0x40] sm:$0xff]
  %v505 = vld [vmem:[%s495 + $0x48] sm:$0xff]
  %v506 = vld [vmem:[%s495 + $0x50] sm:$0xff]
  %v507 = vld [vmem:[%s495 + $0x58] sm:$0xff]
  %v508 = vld [vmem:[%s495 + $0x60] sm:$0xff]
  %v509 = vld [vmem:[%s495 + $0x68] sm:$0xff]
  %v510 = vld [vmem:[%s495 + $0x70] sm:$0xff]
  %v511 = vld [vmem:[%s495 + $0x78] sm:$0xff]
  %v512 = vld [vmem:[%s495 + $0x80] sm:$0xff]
  %v513 = vld [vmem:[%s495 + $0x88] sm:$0xff]
  %v514 = vld [vmem:[%s495 + $0x90] sm:$0xff]
  %v515 = vld [vmem:[%s495 + $0x98] sm:$0xff]
  %v516 = vld [vmem:[%s495 + $0xa0] sm:$0xff]
  %v517 = vld [vmem:[%s495 + $0xa8] sm:$0xff]
  %v518 = vld [vmem:[%s495 + $0xb0] sm:$0xff]
  %v519 = vld [vmem:[%s495 + $0xb8] sm:$0xff]
  %v520 = vld [vmem:[%s495 + $0xc0] sm:$0xff]
  %v521 = vld [vmem:[%s495 + $0xc8] sm:$0xff]
  %v522 = vld [vmem:[%s495 + $0xd0] sm:$0xff]
  %v523 = vld [vmem:[%s495 + $0xd8] sm:$0xff]
  %v525 = vsel %vm142, %v502, 0
  %v528 = vsel %vm142, %v509, 0
  %v531 = vsel %vm142, %v516, 0
  %v534 = vsel %vm142, %v523, 0
  %536 = vmatprep.subr.mxu0 0.0
  %537 = vmatpush1.msra.mxu0 %v29
  %538 = vmatprep.subr.mxu0 0.0
  %539 = vmatpush1.msra.mxu0 %v28
  %540 = vmatprep.subr.mxu0 0.0
  %541 = vmatpush1.msra.mxu0 %v27
  %542 = vmatprep.subr.mxu0 0.0
  %543 = vmatpush1.msra.mxu0 %v26
  %544 = vmatprep.subr.mxu0 0.0
  %545 = vmatpush1.msra.mxu0 %v25
  %546 = vmatprep.subr.mxu0 0.0
  %547 = vmatpush1.msra.mxu0 %v24
  %548 = vmatprep.subr.mxu0 0.0
  %549 = vmatpush1.msra.mxu0 %v23
  %550 = vmatprep.subr.mxu0 0.0
  %551 = vmatpush1.msra.mxu0 %v22
  %552 = vmatprep.subr.mxu0 0.0
  %553 = vmatpush1.msra.mxu0 %v21
  %554 = vmatprep.subr.mxu0 0.0
  %555 = vmatpush1.msra.mxu0 %v20
  %556 = vmatprep.subr.mxu0 0.0
  %557 = vmatpush1.msra.mxu0 %v19
  %558 = vmatprep.subr.mxu0 0.0
  %559 = vmatpush1.msra.mxu0 %v18
  %560 = vmatprep.subr.mxu0 0.0
  %561 = vmatpush1.msra.mxu0 %v17
  %562 = vmatprep.subr.mxu0 0.0
  %563 = vmatpush1.msra.mxu0 %v16
  %564 = vmatprep.subr.mxu0 0.0
  %565 = vmatpush1.msra.mxu0 %v15
  %566 = vmatprep.subr.mxu0 0.0
  %567 = vmatpush1.msra.mxu0 %v14
  %568 = vmatprep.subr.mxu0 0.0
  %569 = vmatpush2.msra.mxu0 %v45
  %570 = vmatprep.subr.mxu0 0.0
  %571 = vmatpush2.msra.mxu0 %v44
  %572 = vmatprep.subr.mxu0 0.0
  %573 = vmatpush2.msra.mxu0 %v43
  %574 = vmatprep.subr.mxu0 0.0
  %575 = vmatpush2.msra.mxu0 %v42
  %576 = vmatprep.subr.mxu0 0.0
  %577 = vmatpush2.msra.mxu0 %v41
  %578 = vmatprep.subr.mxu0 0.0
  %579 = vmatpush2.msra.mxu0 %v40
  %580 = vmatprep.subr.mxu0 0.0
  %581 = vmatpush2.msra.mxu0 %v39
  %582 = vmatprep.subr.mxu0 0.0
  %583 = vmatpush2.msra.mxu0 %v38
  %584 = vmatprep.subr.mxu0 0.0
  %585 = vmatpush2.msra.mxu0 %v37
  %586 = vmatprep.subr.mxu0 0.0
  %587 = vmatpush2.msra.mxu0 %v36
  %588 = vmatprep.subr.mxu0 0.0
  %589 = vmatpush2.msra.mxu0 %v35
  %590 = vmatprep.subr.mxu0 0.0
  %591 = vmatpush2.msra.mxu0 %v34
  %592 = vmatprep.subr.mxu0 0.0
  %593 = vmatpush2.msra.mxu0 %v33
  %594 = vmatprep.subr.mxu0 0.0
  %595 = vmatpush2.msra.mxu0 %v32
  %596 = vmatprep.subr.mxu0 0.0
  %597 = vmatpush2.msra.mxu0 %v31
  %598 = vmatprep.subr.mxu0 0.0
  %599 = vmatpush2.msra.mxu0 %v30
  %600 = vmatprep.mubr.f32.mxu0 %v497
  %601 = vmatmul.mubr.f32.gmra.mxu0 %v496
  %v602 = vpop.f32.mrf.mxu0
  %v603 = vadd.f32 0.0, %v602
  %v604 = vpop.f32.mrf.mxu0
  %605 = vmatprep.mubr.f32.mxu0 %v504
  %606 = vmatmul.mubr.f32.gmra.mxu0 %v503
  %v607 = vpop.f32.mrf.mxu0
  %v608 = vadd.f32 0.0, %v607
  %v609 = vpop.f32.mrf.mxu0
  %610 = vmatprep.mubr.f32.mxu0 %v511
  %611 = vmatmul.mubr.f32.gmra.mxu0 %v510
  %v612 = vpop.f32.mrf.mxu0
  %v613 = vadd.f32 0.0, %v612
  %v614 = vpop.f32.mrf.mxu0
  %615 = vmatprep.mubr.f32.mxu0 %v518
  %616 = vmatmul.mubr.f32.gmra.mxu0 %v517
  %v617 = vpop.f32.mrf.mxu0
  %v618 = vadd.f32 0.0, %v617
  %v619 = vpop.f32.mrf.mxu0
  %620 = vdwg.mxu0
  %621 = vmatprep.subr.mxu0 0.0
  %622 = vmatpush1.msra.mxu0 %v61
  %623 = vmatprep.subr.mxu0 0.0
  %624 = vmatpush1.msra.mxu0 %v60
  %625 = vmatprep.subr.mxu0 0.0
  %626 = vmatpush1.msra.mxu0 %v59
  %627 = vmatprep.subr.mxu0 0.0
  %628 = vmatpush1.msra.mxu0 %v58
  %629 = vmatprep.subr.mxu0 0.0
  %630 = vmatpush1.msra.mxu0 %v57
  %631 = vmatprep.subr.mxu0 0.0
  %632 = vmatpush1.msra.mxu0 %v56
  %633 = vmatprep.subr.mxu0 0.0
  %634 = vmatpush1.msra.mxu0 %v55
  %635 = vmatprep.subr.mxu0 0.0
  %636 = vmatpush1.msra.mxu0 %v54
  %637 = vmatprep.subr.mxu0 0.0
  %638 = vmatpush1.msra.mxu0 %v53
  %639 = vmatprep.subr.mxu0 0.0
  %640 = vmatpush1.msra.mxu0 %v52
  %641 = vmatprep.subr.mxu0 0.0
  %642 = vmatpush1.msra.mxu0 %v51
  %643 = vmatprep.subr.mxu0 0.0
  %644 = vmatpush1.msra.mxu0 %v50
  %645 = vmatprep.subr.mxu0 0.0
  %646 = vmatpush1.msra.mxu0 %v49
  %647 = vmatprep.subr.mxu0 0.0
  %648 = vmatpush1.msra.mxu0 %v48
  %649 = vmatprep.subr.mxu0 0.0
  %650 = vmatpush1.msra.mxu0 %v47
  %651 = vmatprep.subr.mxu0 0.0
  %652 = vmatpush1.msra.mxu0 %v46
  %653 = vmatprep.subr.mxu0 0.0
  %654 = vmatpush2.msra.mxu0 %v77
  %655 = vmatprep.subr.mxu0 0.0
  %656 = vmatpush2.msra.mxu0 %v76
  %657 = vmatprep.subr.mxu0 0.0
  %658 = vmatpush2.msra.mxu0 %v75
  %659 = vmatprep.subr.mxu0 0.0
  %660 = vmatpush2.msra.mxu0 %v74
  %661 = vmatprep.subr.mxu0 0.0
  %662 = vmatpush2.msra.mxu0 %v73
  %663 = vmatprep.subr.mxu0 0.0
  %664 = vmatpush2.msra.mxu0 %v72
  %665 = vmatprep.subr.mxu0 0.0
  %666 = vmatpush2.msra.mxu0 %v71
  %667 = vmatprep.subr.mxu0 0.0
  %668 = vmatpush2.msra.mxu0 %v70
  %669 = vmatprep.subr.mxu0 0.0
  %670 = vmatpush2.msra.mxu0 %v69
  %671 = vmatprep.subr.mxu0 0.0
  %672 = vmatpush2.msra.mxu0 %v68
  %673 = vmatprep.subr.mxu0 0.0
  %674 = vmatpush2.msra.mxu0 %v67
  %675 = vmatprep.subr.mxu0 0.0
  %676 = vmatpush2.msra.mxu0 %v66
  %677 = vmatprep.subr.mxu0 0.0
  %678 = vmatpush2.msra.mxu0 %v65
  %679 = vmatprep.subr.mxu0 0.0
  %680 = vmatpush2.msra.mxu0 %v64
  %681 = vmatprep.subr.mxu0 0.0
  %682 = vmatpush2.msra.mxu0 %v63
  %683 = vmatprep.subr.mxu0 0.0
  %684 = vmatpush2.msra.mxu0 %v62
  %685 = vmatprep.mubr.f32.mxu0 %v499
  %686 = vmatmul.mubr.f32.gmra.mxu0 %v498
  %v687 = vpop.f32.mrf.mxu0
  %v688 = vadd.f32 %v603, %v687
  %v689 = vpop.f32.mrf.mxu0
  %690 = vmatprep.mubr.f32.mxu0 %v506
  %691 = vmatmul.mubr.f32.gmra.mxu0 %v505
  %v692 = vpop.f32.mrf.mxu0
  %v693 = vadd.f32 %v608, %v692
  %v694 = vpop.f32.mrf.mxu0
  %695 = vmatprep.mubr.f32.mxu0 %v513
  %696 = vmatmul.mubr.f32.gmra.mxu0 %v512
  %v697 = vpop.f32.mrf.mxu0
  %v698 = vadd.f32 %v613, %v697
  %v699 = vpop.f32.mrf.mxu0
  %700 = vmatprep.mubr.f32.mxu0 %v520
  %701 = vmatmul.mubr.f32.gmra.mxu0 %v519
  %v702 = vpop.f32.mrf.mxu0
  %v703 = vadd.f32 %v618, %v702
  %v704 = vpop.f32.mrf.mxu0
  %705 = vdwg.mxu0
  %706 = vmatprep.subr.mxu0 0.0
  %707 = vmatpush1.msra.mxu0 %v93
  %708 = vmatprep.subr.mxu0 0.0
  %709 = vmatpush1.msra.mxu0 %v92
  %710 = vmatprep.subr.mxu0 0.0
  %711 = vmatpush1.msra.mxu0 %v91
  %712 = vmatprep.subr.mxu0 0.0
  %713 = vmatpush1.msra.mxu0 %v90
  %714 = vmatprep.subr.mxu0 0.0
  %715 = vmatpush1.msra.mxu0 %v89
  %716 = vmatprep.subr.mxu0 0.0
  %717 = vmatpush1.msra.mxu0 %v88
  %718 = vmatprep.subr.mxu0 0.0
  %719 = vmatpush1.msra.mxu0 %v87
  %720 = vmatprep.subr.mxu0 0.0
  %721 = vmatpush1.msra.mxu0 %v86
  %722 = vmatprep.subr.mxu0 0.0
  %723 = vmatpush1.msra.mxu0 %v85
  %724 = vmatprep.subr.mxu0 0.0
  %725 = vmatpush1.msra.mxu0 %v84
  %726 = vmatprep.subr.mxu0 0.0
  %727 = vmatpush1.msra.mxu0 %v83
  %728 = vmatprep.subr.mxu0 0.0
  %729 = vmatpush1.msra.mxu0 %v82
  %730 = vmatprep.subr.mxu0 0.0
  %731 = vmatpush1.msra.mxu0 %v81
  %732 = vmatprep.subr.mxu0 0.0
  %733 = vmatpush1.msra.mxu0 %v80
  %734 = vmatprep.subr.mxu0 0.0
  %735 = vmatpush1.msra.mxu0 %v79
  %736 = vmatprep.subr.mxu0 0.0
  %737 = vmatpush1.msra.mxu0 %v78
  %738 = vmatprep.subr.mxu0 0.0
  %739 = vmatpush2.msra.mxu0 %v109
  %740 = vmatprep.subr.mxu0 0.0
  %741 = vmatpush2.msra.mxu0 %v108
  %742 = vmatprep.subr.mxu0 0.0
  %743 = vmatpush2.msra.mxu0 %v107
  %744 = vmatprep.subr.mxu0 0.0
  %745 = vmatpush2.msra.mxu0 %v106
  %746 = vmatprep.subr.mxu0 0.0
  %747 = vmatpush2.msra.mxu0 %v105
  %748 = vmatprep.subr.mxu0 0.0
  %749 = vmatpush2.msra.mxu0 %v104
  %750 = vmatprep.subr.mxu0 0.0
  %751 = vmatpush2.msra.mxu0 %v103
  %752 = vmatprep.subr.mxu0 0.0
  %753 = vmatpush2.msra.mxu0 %v102
  %754 = vmatprep.subr.mxu0 0.0
  %755 = vmatpush2.msra.mxu0 %v101
  %756 = vmatprep.subr.mxu0 0.0
  %757 = vmatpush2.msra.mxu0 %v100
  %758 = vmatprep.subr.mxu0 0.0
  %759 = vmatpush2.msra.mxu0 %v99
  %760 = vmatprep.subr.mxu0 0.0
  %761 = vmatpush2.msra.mxu0 %v98
  %762 = vmatprep.subr.mxu0 0.0
  %763 = vmatpush2.msra.mxu0 %v97
  %764 = vmatprep.subr.mxu0 0.0
  %765 = vmatpush2.msra.mxu0 %v96
  %766 = vmatprep.subr.mxu0 0.0
  %767 = vmatpush2.msra.mxu0 %v95
  %768 = vmatprep.subr.mxu0 0.0
  %769 = vmatpush2.msra.mxu0 %v94
  %770 = vmatprep.mubr.f32.mxu0 %v501
  %771 = vmatmul.mubr.f32.gmra.mxu0 %v500
  %v772 = vpop.f32.mrf.mxu0
  %v773 = vadd.f32 %v688, %v772
  %v774 = vpop.f32.mrf.mxu0
  %775 = vmatprep.mubr.f32.mxu0 %v508
  %776 = vmatmul.mubr.f32.gmra.mxu0 %v507
  %v777 = vpop.f32.mrf.mxu0
  %v778 = vadd.f32 %v693, %v777
  %v779 = vpop.f32.mrf.mxu0
  %780 = vmatprep.mubr.f32.mxu0 %v515
  %781 = vmatmul.mubr.f32.gmra.mxu0 %v514
  %v782 = vpop.f32.mrf.mxu0
  %v783 = vadd.f32 %v698, %v782
  %v784 = vpop.f32.mrf.mxu0
  %785 = vmatprep.mubr.f32.mxu0 %v522
  %786 = vmatmul.mubr.f32.gmra.mxu0 %v521
  %v787 = vpop.f32.mrf.mxu0
  %v788 = vadd.f32 %v703, %v787
  %v789 = vpop.f32.mrf.mxu0
  %790 = vdwg.mxu0
  %791 = vmatprep.subr.mxu0 0.0
  %792 = vmatpush1.msra.mxu0 0.0
  %793 = vmatprep.subr.mxu0 0.0
  %794 = vmatpush1.msra.mxu0 0.0
  %795 = vmatprep.subr.mxu0 0.0
  %796 = vmatpush1.msra.mxu0 0.0
  %797 = vmatprep.subr.mxu0 0.0
  %798 = vmatpush1.msra.mxu0 0.0
  %799 = vmatprep.subr.mxu0 0.0
  %800 = vmatpush1.msra.mxu0 0.0
  %801 = vmatprep.subr.mxu0 0.0
  %802 = vmatpush1.msra.mxu0 0.0
  %803 = vmatprep.subr.mxu0 0.0
  %804 = vmatpush1.msra.mxu0 0.0
  %805 = vmatprep.subr.mxu0 0.0
  %806 = vmatpush1.msra.mxu0 0.0
  %807 = vmatprep.subr.mxu0 0.0
  %808 = vmatpush1.msra.mxu0 0.0
  %809 = vmatprep.subr.mxu0 0.0
  %810 = vmatpush1.msra.mxu0 0.0
  %811 = vmatprep.subr.mxu0 0.0
  %812 = vmatpush1.msra.mxu0 0.0
  %813 = vmatprep.subr.mxu0 0.0
  %814 = vmatpush1.msra.mxu0 0.0
  %815 = vmatprep.subr.mxu0 0.0
  %816 = vmatpush1.msra.mxu0 %v113
  %817 = vmatprep.subr.mxu0 0.0
  %818 = vmatpush1.msra.mxu0 %v112
  %819 = vmatprep.subr.mxu0 0.0
  %820 = vmatpush1.msra.mxu0 %v111
  %821 = vmatprep.subr.mxu0 0.0
  %822 = vmatpush1.msra.mxu0 %v110
  %823 = vmatprep.subr.mxu0 0.0
  %824 = vmatpush2.msra.mxu0 0.0
  %825 = vmatprep.subr.mxu0 0.0
  %826 = vmatpush2.msra.mxu0 0.0
  %827 = vmatprep.subr.mxu0 0.0
  %828 = vmatpush2.msra.mxu0 0.0
  %829 = vmatprep.subr.mxu0 0.0
  %830 = vmatpush2.msra.mxu0 0.0
  %831 = vmatprep.subr.mxu0 0.0
  %832 = vmatpush2.msra.mxu0 0.0
  %833 = vmatprep.subr.mxu0 0.0
  %834 = vmatpush2.msra.mxu0 0.0
  %835 = vmatprep.subr.mxu0 0.0
  %836 = vmatpush2.msra.mxu0 0.0
  %837 = vmatprep.subr.mxu0 0.0
  %838 = vmatpush2.msra.mxu0 0.0
  %839 = vmatprep.subr.mxu0 0.0
  %840 = vmatpush2.msra.mxu0 0.0
  %841 = vmatprep.subr.mxu0 0.0
  %842 = vmatpush2.msra.mxu0 0.0
  %843 = vmatprep.subr.mxu0 0.0
  %844 = vmatpush2.msra.mxu0 0.0
  %845 = vmatprep.subr.mxu0 0.0
  %846 = vmatpush2.msra.mxu0 0.0
  %847 = vmatprep.subr.mxu0 0.0
  %848 = vmatpush2.msra.mxu0 0.0
  %849 = vmatprep.subr.mxu0 0.0
  %850 = vmatpush2.msra.mxu0 0.0
  %851 = vmatprep.subr.mxu0 0.0
  %852 = vmatpush2.msra.mxu0 0.0
  %853 = vmatprep.subr.mxu0 0.0
  %854 = vmatpush2.msra.mxu0 0.0
  %855 = vmatprep.mubr.f32.mxu0 0.0
  %856 = vmatmul.mubr.f32.gmra.mxu0 %v525
  %v857 = vpop.f32.mrf.mxu0
  %v858 = vadd.f32 %v773, %v857
  %v859 = vpop.f32.mrf.mxu0
  %860 = vmatprep.mubr.f32.mxu0 0.0
  %861 = vmatmul.mubr.f32.gmra.mxu0 %v528
  %v862 = vpop.f32.mrf.mxu0
  %v863 = vadd.f32 %v778, %v862
  %v864 = vpop.f32.mrf.mxu0
  %865 = vmatprep.mubr.f32.mxu0 0.0
  %866 = vmatmul.mubr.f32.gmra.mxu0 %v531
  %v867 = vpop.f32.mrf.mxu0
  %v868 = vadd.f32 %v783, %v867
  %v869 = vpop.f32.mrf.mxu0
  %870 = vmatprep.mubr.f32.mxu0 0.0
  %871 = vmatmul.mubr.f32.gmra.mxu0 %v534
  %v872 = vpop.f32.mrf.mxu0
  %v873 = vadd.f32 %v788, %v872
  %v874 = vpop.f32.mrf.mxu0
  %875 = vdwg.mxu0
  %v876 = vmax.f32 %v477, %v858
  %v877 = vmax.f32 %v482, %v863
  %v878 = vmax.f32 %v487, %v868
  %v879 = vmax.f32 %v492, %v873
  %s880 = scalar_lea.vmem %s0, 448
  %v881 = vld [vmem:[%s880] sm:$0xff]
  %v882 = vld [vmem:[%s880 + $0x8] sm:$0xff]
  %v883 = vld [vmem:[%s880 + $0x10] sm:$0xff]
  %v884 = vld [vmem:[%s880 + $0x18] sm:$0xff]
  %v885 = vld [vmem:[%s880 + $0x20] sm:$0xff]
  %v886 = vld [vmem:[%s880 + $0x28] sm:$0xff]
  %v887 = vld [vmem:[%s880 + $0x30] sm:$0xff]
  %v888 = vld [vmem:[%s880 + $0x38] sm:$0xff]
  %v889 = vld [vmem:[%s880 + $0x40] sm:$0xff]
  %v890 = vld [vmem:[%s880 + $0x48] sm:$0xff]
  %v891 = vld [vmem:[%s880 + $0x50] sm:$0xff]
  %v892 = vld [vmem:[%s880 + $0x58] sm:$0xff]
  %v893 = vld [vmem:[%s880 + $0x60] sm:$0xff]
  %v894 = vld [vmem:[%s880 + $0x68] sm:$0xff]
  %v895 = vld [vmem:[%s880 + $0x70] sm:$0xff]
  %v896 = vld [vmem:[%s880 + $0x78] sm:$0xff]
  %v897 = vld [vmem:[%s880 + $0x80] sm:$0xff]
  %v898 = vld [vmem:[%s880 + $0x88] sm:$0xff]
  %v899 = vld [vmem:[%s880 + $0x90] sm:$0xff]
  %v900 = vld [vmem:[%s880 + $0x98] sm:$0xff]
  %v901 = vld [vmem:[%s880 + $0xa0] sm:$0xff]
  %v902 = vld [vmem:[%s880 + $0xa8] sm:$0xff]
  %v903 = vld [vmem:[%s880 + $0xb0] sm:$0xff]
  %v904 = vld [vmem:[%s880 + $0xb8] sm:$0xff]
  %v905 = vld [vmem:[%s880 + $0xc0] sm:$0xff]
  %v906 = vld [vmem:[%s880 + $0xc8] sm:$0xff]
  %v907 = vld [vmem:[%s880 + $0xd0] sm:$0xff]
  %v908 = vld [vmem:[%s880 + $0xd8] sm:$0xff]
  %v910 = vsel %vm142, %v887, 0
  %v913 = vsel %vm142, %v894, 0
  %v916 = vsel %vm142, %v901, 0
  %v919 = vsel %vm142, %v908, 0
  %921 = vmatprep.subr.mxu0 0.0
  %922 = vmatpush1.msra.mxu0 %v29
  %923 = vmatprep.subr.mxu0 0.0
  %924 = vmatpush1.msra.mxu0 %v28
  %925 = vmatprep.subr.mxu0 0.0
  %926 = vmatpush1.msra.mxu0 %v27
  %927 = vmatprep.subr.mxu0 0.0
  %928 = vmatpush1.msra.mxu0 %v26
  %929 = vmatprep.subr.mxu0 0.0
  %930 = vmatpush1.msra.mxu0 %v25
  %931 = vmatprep.subr.mxu0 0.0
  %932 = vmatpush1.msra.mxu0 %v24
  %933 = vmatprep.subr.mxu0 0.0
  %934 = vmatpush1.msra.mxu0 %v23
  %935 = vmatprep.subr.mxu0 0.0
  %936 = vmatpush1.msra.mxu0 %v22
  %937 = vmatprep.subr.mxu0 0.0
  %938 = vmatpush1.msra.mxu0 %v21
  %939 = vmatprep.subr.mxu0 0.0
  %940 = vmatpush1.msra.mxu0 %v20
  %941 = vmatprep.subr.mxu0 0.0
  %942 = vmatpush1.msra.mxu0 %v19
  %943 = vmatprep.subr.mxu0 0.0
  %944 = vmatpush1.msra.mxu0 %v18
  %945 = vmatprep.subr.mxu0 0.0
  %946 = vmatpush1.msra.mxu0 %v17
  %947 = vmatprep.subr.mxu0 0.0
  %948 = vmatpush1.msra.mxu0 %v16
  %949 = vmatprep.subr.mxu0 0.0
  %950 = vmatpush1.msra.mxu0 %v15
  %951 = vmatprep.subr.mxu0 0.0
  %952 = vmatpush1.msra.mxu0 %v14
  %953 = vmatprep.subr.mxu0 0.0
  %954 = vmatpush2.msra.mxu0 %v45
  %955 = vmatprep.subr.mxu0 0.0
  %956 = vmatpush2.msra.mxu0 %v44
  %957 = vmatprep.subr.mxu0 0.0
  %958 = vmatpush2.msra.mxu0 %v43
  %959 = vmatprep.subr.mxu0 0.0
  %960 = vmatpush2.msra.mxu0 %v42
  %961 = vmatprep.subr.mxu0 0.0
  %962 = vmatpush2.msra.mxu0 %v41
  %963 = vmatprep.subr.mxu0 0.0
  %964 = vmatpush2.msra.mxu0 %v40
  %965 = vmatprep.subr.mxu0 0.0
  %966 = vmatpush2.msra.mxu0 %v39
  %967 = vmatprep.subr.mxu0 0.0
  %968 = vmatpush2.msra.mxu0 %v38
  %969 = vmatprep.subr.mxu0 0.0
  %970 = vmatpush2.msra.mxu0 %v37
  %971 = vmatprep.subr.mxu0 0.0
  %972 = vmatpush2.msra.mxu0 %v36
  %973 = vmatprep.subr.mxu0 0.0
  %974 = vmatpush2.msra.mxu0 %v35
  %975 = vmatprep.subr.mxu0 0.0
  %976 = vmatpush2.msra.mxu0 %v34
  %977 = vmatprep.subr.mxu0 0.0
  %978 = vmatpush2.msra.mxu0 %v33
  %979 = vmatprep.subr.mxu0 0.0
  %980 = vmatpush2.msra.mxu0 %v32
  %981 = vmatprep.subr.mxu0 0.0
  %982 = vmatpush2.msra.mxu0 %v31
  %983 = vmatprep.subr.mxu0 0.0
  %984 = vmatpush2.msra.mxu0 %v30
  %985 = vmatprep.mubr.f32.mxu0 %v882
  %986 = vmatmul.mubr.f32.gmra.mxu0 %v881
  %v987 = vpop.f32.mrf.mxu0
  %v988 = vadd.f32 0.0, %v987
  %v989 = vpop.f32.mrf.mxu0
  %990 = vmatprep.mubr.f32.mxu0 %v889
  %991 = vmatmul.mubr.f32.gmra.mxu0 %v888
  %v992 = vpop.f32.mrf.mxu0
  %v993 = vadd.f32 0.0, %v992
  %v994 = vpop.f32.mrf.mxu0
  %995 = vmatprep.mubr.f32.mxu0 %v896
  %996 = vmatmul.mubr.f32.gmra.mxu0 %v895
  %v997 = vpop.f32.mrf.mxu0
  %v998 = vadd.f32 0.0, %v997
  %v999 = vpop.f32.mrf.mxu0
  %1000 = vmatprep.mubr.f32.mxu0 %v903
  %1001 = vmatmul.mubr.f32.gmra.mxu0 %v902
  %v1002 = vpop.f32.mrf.mxu0
  %v1003 = vadd.f32 0.0, %v1002
  %v1004 = vpop.f32.mrf.mxu0
  %1005 = vdwg.mxu0
  %1006 = vmatprep.subr.mxu0 0.0
  %1007 = vmatpush1.msra.mxu0 %v61
  %1008 = vmatprep.subr.mxu0 0.0
  %1009 = vmatpush1.msra.mxu0 %v60
  %1010 = vmatprep.subr.mxu0 0.0
  %1011 = vmatpush1.msra.mxu0 %v59
  %1012 = vmatprep.subr.mxu0 0.0
  %1013 = vmatpush1.msra.mxu0 %v58
  %1014 = vmatprep.subr.mxu0 0.0
  %1015 = vmatpush1.msra.mxu0 %v57
  %1016 = vmatprep.subr.mxu0 0.0
  %1017 = vmatpush1.msra.mxu0 %v56
  %1018 = vmatprep.subr.mxu0 0.0
  %1019 = vmatpush1.msra.mxu0 %v55
  %1020 = vmatprep.subr.mxu0 0.0
  %1021 = vmatpush1.msra.mxu0 %v54
  %1022 = vmatprep.subr.mxu0 0.0
  %1023 = vmatpush1.msra.mxu0 %v53
  %1024 = vmatprep.subr.mxu0 0.0
  %1025 = vmatpush1.msra.mxu0 %v52
  %1026 = vmatprep.subr.mxu0 0.0
  %1027 = vmatpush1.msra.mxu0 %v51
  %1028 = vmatprep.subr.mxu0 0.0
  %1029 = vmatpush1.msra.mxu0 %v50
  %1030 = vmatprep.subr.mxu0 0.0
  %1031 = vmatpush1.msra.mxu0 %v49
  %1032 = vmatprep.subr.mxu0 0.0
  %1033 = vmatpush1.msra.mxu0 %v48
  %1034 = vmatprep.subr.mxu0 0.0
  %1035 = vmatpush1.msra.mxu0 %v47
  %1036 = vmatprep.subr.mxu0 0.0
  %1037 = vmatpush1.msra.mxu0 %v46
  %1038 = vmatprep.subr.mxu0 0.0
  %1039 = vmatpush2.msra.mxu0 %v77
  %1040 = vmatprep.subr.mxu0 0.0
  %1041 = vmatpush2.msra.mxu0 %v76
  %1042 = vmatprep.subr.mxu0 0.0
  %1043 = vmatpush2.msra.mxu0 %v75
  %1044 = vmatprep.subr.mxu0 0.0
  %1045 = vmatpush2.msra.mxu0 %v74
  %1046 = vmatprep.subr.mxu0 0.0
  %1047 = vmatpush2.msra.mxu0 %v73
  %1048 = vmatprep.subr.mxu0 0.0
  %1049 = vmatpush2.msra.mxu0 %v72
  %1050 = vmatprep.subr.mxu0 0.0
  %1051 = vmatpush2.msra.mxu0 %v71
  %1052 = vmatprep.subr.mxu0 0.0
  %1053 = vmatpush2.msra.mxu0 %v70
  %1054 = vmatprep.subr.mxu0 0.0
  %1055 = vmatpush2.msra.mxu0 %v69
  %1056 = vmatprep.subr.mxu0 0.0
  %1057 = vmatpush2.msra.mxu0 %v68
  %1058 = vmatprep.subr.mxu0 0.0
  %1059 = vmatpush2.msra.mxu0 %v67
  %1060 = vmatprep.subr.mxu0 0.0
  %1061 = vmatpush2.msra.mxu0 %v66
  %1062 = vmatprep.subr.mxu0 0.0
  %1063 = vmatpush2.msra.mxu0 %v65
  %1064 = vmatprep.subr.mxu0 0.0
  %1065 = vmatpush2.msra.mxu0 %v64
  %1066 = vmatprep.subr.mxu0 0.0
  %1067 = vmatpush2.msra.mxu0 %v63
  %1068 = vmatprep.subr.mxu0 0.0
  %1069 = vmatpush2.msra.mxu0 %v62
  %1070 = vmatprep.mubr.f32.mxu0 %v884
  %1071 = vmatmul.mubr.f32.gmra.mxu0 %v883
  %v1072 = vpop.f32.mrf.mxu0
  %v1073 = vadd.f32 %v988, %v1072
  %v1074 = vpop.f32.mrf.mxu0
  %1075 = vmatprep.mubr.f32.mxu0 %v891
  %1076 = vmatmul.mubr.f32.gmra.mxu0 %v890
  %v1077 = vpop.f32.mrf.mxu0
  %v1078 = vadd.f32 %v993, %v1077
  %v1079 = vpop.f32.mrf.mxu0
  %1080 = vmatprep.mubr.f32.mxu0 %v898
  %1081 = vmatmul.mubr.f32.gmra.mxu0 %v897
  %v1082 = vpop.f32.mrf.mxu0
  %v1083 = vadd.f32 %v998, %v1082
  %v1084 = vpop.f32.mrf.mxu0
  %1085 = vmatprep.mubr.f32.mxu0 %v905
  %1086 = vmatmul.mubr.f32.gmra.mxu0 %v904
  %v1087 = vpop.f32.mrf.mxu0
  %v1088 = vadd.f32 %v1003, %v1087
  %v1089 = vpop.f32.mrf.mxu0
  %1090 = vdwg.mxu0
  %1091 = vmatprep.subr.mxu0 0.0
  %1092 = vmatpush1.msra.mxu0 %v93
  %1093 = vmatprep.subr.mxu0 0.0
  %1094 = vmatpush1.msra.mxu0 %v92
  %1095 = vmatprep.subr.mxu0 0.0
  %1096 = vmatpush1.msra.mxu0 %v91
  %1097 = vmatprep.subr.mxu0 0.0
  %1098 = vmatpush1.msra.mxu0 %v90
  %1099 = vmatprep.subr.mxu0 0.0
  %1100 = vmatpush1.msra.mxu0 %v89
  %1101 = vmatprep.subr.mxu0 0.0
  %1102 = vmatpush1.msra.mxu0 %v88
  %1103 = vmatprep.subr.mxu0 0.0
  %1104 = vmatpush1.msra.mxu0 %v87
  %1105 = vmatprep.subr.mxu0 0.0
  %1106 = vmatpush1.msra.mxu0 %v86
  %1107 = vmatprep.subr.mxu0 0.0
  %1108 = vmatpush1.msra.mxu0 %v85
  %1109 = vmatprep.subr.mxu0 0.0
  %1110 = vmatpush1.msra.mxu0 %v84
  %1111 = vmatprep.subr.mxu0 0.0
  %1112 = vmatpush1.msra.mxu0 %v83
  %1113 = vmatprep.subr.mxu0 0.0
  %1114 = vmatpush1.msra.mxu0 %v82
  %1115 = vmatprep.subr.mxu0 0.0
  %1116 = vmatpush1.msra.mxu0 %v81
  %1117 = vmatprep.subr.mxu0 0.0
  %1118 = vmatpush1.msra.mxu0 %v80
  %1119 = vmatprep.subr.mxu0 0.0
  %1120 = vmatpush1.msra.mxu0 %v79
  %1121 = vmatprep.subr.mxu0 0.0
  %1122 = vmatpush1.msra.mxu0 %v78
  %1123 = vmatprep.subr.mxu0 0.0
  %1124 = vmatpush2.msra.mxu0 %v109
  %1125 = vmatprep.subr.mxu0 0.0
  %1126 = vmatpush2.msra.mxu0 %v108
  %1127 = vmatprep.subr.mxu0 0.0
  %1128 = vmatpush2.msra.mxu0 %v107
  %1129 = vmatprep.subr.mxu0 0.0
  %1130 = vmatpush2.msra.mxu0 %v106
  %1131 = vmatprep.subr.mxu0 0.0
  %1132 = vmatpush2.msra.mxu0 %v105
  %1133 = vmatprep.subr.mxu0 0.0
  %1134 = vmatpush2.msra.mxu0 %v104
  %1135 = vmatprep.subr.mxu0 0.0
  %1136 = vmatpush2.msra.mxu0 %v103
  %1137 = vmatprep.subr.mxu0 0.0
  %1138 = vmatpush2.msra.mxu0 %v102
  %1139 = vmatprep.subr.mxu0 0.0
  %1140 = vmatpush2.msra.mxu0 %v101
  %1141 = vmatprep.subr.mxu0 0.0
  %1142 = vmatpush2.msra.mxu0 %v100
  %1143 = vmatprep.subr.mxu0 0.0
  %1144 = vmatpush2.msra.mxu0 %v99
  %1145 = vmatprep.subr.mxu0 0.0
  %1146 = vmatpush2.msra.mxu0 %v98
  %1147 = vmatprep.subr.mxu0 0.0
  %1148 = vmatpush2.msra.mxu0 %v97
  %1149 = vmatprep.subr.mxu0 0.0
  %1150 = vmatpush2.msra.mxu0 %v96
  %1151 = vmatprep.subr.mxu0 0.0
  %1152 = vmatpush2.msra.mxu0 %v95
  %1153 = vmatprep.subr.mxu0 0.0
  %1154 = vmatpush2.msra.mxu0 %v94
  %1155 = vmatprep.mubr.f32.mxu0 %v886
  %1156 = vmatmul.mubr.f32.gmra.mxu0 %v885
  %v1157 = vpop.f32.mrf.mxu0
  %v1158 = vadd.f32 %v1073, %v1157
  %v1159 = vpop.f32.mrf.mxu0
  %1160 = vmatprep.mubr.f32.mxu0 %v893
  %1161 = vmatmul.mubr.f32.gmra.mxu0 %v892
  %v1162 = vpop.f32.mrf.mxu0
  %v1163 = vadd.f32 %v1078, %v1162
  %v1164 = vpop.f32.mrf.mxu0
  %1165 = vmatprep.mubr.f32.mxu0 %v900
  %1166 = vmatmul.mubr.f32.gmra.mxu0 %v899
  %v1167 = vpop.f32.mrf.mxu0
  %v1168 = vadd.f32 %v1083, %v1167
  %v1169 = vpop.f32.mrf.mxu0
  %1170 = vmatprep.mubr.f32.mxu0 %v907
  %1171 = vmatmul.mubr.f32.gmra.mxu0 %v906
  %v1172 = vpop.f32.mrf.mxu0
  %v1173 = vadd.f32 %v1088, %v1172
  %v1174 = vpop.f32.mrf.mxu0
  %1175 = vdwg.mxu0
  %1176 = vmatprep.subr.mxu0 0.0
  %1177 = vmatpush1.msra.mxu0 0.0
  %1178 = vmatprep.subr.mxu0 0.0
  %1179 = vmatpush1.msra.mxu0 0.0
  %1180 = vmatprep.subr.mxu0 0.0
  %1181 = vmatpush1.msra.mxu0 0.0
  %1182 = vmatprep.subr.mxu0 0.0
  %1183 = vmatpush1.msra.mxu0 0.0
  %1184 = vmatprep.subr.mxu0 0.0
  %1185 = vmatpush1.msra.mxu0 0.0
  %1186 = vmatprep.subr.mxu0 0.0
  %1187 = vmatpush1.msra.mxu0 0.0
  %1188 = vmatprep.subr.mxu0 0.0
  %1189 = vmatpush1.msra.mxu0 0.0
  %1190 = vmatprep.subr.mxu0 0.0
  %1191 = vmatpush1.msra.mxu0 0.0
  %1192 = vmatprep.subr.mxu0 0.0
  %1193 = vmatpush1.msra.mxu0 0.0
  %1194 = vmatprep.subr.mxu0 0.0
  %1195 = vmatpush1.msra.mxu0 0.0
  %1196 = vmatprep.subr.mxu0 0.0
  %1197 = vmatpush1.msra.mxu0 0.0
  %1198 = vmatprep.subr.mxu0 0.0
  %1199 = vmatpush1.msra.mxu0 0.0
  %1200 = vmatprep.subr.mxu0 0.0
  %1201 = vmatpush1.msra.mxu0 %v113
  %1202 = vmatprep.subr.mxu0 0.0
  %1203 = vmatpush1.msra.mxu0 %v112
  %1204 = vmatprep.subr.mxu0 0.0
  %1205 = vmatpush1.msra.mxu0 %v111
  %1206 = vmatprep.subr.mxu0 0.0
  %1207 = vmatpush1.msra.mxu0 %v110
  %1208 = vmatprep.subr.mxu0 0.0
  %1209 = vmatpush2.msra.mxu0 0.0
  %1210 = vmatprep.subr.mxu0 0.0
  %1211 = vmatpush2.msra.mxu0 0.0
  %1212 = vmatprep.subr.mxu0 0.0
  %1213 = vmatpush2.msra.mxu0 0.0
  %1214 = vmatprep.subr.mxu0 0.0
  %1215 = vmatpush2.msra.mxu0 0.0
  %1216 = vmatprep.subr.mxu0 0.0
  %1217 = vmatpush2.msra.mxu0 0.0
  %1218 = vmatprep.subr.mxu0 0.0
  %1219 = vmatpush2.msra.mxu0 0.0
  %1220 = vmatprep.subr.mxu0 0.0
  %1221 = vmatpush2.msra.mxu0 0.0
  %1222 = vmatprep.subr.mxu0 0.0
  %1223 = vmatpush2.msra.mxu0 0.0
  %1224 = vmatprep.subr.mxu0 0.0
  %1225 = vmatpush2.msra.mxu0 0.0
  %1226 = vmatprep.subr.mxu0 0.0
  %1227 = vmatpush2.msra.mxu0 0.0
  %1228 = vmatprep.subr.mxu0 0.0
  %1229 = vmatpush2.msra.mxu0 0.0
  %1230 = vmatprep.subr.mxu0 0.0
  %1231 = vmatpush2.msra.mxu0 0.0
  %1232 = vmatprep.subr.mxu0 0.0
  %1233 = vmatpush2.msra.mxu0 0.0
  %1234 = vmatprep.subr.mxu0 0.0
  %1235 = vmatpush2.msra.mxu0 0.0
  %1236 = vmatprep.subr.mxu0 0.0
  %1237 = vmatpush2.msra.mxu0 0.0
  %1238 = vmatprep.subr.mxu0 0.0
  %1239 = vmatpush2.msra.mxu0 0.0
  %1240 = vmatprep.mubr.f32.mxu0 0.0
  %1241 = vmatmul.mubr.f32.gmra.mxu0 %v910
  %v1242 = vpop.f32.mrf.mxu0
  %v1243 = vadd.f32 %v1158, %v1242
  %v1244 = vpop.f32.mrf.mxu0
  %1245 = vmatprep.mubr.f32.mxu0 0.0
  %1246 = vmatmul.mubr.f32.gmra.mxu0 %v913
  %v1247 = vpop.f32.mrf.mxu0
  %v1248 = vadd.f32 %v1163, %v1247
  %v1249 = vpop.f32.mrf.mxu0
  %1250 = vmatprep.mubr.f32.mxu0 0.0
  %1251 = vmatmul.mubr.f32.gmra.mxu0 %v916
  %v1252 = vpop.f32.mrf.mxu0
  %v1253 = vadd.f32 %v1168, %v1252
  %v1254 = vpop.f32.mrf.mxu0
  %1255 = vmatprep.mubr.f32.mxu0 0.0
  %1256 = vmatmul.mubr.f32.gmra.mxu0 %v919
  %v1257 = vpop.f32.mrf.mxu0
  %v1258 = vadd.f32 %v1173, %v1257
  %v1259 = vpop.f32.mrf.mxu0
  %1260 = vdwg.mxu0
  %v1261 = vmax.f32 %v876, %v1243
  %v1262 = vmax.f32 %v877, %v1248
  %v1263 = vmax.f32 %v878, %v1253
  %v1264 = vmax.f32 %v879, %v1258
  %s1265 = scalar_lea.vmem %s0, 672
  %v1266 = vld [vmem:[%s1265] sm:$0xff]
  %v1267 = vld [vmem:[%s1265 + $0x8] sm:$0xff]
  %v1268 = vld [vmem:[%s1265 + $0x10] sm:$0xff]
  %v1269 = vld [vmem:[%s1265 + $0x18] sm:$0xff]
  %v1270 = vld [vmem:[%s1265 + $0x20] sm:$0xff]
  %v1271 = vld [vmem:[%s1265 + $0x28] sm:$0xff]
  %v1272 = vld [vmem:[%s1265 + $0x30] sm:$0xff]
  %v1273 = vld [vmem:[%s1265 + $0x38] sm:$0xff]
  %v1274 = vld [vmem:[%s1265 + $0x40] sm:$0xff]
  %v1275 = vld [vmem:[%s1265 + $0x48] sm:$0xff]
  %v1276 = vld [vmem:[%s1265 + $0x50] sm:$0xff]
  %v1277 = vld [vmem:[%s1265 + $0x58] sm:$0xff]
  %v1278 = vld [vmem:[%s1265 + $0x60] sm:$0xff]
  %v1279 = vld [vmem:[%s1265 + $0x68] sm:$0xff]
  %v1280 = vld [vmem:[%s1265 + $0x70] sm:$0xff]
  %v1281 = vld [vmem:[%s1265 + $0x78] sm:$0xff]
  %v1282 = vld [vmem:[%s1265 + $0x80] sm:$0xff]
  %v1283 = vld [vmem:[%s1265 + $0x88] sm:$0xff]
  %v1284 = vld [vmem:[%s1265 + $0x90] sm:$0xff]
  %v1285 = vld [vmem:[%s1265 + $0x98] sm:$0xff]
  %v1286 = vld [vmem:[%s1265 + $0xa0] sm:$0xff]
  %v1287 = vld [vmem:[%s1265 + $0xa8] sm:$0xff]
  %v1288 = vld [vmem:[%s1265 + $0xb0] sm:$0xff]
  %v1289 = vld [vmem:[%s1265 + $0xb8] sm:$0xff]
  %v1290 = vld [vmem:[%s1265 + $0xc0] sm:$0xff]
  %v1291 = vld [vmem:[%s1265 + $0xc8] sm:$0xff]
  %v1292 = vld [vmem:[%s1265 + $0xd0] sm:$0xff]
  %v1293 = vld [vmem:[%s1265 + $0xd8] sm:$0xff]
  %v1295 = vsel %vm142, %v1272, 0
  %v1298 = vsel %vm142, %v1279, 0
  %v1301 = vsel %vm142, %v1286, 0
  %v1304 = vsel %vm142, %v1293, 0
  %1306 = vmatprep.subr.mxu0 0.0
  %1307 = vmatpush1.msra.mxu0 %v29
  %1308 = vmatprep.subr.mxu0 0.0
  %1309 = vmatpush1.msra.mxu0 %v28
  %1310 = vmatprep.subr.mxu0 0.0
  %1311 = vmatpush1.msra.mxu0 %v27
  %1312 = vmatprep.subr.mxu0 0.0
  %1313 = vmatpush1.msra.mxu0 %v26
  %1314 = vmatprep.subr.mxu0 0.0
  %1315 = vmatpush1.msra.mxu0 %v25
  %1316 = vmatprep.subr.mxu0 0.0
  %1317 = vmatpush1.msra.mxu0 %v24
  %1318 = vmatprep.subr.mxu0 0.0
  %1319 = vmatpush1.msra.mxu0 %v23
  %1320 = vmatprep.subr.mxu0 0.0
  %1321 = vmatpush1.msra.mxu0 %v22
  %1322 = vmatprep.subr.mxu0 0.0
  %1323 = vmatpush1.msra.mxu0 %v21
  %1324 = vmatprep.subr.mxu0 0.0
  %1325 = vmatpush1.msra.mxu0 %v20
  %1326 = vmatprep.subr.mxu0 0.0
  %1327 = vmatpush1.msra.mxu0 %v19
  %1328 = vmatprep.subr.mxu0 0.0
  %1329 = vmatpush1.msra.mxu0 %v18
  %1330 = vmatprep.subr.mxu0 0.0
  %1331 = vmatpush1.msra.mxu0 %v17
  %1332 = vmatprep.subr.mxu0 0.0
  %1333 = vmatpush1.msra.mxu0 %v16
  %1334 = vmatprep.subr.mxu0 0.0
  %1335 = vmatpush1.msra.mxu0 %v15
  %1336 = vmatprep.subr.mxu0 0.0
  %1337 = vmatpush1.msra.mxu0 %v14
  %1338 = vmatprep.subr.mxu0 0.0
  %1339 = vmatpush2.msra.mxu0 %v45
  %1340 = vmatprep.subr.mxu0 0.0
  %1341 = vmatpush2.msra.mxu0 %v44
  %1342 = vmatprep.subr.mxu0 0.0
  %1343 = vmatpush2.msra.mxu0 %v43
  %1344 = vmatprep.subr.mxu0 0.0
  %1345 = vmatpush2.msra.mxu0 %v42
  %1346 = vmatprep.subr.mxu0 0.0
  %1347 = vmatpush2.msra.mxu0 %v41
  %1348 = vmatprep.subr.mxu0 0.0
  %1349 = vmatpush2.msra.mxu0 %v40
  %1350 = vmatprep.subr.mxu0 0.0
  %1351 = vmatpush2.msra.mxu0 %v39
  %1352 = vmatprep.subr.mxu0 0.0
  %1353 = vmatpush2.msra.mxu0 %v38
  %1354 = vmatprep.subr.mxu0 0.0
  %1355 = vmatpush2.msra.mxu0 %v37
  %1356 = vmatprep.subr.mxu0 0.0
  %1357 = vmatpush2.msra.mxu0 %v36
  %1358 = vmatprep.subr.mxu0 0.0
  %1359 = vmatpush2.msra.mxu0 %v35
  %1360 = vmatprep.subr.mxu0 0.0
  %1361 = vmatpush2.msra.mxu0 %v34
  %1362 = vmatprep.subr.mxu0 0.0
  %1363 = vmatpush2.msra.mxu0 %v33
  %1364 = vmatprep.subr.mxu0 0.0
  %1365 = vmatpush2.msra.mxu0 %v32
  %1366 = vmatprep.subr.mxu0 0.0
  %1367 = vmatpush2.msra.mxu0 %v31
  %1368 = vmatprep.subr.mxu0 0.0
  %1369 = vmatpush2.msra.mxu0 %v30
  %1370 = vmatprep.mubr.f32.mxu0 %v1267
  %1371 = vmatmul.mubr.f32.gmra.mxu0 %v1266
  %v1372 = vpop.f32.mrf.mxu0
  %v1373 = vadd.f32 0.0, %v1372
  %v1374 = vpop.f32.mrf.mxu0
  %1375 = vmatprep.mubr.f32.mxu0 %v1274
  %1376 = vmatmul.mubr.f32.gmra.mxu0 %v1273
  %v1377 = vpop.f32.mrf.mxu0
  %v1378 = vadd.f32 0.0, %v1377
  %v1379 = vpop.f32.mrf.mxu0
  %1380 = vmatprep.mubr.f32.mxu0 %v1281
  %1381 = vmatmul.mubr.f32.gmra.mxu0 %v1280
  %v1382 = vpop.f32.mrf.mxu0
  %v1383 = vadd.f32 0.0, %v1382
  %v1384 = vpop.f32.mrf.mxu0
  %1385 = vmatprep.mubr.f32.mxu0 %v1288
  %1386 = vmatmul.mubr.f32.gmra.mxu0 %v1287
  %v1387 = vpop.f32.mrf.mxu0
  %v1388 = vadd.f32 0.0, %v1387
  %v1389 = vpop.f32.mrf.mxu0
  %1390 = vdwg.mxu0
  %1391 = vmatprep.subr.mxu0 0.0
  %1392 = vmatpush1.msra.mxu0 %v61
  %1393 = vmatprep.subr.mxu0 0.0
  %1394 = vmatpush1.msra.mxu0 %v60
  %1395 = vmatprep.subr.mxu0 0.0
  %1396 = vmatpush1.msra.mxu0 %v59
  %1397 = vmatprep.subr.mxu0 0.0
  %1398 = vmatpush1.msra.mxu0 %v58
  %1399 = vmatprep.subr.mxu0 0.0
  %1400 = vmatpush1.msra.mxu0 %v57
  %1401 = vmatprep.subr.mxu0 0.0
  %1402 = vmatpush1.msra.mxu0 %v56
  %1403 = vmatprep.subr.mxu0 0.0
  %1404 = vmatpush1.msra.mxu0 %v55
  %1405 = vmatprep.subr.mxu0 0.0
  %1406 = vmatpush1.msra.mxu0 %v54
  %1407 = vmatprep.subr.mxu0 0.0
  %1408 = vmatpush1.msra.mxu0 %v53
  %1409 = vmatprep.subr.mxu0 0.0
  %1410 = vmatpush1.msra.mxu0 %v52
  %1411 = vmatprep.subr.mxu0 0.0
  %1412 = vmatpush1.msra.mxu0 %v51
  %1413 = vmatprep.subr.mxu0 0.0
  %1414 = vmatpush1.msra.mxu0 %v50
  %1415 = vmatprep.subr.mxu0 0.0
  %1416 = vmatpush1.msra.mxu0 %v49
  %1417 = vmatprep.subr.mxu0 0.0
  %1418 = vmatpush1.msra.mxu0 %v48
  %1419 = vmatprep.subr.mxu0 0.0
  %1420 = vmatpush1.msra.mxu0 %v47
  %1421 = vmatprep.subr.mxu0 0.0
  %1422 = vmatpush1.msra.mxu0 %v46
  %1423 = vmatprep.subr.mxu0 0.0
  %1424 = vmatpush2.msra.mxu0 %v77
  %1425 = vmatprep.subr.mxu0 0.0
  %1426 = vmatpush2.msra.mxu0 %v76
  %1427 = vmatprep.subr.mxu0 0.0
  %1428 = vmatpush2.msra.mxu0 %v75
  %1429 = vmatprep.subr.mxu0 0.0
  %1430 = vmatpush2.msra.mxu0 %v74
  %1431 = vmatprep.subr.mxu0 0.0
  %1432 = vmatpush2.msra.mxu0 %v73
  %1433 = vmatprep.subr.mxu0 0.0
  %1434 = vmatpush2.msra.mxu0 %v72
  %1435 = vmatprep.subr.mxu0 0.0
  %1436 = vmatpush2.msra.mxu0 %v71
  %1437 = vmatprep.subr.mxu0 0.0
  %1438 = vmatpush2.msra.mxu0 %v70
  %1439 = vmatprep.subr.mxu0 0.0
  %1440 = vmatpush2.msra.mxu0 %v69
  %1441 = vmatprep.subr.mxu0 0.0
  %1442 = vmatpush2.msra.mxu0 %v68
  %1443 = vmatprep.subr.mxu0 0.0
  %1444 = vmatpush2.msra.mxu0 %v67
  %1445 = vmatprep.subr.mxu0 0.0
  %1446 = vmatpush2.msra.mxu0 %v66
  %1447 = vmatprep.subr.mxu0 0.0
  %1448 = vmatpush2.msra.mxu0 %v65
  %1449 = vmatprep.subr.mxu0 0.0
  %1450 = vmatpush2.msra.mxu0 %v64
  %1451 = vmatprep.subr.mxu0 0.0
  %1452 = vmatpush2.msra.mxu0 %v63
  %1453 = vmatprep.subr.mxu0 0.0
  %1454 = vmatpush2.msra.mxu0 %v62
  %1455 = vmatprep.mubr.f32.mxu0 %v1269
  %1456 = vmatmul.mubr.f32.gmra.mxu0 %v1268
  %v1457 = vpop.f32.mrf.mxu0
  %v1458 = vadd.f32 %v1373, %v1457
  %v1459 = vpop.f32.mrf.mxu0
  %1460 = vmatprep.mubr.f32.mxu0 %v1276
  %1461 = vmatmul.mubr.f32.gmra.mxu0 %v1275
  %v1462 = vpop.f32.mrf.mxu0
  %v1463 = vadd.f32 %v1378, %v1462
  %v1464 = vpop.f32.mrf.mxu0
  %1465 = vmatprep.mubr.f32.mxu0 %v1283
  %1466 = vmatmul.mubr.f32.gmra.mxu0 %v1282
  %v1467 = vpop.f32.mrf.mxu0
  %v1468 = vadd.f32 %v1383, %v1467
  %v1469 = vpop.f32.mrf.mxu0
  %1470 = vmatprep.mubr.f32.mxu0 %v1290
  %1471 = vmatmul.mubr.f32.gmra.mxu0 %v1289
  %v1472 = vpop.f32.mrf.mxu0
  %v1473 = vadd.f32 %v1388, %v1472
  %v1474 = vpop.f32.mrf.mxu0
  %1475 = vdwg.mxu0
  %1476 = vmatprep.subr.mxu0 0.0
  %1477 = vmatpush1.msra.mxu0 %v93
  %1478 = vmatprep.subr.mxu0 0.0
  %1479 = vmatpush1.msra.mxu0 %v92
  %1480 = vmatprep.subr.mxu0 0.0
  %1481 = vmatpush1.msra.mxu0 %v91
  %1482 = vmatprep.subr.mxu0 0.0
  %1483 = vmatpush1.msra.mxu0 %v90
  %1484 = vmatprep.subr.mxu0 0.0
  %1485 = vmatpush1.msra.mxu0 %v89
  %1486 = vmatprep.subr.mxu0 0.0
  %1487 = vmatpush1.msra.mxu0 %v88
  %1488 = vmatprep.subr.mxu0 0.0
  %1489 = vmatpush1.msra.mxu0 %v87
  %1490 = vmatprep.subr.mxu0 0.0
  %1491 = vmatpush1.msra.mxu0 %v86
  %1492 = vmatprep.subr.mxu0 0.0
  %1493 = vmatpush1.msra.mxu0 %v85
  %1494 = vmatprep.subr.mxu0 0.0
  %1495 = vmatpush1.msra.mxu0 %v84
  %1496 = vmatprep.subr.mxu0 0.0
  %1497 = vmatpush1.msra.mxu0 %v83
  %1498 = vmatprep.subr.mxu0 0.0
  %1499 = vmatpush1.msra.mxu0 %v82
  %1500 = vmatprep.subr.mxu0 0.0
  %1501 = vmatpush1.msra.mxu0 %v81
  %1502 = vmatprep.subr.mxu0 0.0
  %1503 = vmatpush1.msra.mxu0 %v80
  %1504 = vmatprep.subr.mxu0 0.0
  %1505 = vmatpush1.msra.mxu0 %v79
  %1506 = vmatprep.subr.mxu0 0.0
  %1507 = vmatpush1.msra.mxu0 %v78
  %1508 = vmatprep.subr.mxu0 0.0
  %1509 = vmatpush2.msra.mxu0 %v109
  %1510 = vmatprep.subr.mxu0 0.0
  %1511 = vmatpush2.msra.mxu0 %v108
  %1512 = vmatprep.subr.mxu0 0.0
  %1513 = vmatpush2.msra.mxu0 %v107
  %1514 = vmatprep.subr.mxu0 0.0
  %1515 = vmatpush2.msra.mxu0 %v106
  %1516 = vmatprep.subr.mxu0 0.0
  %1517 = vmatpush2.msra.mxu0 %v105
  %1518 = vmatprep.subr.mxu0 0.0
  %1519 = vmatpush2.msra.mxu0 %v104
  %1520 = vmatprep.subr.mxu0 0.0
  %1521 = vmatpush2.msra.mxu0 %v103
  %1522 = vmatprep.subr.mxu0 0.0
  %1523 = vmatpush2.msra.mxu0 %v102
  %1524 = vmatprep.subr.mxu0 0.0
  %1525 = vmatpush2.msra.mxu0 %v101
  %1526 = vmatprep.subr.mxu0 0.0
  %1527 = vmatpush2.msra.mxu0 %v100
  %1528 = vmatprep.subr.mxu0 0.0
  %1529 = vmatpush2.msra.mxu0 %v99
  %1530 = vmatprep.subr.mxu0 0.0
  %1531 = vmatpush2.msra.mxu0 %v98
  %1532 = vmatprep.subr.mxu0 0.0
  %1533 = vmatpush2.msra.mxu0 %v97
  %1534 = vmatprep.subr.mxu0 0.0
  %1535 = vmatpush2.msra.mxu0 %v96
  %1536 = vmatprep.subr.mxu0 0.0
  %1537 = vmatpush2.msra.mxu0 %v95
  %1538 = vmatprep.subr.mxu0 0.0
  %1539 = vmatpush2.msra.mxu0 %v94
  %1540 = vmatprep.mubr.f32.mxu0 %v1271
  %1541 = vmatmul.mubr.f32.gmra.mxu0 %v1270
  %v1542 = vpop.f32.mrf.mxu0
  %v1543 = vadd.f32 %v1458, %v1542
  %v1544 = vpop.f32.mrf.mxu0
  %1545 = vmatprep.mubr.f32.mxu0 %v1278
  %1546 = vmatmul.mubr.f32.gmra.mxu0 %v1277
  %v1547 = vpop.f32.mrf.mxu0
  %v1548 = vadd.f32 %v1463, %v1547
  %v1549 = vpop.f32.mrf.mxu0
  %1550 = vmatprep.mubr.f32.mxu0 %v1285
  %1551 = vmatmul.mubr.f32.gmra.mxu0 %v1284
  %v1552 = vpop.f32.mrf.mxu0
  %v1553 = vadd.f32 %v1468, %v1552
  %v1554 = vpop.f32.mrf.mxu0
  %1555 = vmatprep.mubr.f32.mxu0 %v1292
  %1556 = vmatmul.mubr.f32.gmra.mxu0 %v1291
  %v1557 = vpop.f32.mrf.mxu0
  %v1558 = vadd.f32 %v1473, %v1557
  %v1559 = vpop.f32.mrf.mxu0
  %1560 = vdwg.mxu0
  %1561 = vmatprep.subr.mxu0 0.0
  %1562 = vmatpush1.msra.mxu0 0.0
  %1563 = vmatprep.subr.mxu0 0.0
  %1564 = vmatpush1.msra.mxu0 0.0
  %1565 = vmatprep.subr.mxu0 0.0
  %1566 = vmatpush1.msra.mxu0 0.0
  %1567 = vmatprep.subr.mxu0 0.0
  %1568 = vmatpush1.msra.mxu0 0.0
  %1569 = vmatprep.subr.mxu0 0.0
  %1570 = vmatpush1.msra.mxu0 0.0
  %1571 = vmatprep.subr.mxu0 0.0
  %1572 = vmatpush1.msra.mxu0 0.0
  %1573 = vmatprep.subr.mxu0 0.0
  %1574 = vmatpush1.msra.mxu0 0.0
  %1575 = vmatprep.subr.mxu0 0.0
  %1576 = vmatpush1.msra.mxu0 0.0
  %1577 = vmatprep.subr.mxu0 0.0
  %1578 = vmatpush1.msra.mxu0 0.0
  %1579 = vmatprep.subr.mxu0 0.0
  %1580 = vmatpush1.msra.mxu0 0.0
  %1581 = vmatprep.subr.mxu0 0.0
  %1582 = vmatpush1.msra.mxu0 0.0
  %1583 = vmatprep.subr.mxu0 0.0
  %1584 = vmatpush1.msra.mxu0 0.0
  %1585 = vmatprep.subr.mxu0 0.0
  %1586 = vmatpush1.msra.mxu0 %v113
  %1587 = vmatprep.subr.mxu0 0.0
  %1588 = vmatpush1.msra.mxu0 %v112
  %1589 = vmatprep.subr.mxu0 0.0
  %1590 = vmatpush1.msra.mxu0 %v111
  %1591 = vmatprep.subr.mxu0 0.0
  %1592 = vmatpush1.msra.mxu0 %v110
  %1593 = vmatprep.subr.mxu0 0.0
  %1594 = vmatpush2.msra.mxu0 0.0
  %1595 = vmatprep.subr.mxu0 0.0
  %1596 = vmatpush2.msra.mxu0 0.0
  %1597 = vmatprep.subr.mxu0 0.0
  %1598 = vmatpush2.msra.mxu0 0.0
  %1599 = vmatprep.subr.mxu0 0.0
  %1600 = vmatpush2.msra.mxu0 0.0
  %1601 = vmatprep.subr.mxu0 0.0
  %1602 = vmatpush2.msra.mxu0 0.0
  %1603 = vmatprep.subr.mxu0 0.0
  %1604 = vmatpush2.msra.mxu0 0.0
  %1605 = vmatprep.subr.mxu0 0.0
  %1606 = vmatpush2.msra.mxu0 0.0
  %1607 = vmatprep.subr.mxu0 0.0
  %1608 = vmatpush2.msra.mxu0 0.0
  %1609 = vmatprep.subr.mxu0 0.0
  %1610 = vmatpush2.msra.mxu0 0.0
  %1611 = vmatprep.subr.mxu0 0.0
  %1612 = vmatpush2.msra.mxu0 0.0
  %1613 = vmatprep.subr.mxu0 0.0
  %1614 = vmatpush2.msra.mxu0 0.0
  %1615 = vmatprep.subr.mxu0 0.0
  %1616 = vmatpush2.msra.mxu0 0.0
  %1617 = vmatprep.subr.mxu0 0.0
  %1618 = vmatpush2.msra.mxu0 0.0
  %1619 = vmatprep.subr.mxu0 0.0
  %1620 = vmatpush2.msra.mxu0 0.0
  %1621 = vmatprep.subr.mxu0 0.0
  %1622 = vmatpush2.msra.mxu0 0.0
  %1623 = vmatprep.subr.mxu0 0.0
  %1624 = vmatpush2.msra.mxu0 0.0
  %1625 = vmatprep.mubr.f32.mxu0 0.0
  %1626 = vmatmul.mubr.f32.gmra.mxu0 %v1295
  %v1627 = vpop.f32.mrf.mxu0
  %v1628 = vadd.f32 %v1543, %v1627
  %v1629 = vpop.f32.mrf.mxu0
  %1630 = vmatprep.mubr.f32.mxu0 0.0
  %1631 = vmatmul.mubr.f32.gmra.mxu0 %v1298
  %v1632 = vpop.f32.mrf.mxu0
  %v1633 = vadd.f32 %v1548, %v1632
  %v1634 = vpop.f32.mrf.mxu0
  %1635 = vmatprep.mubr.f32.mxu0 0.0
  %1636 = vmatmul.mubr.f32.gmra.mxu0 %v1301
  %v1637 = vpop.f32.mrf.mxu0
  %v1638 = vadd.f32 %v1553, %v1637
  %v1639 = vpop.f32.mrf.mxu0
  %1640 = vmatprep.mubr.f32.mxu0 0.0
  %1641 = vmatmul.mubr.f32.gmra.mxu0 %v1304
  %v1642 = vpop.f32.mrf.mxu0
  %v1643 = vadd.f32 %v1558, %v1642
  %v1644 = vpop.f32.mrf.mxu0
  %1645 = vdwg.mxu0
  %v1646 = vmax.f32 %v1261, %v1628
  %v1647 = vmax.f32 %v1262, %v1633
  %v1648 = vmax.f32 %v1263, %v1638
  %v1649 = vmax.f32 %v1264, %v1643
  %v1650 = vld [vmem:[%s2] sm:$0x1]
  %v1652 = vlaneseq
  %v1653 = vshrl.u32 %v1652, 7
  %v1654 = vsub.s32 0, %v1653
  %v1655 = vrot.slane %v1650, %v1654
  %v1657 = vadd.f32 %v1646, %v1655
  %v1658 = vadd.f32 %v1647, %v1655
  %v1659 = vadd.f32 %v1648, %v1655
  %v1660 = vadd.f32 %v1649, %v1655
  %v1661 = vmax.f32 %v1657, 0.0
  %v1662 = vmax.f32 %v1658, 0.0
  %v1663 = vmax.f32 %v1659, 0.0
  %v1664 = vmax.f32 %v1660, 0.0
  %1665 = vst [vmem:[%s3] sm:$0xff] %v1661
  %1666 = vst [vmem:[%s3 + $0x8] sm:$0xff] %v1662
  %1667 = vst [vmem:[%s3 + $0x10] sm:$0xff] %v1663
  %1668 = vst [vmem:[%s3 + $0x18] sm:$0xff] %v1664
  // Predicated region
  $region14: #{convnet_mnist_forward.4} parent=0 // pred_check
    _
  $region15: #{convnet_mnist_forward.4} parent=0 // pred_check_branch
    %1670 = sbr.rel (0) target = $region17
  $region16: #{convnet_mnist_forward.4} parent=0 // pred_region
    _
  $region17: #{convnet_mnist_forward.4} parent=0 // pred_fallthru
    _
  // Predicated region
  $region18: #{convnet_mnist_forward.4} parent=0 // pred_check
    _
  $region19: #{convnet_mnist_forward.4} parent=0 // pred_check_branch
    %1672 = sbr.rel (0) target = $region21
  $region20: #{convnet_mnist_forward.4} parent=0 // pred_region
    _
  $region21: #{convnet_mnist_forward.4} parent=0 // pred_fallthru
    _

// kernel: convnet_mnist_forward.5
$region0: #{convnet_mnist_forward.5}
  #allocation0 [shape = 'u32[]', space=smem, size = 0x4, offset = 0x4, fixed_abs, tag = 'smem constant byte address 0x4 - core index']
  #allocation1 [shape = 'u32[144,128]{1,0:T(1,128)}', space=vmem, size = 0x12000, scoped, tag = 'internal scratch']
  %s0 = inlined_call_operand.vmem [shape: f32[8,1024], index: 0, kind: input, shape index: {}]
  %s1 = inlined_call_operand.vmem [shape: f32[1024,128], index: 1, kind: input, shape index: {}]
  %s2 = inlined_call_operand.vmem [shape: f32[1,128], index: 2, kind: input, shape index: {}]
  %s3 = inlined_call_operand.vmem [shape: f32[128,128], index: 3, kind: input, shape index: {}]
  %s4 = inlined_call_operand.vmem [shape: f32[1,128], index: 4, kind: input, shape index: {}]
  %s5 = inlined_call_operand.vmem [shape: f32[8,128], index: 5, kind: output, shape index: {}]
  %s6 = sld [smem:[#allocation0]]
  $region30: #{convnet_mnist_forward.5} parent=0
    _
  %s8 = ssub.s32 1, %s6
  %s9 = scalar_select 0, %s8, %s6
  // Predicated region
  $region2: #{convnet_mnist_forward.5} parent=0 // pred_check
    _
  $region3: #{convnet_mnist_forward.5} parent=0 // pred_check_branch
    %11 = sbr.rel (0) target = $region5
  $region4: #{convnet_mnist_forward.5} parent=0 // pred_region
    _
  $region5: #{convnet_mnist_forward.5} parent=0 // pred_fallthru
    _
  // Predicated region
  $region6: #{convnet_mnist_forward.5} parent=0 // pred_check
    _
  $region7: #{convnet_mnist_forward.5} parent=0 // pred_check_branch
    %13 = sbr.rel (0) target = $region9
  $region8: #{convnet_mnist_forward.5} parent=0 // pred_region
    _
  $region9: #{convnet_mnist_forward.5} parent=0 // pred_fallthru
    _
  // Predicated region
  $region10: #{convnet_mnist_forward.5} parent=0 // pred_check
    _
  $region11: #{convnet_mnist_forward.5} parent=0 // pred_check_branch
    %15 = sbr.rel (0) target = $region13
  $region12: #{convnet_mnist_forward.5} parent=0 // pred_region
    _
  $region13: #{convnet_mnist_forward.5} parent=0 // pred_fallthru
    _
  // Predicated region
  $region14: #{convnet_mnist_forward.5} parent=0 // pred_check
    _
  $region15: #{convnet_mnist_forward.5} parent=0 // pred_check_branch
    %17 = sbr.rel (0) target = $region17
  $region16: #{convnet_mnist_forward.5} parent=0 // pred_region
    _
  $region17: #{convnet_mnist_forward.5} parent=0 // pred_fallthru
    _
  // Predicated region
  $region18: #{convnet_mnist_forward.5} parent=0 // pred_check
    _
  $region19: #{convnet_mnist_forward.5} parent=0 // pred_check_branch
    %19 = sbr.rel (0) target = $region21
  $region20: #{convnet_mnist_forward.5} parent=0 // pred_region
    _
  $region21: #{convnet_mnist_forward.5} parent=0 // pred_fallthru
    _
  %v20 = vld [vmem:[%s0] sm:$0xff]
  %v21 = vld [vmem:[%s0 + $0x8] sm:$0xff]
  %v22 = vld [vmem:[%s0 + $0x10] sm:$0xff]
  %v23 = vld [vmem:[%s0 + $0x18] sm:$0xff]
  %v24 = vld [vmem:[%s0 + $0x20] sm:$0xff]
  %v25 = vld [vmem:[%s0 + $0x28] sm:$0xff]
  %v26 = vld [vmem:[%s0 + $0x30] sm:$0xff]
  %v27 = vld [vmem:[%s0 + $0x38] sm:$0xff]
  %v28 = vld [vmem:[%s1] sm:$0xff]
  %v29 = vld [vmem:[%s1 + $0x8] sm:$0xff]
  %v30 = vld [vmem:[%s1 + $0x10] sm:$0xff]
  %v31 = vld [vmem:[%s1 + $0x18] sm:$0xff]
  %v32 = vld [vmem:[%s1 + $0x20] sm:$0xff]
  %v33 = vld [vmem:[%s1 + $0x28] sm:$0xff]
  %v34 = vld [vmem:[%s1 + $0x30] sm:$0xff]
  %v35 = vld [vmem:[%s1 + $0x38] sm:$0xff]
  %v36 = vld [vmem:[%s1 + $0x40] sm:$0xff]
  %v37 = vld [vmem:[%s1 + $0x48] sm:$0xff]
  %v38 = vld [vmem:[%s1 + $0x50] sm:$0xff]
  %v39 = vld [vmem:[%s1 + $0x58] sm:$0xff]
  %v40 = vld [vmem:[%s1 + $0x60] sm:$0xff]
  %v41 = vld [vmem:[%s1 + $0x68] sm:$0xff]
  %v42 = vld [vmem:[%s1 + $0x70] sm:$0xff]
  %v43 = vld [vmem:[%s1 + $0x78] sm:$0xff]
  %v44 = vld [vmem:[%s1 + $0x80] sm:$0xff]
  %v45 = vld [vmem:[%s1 + $0x88] sm:$0xff]
  %v46 = vld [vmem:[%s1 + $0x90] sm:$0xff]
  %v47 = vld [vmem:[%s1 + $0x98] sm:$0xff]
  %v48 = vld [vmem:[%s1 + $0xa0] sm:$0xff]
  %v49 = vld [vmem:[%s1 + $0xa8] sm:$0xff]
  %v50 = vld [vmem:[%s1 + $0xb0] sm:$0xff]
  %v51 = vld [vmem:[%s1 + $0xb8] sm:$0xff]
  %v52 = vld [vmem:[%s1 + $0xc0] sm:$0xff]
  %v53 = vld [vmem:[%s1 + $0xc8] sm:$0xff]
  %v54 = vld [vmem:[%s1 + $0xd0] sm:$0xff]
  %v55 = vld [vmem:[%s1 + $0xd8] sm:$0xff]
  %v56 = vld [vmem:[%s1 + $0xe0] sm:$0xff]
  %v57 = vld [vmem:[%s1 + $0xe8] sm:$0xff]
  %v58 = vld [vmem:[%s1 + $0xf0] sm:$0xff]
  %v59 = vld [vmem:[%s1 + $0xf8] sm:$0xff]
  %v60 = vld [vmem:[%s1 + $0x100] sm:$0xff]
  %v61 = vld [vmem:[%s1 + $0x108] sm:$0xff]
  %v62 = vld [vmem:[%s1 + $0x110] sm:$0xff]
  %v63 = vld [vmem:[%s1 + $0x118] sm:$0xff]
  %v64 = vld [vmem:[%s1 + $0x120] sm:$0xff]
  %v65 = vld [vmem:[%s1 + $0x128] sm:$0xff]
  %v66 = vld [vmem:[%s1 + $0x130] sm:$0xff]
  %v67 = vld [vmem:[%s1 + $0x138] sm:$0xff]
  %v68 = vld [vmem:[%s1 + $0x140] sm:$0xff]
  %v69 = vld [vmem:[%s1 + $0x148] sm:$0xff]
  %v70 = vld [vmem:[%s1 + $0x150] sm:$0xff]
  %v71 = vld [vmem:[%s1 + $0x158] sm:$0xff]
  %v72 = vld [vmem:[%s1 + $0x160] sm:$0xff]
  %v73 = vld [vmem:[%s1 + $0x168] sm:$0xff]
  %v74 = vld [vmem:[%s1 + $0x170] sm:$0xff]
  %v75 = vld [vmem:[%s1 + $0x178] sm:$0xff]
  %v76 = vld [vmem:[%s1 + $0x180] sm:$0xff]
  %v77 = vld [vmem:[%s1 + $0x188] sm:$0xff]
  %v78 = vld [vmem:[%s1 + $0x190] sm:$0xff]
  %v79 = vld [vmem:[%s1 + $0x198] sm:$0xff]
  %v80 = vld [vmem:[%s1 + $0x1a0] sm:$0xff]
  %v81 = vld [vmem:[%s1 + $0x1a8] sm:$0xff]
  %v82 = vld [vmem:[%s1 + $0x1b0] sm:$0xff]
  %v83 = vld [vmem:[%s1 + $0x1b8] sm:$0xff]
  %v84 = vld [vmem:[%s1 + $0x1c0] sm:$0xff]
  %v85 = vld [vmem:[%s1 + $0x1c8] sm:$0xff]
  %v86 = vld [vmem:[%s1 + $0x1d0] sm:$0xff]
  %v87 = vld [vmem:[%s1 + $0x1d8] sm:$0xff]
  %v88 = vld [vmem:[%s1 + $0x1e0] sm:$0xff]
  %v89 = vld [vmem:[%s1 + $0x1e8] sm:$0xff]
  %v90 = vld [vmem:[%s1 + $0x1f0] sm:$0xff]
  %v91 = vld [vmem:[%s1 + $0x1f8] sm:$0xff]
  %v92 = vld [vmem:[%s1 + $0x200] sm:$0xff]
  %v93 = vld [vmem:[%s1 + $0x208] sm:$0xff]
  %v94 = vld [vmem:[%s1 + $0x210] sm:$0xff]
  %v95 = vld [vmem:[%s1 + $0x218] sm:$0xff]
  %v96 = vld [vmem:[%s1 + $0x220] sm:$0xff]
  %v97 = vld [vmem:[%s1 + $0x228] sm:$0xff]
  %v98 = vld [vmem:[%s1 + $0x230] sm:$0xff]
  %v99 = vld [vmem:[%s1 + $0x238] sm:$0xff]
  %v100 = vld [vmem:[%s1 + $0x240] sm:$0xff]
  %v101 = vld [vmem:[%s1 + $0x248] sm:$0xff]
  %v102 = vld [vmem:[%s1 + $0x250] sm:$0xff]
  %v103 = vld [vmem:[%s1 + $0x258] sm:$0xff]
  %v104 = vld [vmem:[%s1 + $0x260] sm:$0xff]
  %v105 = vld [vmem:[%s1 + $0x268] sm:$0xff]
  %v106 = vld [vmem:[%s1 + $0x270] sm:$0xff]
  %v107 = vld [vmem:[%s1 + $0x278] sm:$0xff]
  %v108 = vld [vmem:[%s1 + $0x280] sm:$0xff]
  %v109 = vld [vmem:[%s1 + $0x288] sm:$0xff]
  %v110 = vld [vmem:[%s1 + $0x290] sm:$0xff]
  %v111 = vld [vmem:[%s1 + $0x298] sm:$0xff]
  %v112 = vld [vmem:[%s1 + $0x2a0] sm:$0xff]
  %v113 = vld [vmem:[%s1 + $0x2a8] sm:$0xff]
  %v114 = vld [vmem:[%s1 + $0x2b0] sm:$0xff]
  %v115 = vld [vmem:[%s1 + $0x2b8] sm:$0xff]
  %v116 = vld [vmem:[%s1 + $0x2c0] sm:$0xff]
  %v117 = vld [vmem:[%s1 + $0x2c8] sm:$0xff]
  %v118 = vld [vmem:[%s1 + $0x2d0] sm:$0xff]
  %v119 = vld [vmem:[%s1 + $0x2d8] sm:$0xff]
  %v120 = vld [vmem:[%s1 + $0x2e0] sm:$0xff]
  %v121 = vld [vmem:[%s1 + $0x2e8] sm:$0xff]
  %v122 = vld [vmem:[%s1 + $0x2f0] sm:$0xff]
  %v123 = vld [vmem:[%s1 + $0x2f8] sm:$0xff]
  %v124 = vld [vmem:[%s1 + $0x300] sm:$0xff]
  %v125 = vld [vmem:[%s1 + $0x308] sm:$0xff]
  %v126 = vld [vmem:[%s1 + $0x310] sm:$0xff]
  %v127 = vld [vmem:[%s1 + $0x318] sm:$0xff]
  %v128 = vld [vmem:[%s1 + $0x320] sm:$0xff]
  %v129 = vld [vmem:[%s1 + $0x328] sm:$0xff]
  %v130 = vld [vmem:[%s1 + $0x330] sm:$0xff]
  %v131 = vld [vmem:[%s1 + $0x338] sm:$0xff]
  %v132 = vld [vmem:[%s1 + $0x340] sm:$0xff]
  %v133 = vld [vmem:[%s1 + $0x348] sm:$0xff]
  %v134 = vld [vmem:[%s1 + $0x350] sm:$0xff]
  %v135 = vld [vmem:[%s1 + $0x358] sm:$0xff]
  %v136 = vld [vmem:[%s1 + $0x360] sm:$0xff]
  %v137 = vld [vmem:[%s1 + $0x368] sm:$0xff]
  %v138 = vld [vmem:[%s1 + $0x370] sm:$0xff]
  %v139 = vld [vmem:[%s1 + $0x378] sm:$0xff]
  %v140 = vld [vmem:[%s1 + $0x380] sm:$0xff]
  %v141 = vld [vmem:[%s1 + $0x388] sm:$0xff]
  %v142 = vld [vmem:[%s1 + $0x390] sm:$0xff]
  %v143 = vld [vmem:[%s1 + $0x398] sm:$0xff]
  %v144 = vld [vmem:[%s1 + $0x3a0] sm:$0xff]
  %v145 = vld [vmem:[%s1 + $0x3a8] sm:$0xff]
  %v146 = vld [vmem:[%s1 + $0x3b0] sm:$0xff]
  %v147 = vld [vmem:[%s1 + $0x3b8] sm:$0xff]
  %v148 = vld [vmem:[%s1 + $0x3c0] sm:$0xff]
  %v149 = vld [vmem:[%s1 + $0x3c8] sm:$0xff]
  %v150 = vld [vmem:[%s1 + $0x3d0] sm:$0xff]
  %v151 = vld [vmem:[%s1 + $0x3d8] sm:$0xff]
  %v152 = vld [vmem:[%s1 + $0x3e0] sm:$0xff]
  %v153 = vld [vmem:[%s1 + $0x3e8] sm:$0xff]
  %v154 = vld [vmem:[%s1 + $0x3f0] sm:$0xff]
  %v155 = vld [vmem:[%s1 + $0x3f8] sm:$0xff]
  %v156 = vld [vmem:[%s2] sm:$0x1]
  %v158 = vlaneseq
  %v159 = vshrl.u32 %v158, 7
  %v160 = vsub.s32 0, %v159
  %v161 = vrot.slane %v156, %v160
  %163 = vmatprep.subr.mxu0 0.0
  %164 = vmatpush1.msra.mxu0 %v43
  %165 = vmatprep.subr.mxu0 0.0
  %166 = vmatpush1.msra.mxu0 %v42
  %167 = vmatprep.subr.mxu0 0.0
  %168 = vmatpush1.msra.mxu0 %v41
  %169 = vmatprep.subr.mxu0 0.0
  %170 = vmatpush1.msra.mxu0 %v40
  %171 = vmatprep.subr.mxu0 0.0
  %172 = vmatpush1.msra.mxu0 %v39
  %173 = vmatprep.subr.mxu0 0.0
  %174 = vmatpush1.msra.mxu0 %v38
  %175 = vmatprep.subr.mxu0 0.0
  %176 = vmatpush1.msra.mxu0 %v37
  %177 = vmatprep.subr.mxu0 0.0
  %178 = vmatpush1.msra.mxu0 %v36
  %179 = vmatprep.subr.mxu0 0.0
  %180 = vmatpush1.msra.mxu0 %v35
  %181 = vmatprep.subr.mxu0 0.0
  %182 = vmatpush1.msra.mxu0 %v34
  %183 = vmatprep.subr.mxu0 0.0
  %184 = vmatpush1.msra.mxu0 %v33
  %185 = vmatprep.subr.mxu0 0.0
  %186 = vmatpush1.msra.mxu0 %v32
  %187 = vmatprep.subr.mxu0 0.0
  %188 = vmatpush1.msra.mxu0 %v31
  %189 = vmatprep.subr.mxu0 0.0
  %190 = vmatpush1.msra.mxu0 %v30
  %191 = vmatprep.subr.mxu0 0.0
  %192 = vmatpush1.msra.mxu0 %v29
  %193 = vmatprep.subr.mxu0 0.0
  %194 = vmatpush1.msra.mxu0 %v28
  %195 = vmatprep.subr.mxu0 0.0
  %196 = vmatpush2.msra.mxu0 %v59
  %197 = vmatprep.subr.mxu0 0.0
  %198 = vmatpush2.msra.mxu0 %v58
  %199 = vmatprep.subr.mxu0 0.0
  %200 = vmatpush2.msra.mxu0 %v57
  %201 = vmatprep.subr.mxu0 0.0
  %202 = vmatpush2.msra.mxu0 %v56
  %203 = vmatprep.subr.mxu0 0.0
  %204 = vmatpush2.msra.mxu0 %v55
  %205 = vmatprep.subr.mxu0 0.0
  %206 = vmatpush2.msra.mxu0 %v54
  %207 = vmatprep.subr.mxu0 0.0
  %208 = vmatpush2.msra.mxu0 %v53
  %209 = vmatprep.subr.mxu0 0.0
  %210 = vmatpush2.msra.mxu0 %v52
  %211 = vmatprep.subr.mxu0 0.0
  %212 = vmatpush2.msra.mxu0 %v51
  %213 = vmatprep.subr.mxu0 0.0
  %214 = vmatpush2.msra.mxu0 %v50
  %215 = vmatprep.subr.mxu0 0.0
  %216 = vmatpush2.msra.mxu0 %v49
  %217 = vmatprep.subr.mxu0 0.0
  %218 = vmatpush2.msra.mxu0 %v48
  %219 = vmatprep.subr.mxu0 0.0
  %220 = vmatpush2.msra.mxu0 %v47
  %221 = vmatprep.subr.mxu0 0.0
  %222 = vmatpush2.msra.mxu0 %v46
  %223 = vmatprep.subr.mxu0 0.0
  %224 = vmatpush2.msra.mxu0 %v45
  %225 = vmatprep.subr.mxu0 0.0
  %226 = vmatpush2.msra.mxu0 %v44
  %227 = vmatprep.mubr.f32.mxu0 %v21
  %228 = vmatmul.mubr.f32.gmra.mxu0 %v20
  %v229 = vpop.f32.mrf.mxu0
  %v230 = vadd.f32 %v161, %v229
  %v231 = vpop.f32.mrf.mxu0
  %232 = vdwg.mxu0
  %233 = vmatprep.subr.mxu0 0.0
  %234 = vmatpush1.msra.mxu0 %v75
  %235 = vmatprep.subr.mxu0 0.0
  %236 = vmatpush1.msra.mxu0 %v74
  %237 = vmatprep.subr.mxu0 0.0
  %238 = vmatpush1.msra.mxu0 %v73
  %239 = vmatprep.subr.mxu0 0.0
  %240 = vmatpush1.msra.mxu0 %v72
  %241 = vmatprep.subr.mxu0 0.0
  %242 = vmatpush1.msra.mxu0 %v71
  %243 = vmatprep.subr.mxu0 0.0
  %244 = vmatpush1.msra.mxu0 %v70
  %245 = vmatprep.subr.mxu0 0.0
  %246 = vmatpush1.msra.mxu0 %v69
  %247 = vmatprep.subr.mxu0 0.0
  %248 = vmatpush1.msra.mxu0 %v68
  %249 = vmatprep.subr.mxu0 0.0
  %250 = vmatpush1.msra.mxu0 %v67
  %251 = vmatprep.subr.mxu0 0.0
  %252 = vmatpush1.msra.mxu0 %v66
  %253 = vmatprep.subr.mxu0 0.0
  %254 = vmatpush1.msra.mxu0 %v65
  %255 = vmatprep.subr.mxu0 0.0
  %256 = vmatpush1.msra.mxu0 %v64
  %257 = vmatprep.subr.mxu0 0.0
  %258 = vmatpush1.msra.mxu0 %v63
  %259 = vmatprep.subr.mxu0 0.0
  %260 = vmatpush1.msra.mxu0 %v62
  %261 = vmatprep.subr.mxu0 0.0
  %262 = vmatpush1.msra.mxu0 %v61
  %263 = vmatprep.subr.mxu0 0.0
  %264 = vmatpush1.msra.mxu0 %v60
  %265 = vmatprep.subr.mxu0 0.0
  %266 = vmatpush2.msra.mxu0 %v91
  %267 = vmatprep.subr.mxu0 0.0
  %268 = vmatpush2.msra.mxu0 %v90
  %269 = vmatprep.subr.mxu0 0.0
  %270 = vmatpush2.msra.mxu0 %v89
  %271 = vmatprep.subr.mxu0 0.0
  %272 = vmatpush2.msra.mxu0 %v88
  %273 = vmatprep.subr.mxu0 0.0
  %274 = vmatpush2.msra.mxu0 %v87
  %275 = vmatprep.subr.mxu0 0.0
  %276 = vmatpush2.msra.mxu0 %v86
  %277 = vmatprep.subr.mxu0 0.0
  %278 = vmatpush2.msra.mxu0 %v85
  %279 = vmatprep.subr.mxu0 0.0
  %280 = vmatpush2.msra.mxu0 %v84
  %281 = vmatprep.subr.mxu0 0.0
  %282 = vmatpush2.msra.mxu0 %v83
  %283 = vmatprep.subr.mxu0 0.0
  %284 = vmatpush2.msra.mxu0 %v82
  %285 = vmatprep.subr.mxu0 0.0
  %286 = vmatpush2.msra.mxu0 %v81
  %287 = vmatprep.subr.mxu0 0.0
  %288 = vmatpush2.msra.mxu0 %v80
  %289 = vmatprep.subr.mxu0 0.0
  %290 = vmatpush2.msra.mxu0 %v79
  %291 = vmatprep.subr.mxu0 0.0
  %292 = vmatpush2.msra.mxu0 %v78
  %293 = vmatprep.subr.mxu0 0.0
  %294 = vmatpush2.msra.mxu0 %v77
  %295 = vmatprep.subr.mxu0 0.0
  %296 = vmatpush2.msra.mxu0 %v76
  %297 = vmatprep.mubr.f32.mxu0 %v23
  %298 = vmatmul.mubr.f32.gmra.mxu0 %v22
  %v299 = vpop.f32.mrf.mxu0
  %v300 = vadd.f32 %v230, %v299
  %v301 = vpop.f32.mrf.mxu0
  %302 = vdwg.mxu0
  %303 = vmatprep.subr.mxu0 0.0
  %304 = vmatpush1.msra.mxu0 %v107
  %305 = vmatprep.subr.mxu0 0.0
  %306 = vmatpush1.msra.mxu0 %v106
  %307 = vmatprep.subr.mxu0 0.0
  %308 = vmatpush1.msra.mxu0 %v105
  %309 = vmatprep.subr.mxu0 0.0
  %310 = vmatpush1.msra.mxu0 %v104
  %311 = vmatprep.subr.mxu0 0.0
  %312 = vmatpush1.msra.mxu0 %v103
  %313 = vmatprep.subr.mxu0 0.0
  %314 = vmatpush1.msra.mxu0 %v102
  %315 = vmatprep.subr.mxu0 0.0
  %316 = vmatpush1.msra.mxu0 %v101
  %317 = vmatprep.subr.mxu0 0.0
  %318 = vmatpush1.msra.mxu0 %v100
  %319 = vmatprep.subr.mxu0 0.0
  %320 = vmatpush1.msra.mxu0 %v99
  %321 = vmatprep.subr.mxu0 0.0
  %322 = vmatpush1.msra.mxu0 %v98
  %323 = vmatprep.subr.mxu0 0.0
  %324 = vmatpush1.msra.mxu0 %v97
  %325 = vmatprep.subr.mxu0 0.0
  %326 = vmatpush1.msra.mxu0 %v96
  %327 = vmatprep.subr.mxu0 0.0
  %328 = vmatpush1.msra.mxu0 %v95
  %329 = vmatprep.subr.mxu0 0.0
  %330 = vmatpush1.msra.mxu0 %v94
  %331 = vmatprep.subr.mxu0 0.0
  %332 = vmatpush1.msra.mxu0 %v93
  %333 = vmatprep.subr.mxu0 0.0
  %334 = vmatpush1.msra.mxu0 %v92
  %335 = vmatprep.subr.mxu0 0.0
  %336 = vmatpush2.msra.mxu0 %v123
  %337 = vmatprep.subr.mxu0 0.0
  %338 = vmatpush2.msra.mxu0 %v122
  %339 = vmatprep.subr.mxu0 0.0
  %340 = vmatpush2.msra.mxu0 %v121
  %341 = vmatprep.subr.mxu0 0.0
  %342 = vmatpush2.msra.mxu0 %v120
  %343 = vmatprep.subr.mxu0 0.0
  %344 = vmatpush2.msra.mxu0 %v119
  %345 = vmatprep.subr.mxu0 0.0
  %346 = vmatpush2.msra.mxu0 %v118
  %347 = vmatprep.subr.mxu0 0.0
  %348 = vmatpush2.msra.mxu0 %v117
  %349 = vmatprep.subr.mxu0 0.0
  %350 = vmatpush2.msra.mxu0 %v116
  %351 = vmatprep.subr.mxu0 0.0
  %352 = vmatpush2.msra.mxu0 %v115
  %353 = vmatprep.subr.mxu0 0.0
  %354 = vmatpush2.msra.mxu0 %v114
  %355 = vmatprep.subr.mxu0 0.0
  %356 = vmatpush2.msra.mxu0 %v113
  %357 = vmatprep.subr.mxu0 0.0
  %358 = vmatpush2.msra.mxu0 %v112
  %359 = vmatprep.subr.mxu0 0.0
  %360 = vmatpush2.msra.mxu0 %v111
  %361 = vmatprep.subr.mxu0 0.0
  %362 = vmatpush2.msra.mxu0 %v110
  %363 = vmatprep.subr.mxu0 0.0
  %364 = vmatpush2.msra.mxu0 %v109
  %365 = vmatprep.subr.mxu0 0.0
  %366 = vmatpush2.msra.mxu0 %v108
  %367 = vmatprep.mubr.f32.mxu0 %v25
  %368 = vmatmul.mubr.f32.gmra.mxu0 %v24
  %v369 = vpop.f32.mrf.mxu0
  %v370 = vadd.f32 %v300, %v369
  %v371 = vpop.f32.mrf.mxu0
  %372 = vdwg.mxu0
  %373 = vmatprep.subr.mxu0 0.0
  %374 = vmatpush1.msra.mxu0 %v139
  %375 = vmatprep.subr.mxu0 0.0
  %376 = vmatpush1.msra.mxu0 %v138
  %377 = vmatprep.subr.mxu0 0.0
  %378 = vmatpush1.msra.mxu0 %v137
  %379 = vmatprep.subr.mxu0 0.0
  %380 = vmatpush1.msra.mxu0 %v136
  %381 = vmatprep.subr.mxu0 0.0
  %382 = vmatpush1.msra.mxu0 %v135
  %383 = vmatprep.subr.mxu0 0.0
  %384 = vmatpush1.msra.mxu0 %v134
  %385 = vmatprep.subr.mxu0 0.0
  %386 = vmatpush1.msra.mxu0 %v133
  %387 = vmatprep.subr.mxu0 0.0
  %388 = vmatpush1.msra.mxu0 %v132
  %389 = vmatprep.subr.mxu0 0.0
  %390 = vmatpush1.msra.mxu0 %v131
  %391 = vmatprep.subr.mxu0 0.0
  %392 = vmatpush1.msra.mxu0 %v130
  %393 = vmatprep.subr.mxu0 0.0
  %394 = vmatpush1.msra.mxu0 %v129
  %395 = vmatprep.subr.mxu0 0.0
  %396 = vmatpush1.msra.mxu0 %v128
  %397 = vmatprep.subr.mxu0 0.0
  %398 = vmatpush1.msra.mxu0 %v127
  %399 = vmatprep.subr.mxu0 0.0
  %400 = vmatpush1.msra.mxu0 %v126
  %401 = vmatprep.subr.mxu0 0.0
  %402 = vmatpush1.msra.mxu0 %v125
  %403 = vmatprep.subr.mxu0 0.0
  %404 = vmatpush1.msra.mxu0 %v124
  %405 = vmatprep.subr.mxu0 0.0
  %406 = vmatpush2.msra.mxu0 %v155
  %407 = vmatprep.subr.mxu0 0.0
  %408 = vmatpush2.msra.mxu0 %v154
  %409 = vmatprep.subr.mxu0 0.0
  %410 = vmatpush2.msra.mxu0 %v153
  %411 = vmatprep.subr.mxu0 0.0
  %412 = vmatpush2.msra.mxu0 %v152
  %413 = vmatprep.subr.mxu0 0.0
  %414 = vmatpush2.msra.mxu0 %v151
  %415 = vmatprep.subr.mxu0 0.0
  %416 = vmatpush2.msra.mxu0 %v150
  %417 = vmatprep.subr.mxu0 0.0
  %418 = vmatpush2.msra.mxu0 %v149
  %419 = vmatprep.subr.mxu0 0.0
  %420 = vmatpush2.msra.mxu0 %v148
  %421 = vmatprep.subr.mxu0 0.0
  %422 = vmatpush2.msra.mxu0 %v147
  %423 = vmatprep.subr.mxu0 0.0
  %424 = vmatpush2.msra.mxu0 %v146
  %425 = vmatprep.subr.mxu0 0.0
  %426 = vmatpush2.msra.mxu0 %v145
  %427 = vmatprep.subr.mxu0 0.0
  %428 = vmatpush2.msra.mxu0 %v144
  %429 = vmatprep.subr.mxu0 0.0
  %430 = vmatpush2.msra.mxu0 %v143
  %431 = vmatprep.subr.mxu0 0.0
  %432 = vmatpush2.msra.mxu0 %v142
  %433 = vmatprep.subr.mxu0 0.0
  %434 = vmatpush2.msra.mxu0 %v141
  %435 = vmatprep.subr.mxu0 0.0
  %436 = vmatpush2.msra.mxu0 %v140
  %437 = vmatprep.mubr.f32.mxu0 %v27
  %438 = vmatmul.mubr.f32.gmra.mxu0 %v26
  %v439 = vpop.f32.mrf.mxu0
  %v440 = vadd.f32 %v370, %v439
  %v441 = vpop.f32.mrf.mxu0
  %442 = vdwg.mxu0
  %v443 = vmax.f32 %v440, 0.0
  %v444 = vld [vmem:[%s3] sm:$0xff]
  %v445 = vld [vmem:[%s3 + $0x8] sm:$0xff]
  %v446 = vld [vmem:[%s3 + $0x10] sm:$0xff]
  %v447 = vld [vmem:[%s3 + $0x18] sm:$0xff]
  %v448 = vld [vmem:[%s3 + $0x20] sm:$0xff]
  %v449 = vld [vmem:[%s3 + $0x28] sm:$0xff]
  %v450 = vld [vmem:[%s3 + $0x30] sm:$0xff]
  %v451 = vld [vmem:[%s3 + $0x38] sm:$0xff]
  %v452 = vld [vmem:[%s3 + $0x40] sm:$0xff]
  %v453 = vld [vmem:[%s3 + $0x48] sm:$0xff]
  %v454 = vld [vmem:[%s3 + $0x50] sm:$0xff]
  %v455 = vld [vmem:[%s3 + $0x58] sm:$0xff]
  %v456 = vld [vmem:[%s3 + $0x60] sm:$0xff]
  %v457 = vld [vmem:[%s3 + $0x68] sm:$0xff]
  %v458 = vld [vmem:[%s3 + $0x70] sm:$0xff]
  %v459 = vld [vmem:[%s3 + $0x78] sm:$0xff]
  %v460 = vld [vmem:[%s4] sm:$0x1]
  %v462 = vlaneseq
  %v463 = vshrl.u32 %v462, 7
  %v464 = vsub.s32 0, %v463
  %v465 = vrot.slane %v460, %v464
  %467 = vmatprep.subr.mxu0 0.0
  %468 = vmatpush1.msra.mxu0 %v459
  %469 = vmatprep.subr.mxu0 0.0
  %470 = vmatpush1.msra.mxu0 %v458
  %471 = vmatprep.subr.mxu0 0.0
  %472 = vmatpush1.msra.mxu0 %v457
  %473 = vmatprep.subr.mxu0 0.0
  %474 = vmatpush1.msra.mxu0 %v456
  %475 = vmatprep.subr.mxu0 0.0
  %476 = vmatpush1.msra.mxu0 %v455
  %477 = vmatprep.subr.mxu0 0.0
  %478 = vmatpush1.msra.mxu0 %v454
  %479 = vmatprep.subr.mxu0 0.0
  %480 = vmatpush1.msra.mxu0 %v453
  %481 = vmatprep.subr.mxu0 0.0
  %482 = vmatpush1.msra.mxu0 %v452
  %483 = vmatprep.subr.mxu0 0.0
  %484 = vmatpush1.msra.mxu0 %v451
  %485 = vmatprep.subr.mxu0 0.0
  %486 = vmatpush1.msra.mxu0 %v450
  %487 = vmatprep.subr.mxu0 0.0
  %488 = vmatpush1.msra.mxu0 %v449
  %489 = vmatprep.subr.mxu0 0.0
  %490 = vmatpush1.msra.mxu0 %v448
  %491 = vmatprep.subr.mxu0 0.0
  %492 = vmatpush1.msra.mxu0 %v447
  %493 = vmatprep.subr.mxu0 0.0
  %494 = vmatpush1.msra.mxu0 %v446
  %495 = vmatprep.subr.mxu0 0.0
  %496 = vmatpush1.msra.mxu0 %v445
  %497 = vmatprep.subr.mxu0 0.0
  %498 = vmatpush1.msra.mxu0 %v444
  %499 = vmatprep.subr.mxu0 0.0
  %500 = vmatpush2.msra.mxu0 0.0
  %501 = vmatprep.subr.mxu0 0.0
  %502 = vmatpush2.msra.mxu0 0.0
  %503 = vmatprep.subr.mxu0 0.0
  %504 = vmatpush2.msra.mxu0 0.0
  %505 = vmatprep.subr.mxu0 0.0
  %506 = vmatpush2.msra.mxu0 0.0
  %507 = vmatprep.subr.mxu0 0.0
  %508 = vmatpush2.msra.mxu0 0.0
  %509 = vmatprep.subr.mxu0 0.0
  %510 = vmatpush2.msra.mxu0 0.0
  %511 = vmatprep.subr.mxu0 0.0
  %512 = vmatpush2.msra.mxu0 0.0
  %513 = vmatprep.subr.mxu0 0.0
  %514 = vmatpush2.msra.mxu0 0.0
  %515 = vmatprep.subr.mxu0 0.0
  %516 = vmatpush2.msra.mxu0 0.0
  %517 = vmatprep.subr.mxu0 0.0
  %518 = vmatpush2.msra.mxu0 0.0
  %519 = vmatprep.subr.mxu0 0.0
  %520 = vmatpush2.msra.mxu0 0.0
  %521 = vmatprep.subr.mxu0 0.0
  %522 = vmatpush2.msra.mxu0 0.0
  %523 = vmatprep.subr.mxu0 0.0
  %524 = vmatpush2.msra.mxu0 0.0
  %525 = vmatprep.subr.mxu0 0.0
  %526 = vmatpush2.msra.mxu0 0.0
  %527 = vmatprep.subr.mxu0 0.0
  %528 = vmatpush2.msra.mxu0 0.0
  %529 = vmatprep.subr.mxu0 0.0
  %530 = vmatpush2.msra.mxu0 0.0
  %531 = vmatprep.mubr.f32.mxu0 0.0
  %532 = vmatmul.mubr.f32.gmra.mxu0 %v443
  %v533 = vpop.f32.mrf.mxu0
  %v534 = vadd.f32 %v465, %v533
  %v535 = vpop.f32.mrf.mxu0
  %536 = vdwg.mxu0
  %537 = vst [vmem:[%s5] sm:$0xff] %v534
  // Predicated region
  $region22: #{convnet_mnist_forward.5} parent=0 // pred_check
    _
  $region23: #{convnet_mnist_forward.5} parent=0 // pred_check_branch
    %539 = sbr.rel (0) target = $region25
  $region24: #{convnet_mnist_forward.5} parent=0 // pred_region
    _
  $region25: #{convnet_mnist_forward.5} parent=0 // pred_fallthru
    _
  // Predicated region
  $region26: #{convnet_mnist_forward.5} parent=0 // pred_check
    _
  $region27: #{convnet_mnist_forward.5} parent=0 // pred_check_branch
    %541 = sbr.rel (0) target = $region29
  $region28: #{convnet_mnist_forward.5} parent=0 // pred_region
    _
  $region29: #{convnet_mnist_forward.5} parent=0 // pred_fallthru
    _

</llo_original>
